<compile_context>
chip_gen: v7x
topology: tpu7x:2x2x1
jax: 0.10.0
libtpu: 0.0.40
codegen_flags: <defaults>
</compile_context>

<pallas_src>
import functools

import numpy as np
import jax
import jax.numpy as jnp
from jax import lax
from jax.experimental import pallas as pl
from jax.experimental.pallas import tpu as pltpu


# ----------------------------- fused Pallas kernel ----------------------------- #

def _graphsage_fused_kernel(*refs, T, Bp, E, H, S):
    """Fully fused bidirectional stacked LSTM + head-max.

    in refs : x2d (T*Bp, E)  time-major, row t*Bp+b = (t, b)   (batch zero-padded to Bp)
              per layer l:  w_ih_cat (I_l, 8H)      [fwd gates | bwd gates]
                            w_hh_bd  (2H, 8H)       block-diag: [:H,:4H]=fwd, [H:,4H:]=bwd
                            bias_cat (1, 8H)
    out ref : (Bp, 2H // S)
    scratch : proj (T*Bp, 8H)   hoisted gate projection of the current layer
              act  (T*Bp, 2H)   per-step hidden states [h_f | h_b] (input to next layer)
    Gate order follows PyTorch: [i, f, g, o].
    """
    f32 = jnp.float32
    G = 4 * H

    x_ref = refs[0]
    out_ref = refs[1 + 3 * S]
    proj_scr = refs[2 + 3 * S]
    act_scr = refs[3 + 3 * S]

    def project(layer):
        """Hoisted, time-independent projection for BOTH directions in one matmul:
        proj = in_layer @ [W_ih_fwd | W_ih_bwd] + [b_fwd | b_bwd]  ->  (T*Bp, 8H).
        For layer > 0 the input is the merged [h_f | h_b] scratch -> single K=2H matmul."""
        wih_ref = refs[1 + 3 * layer]
        b_ref = refs[3 + 3 * layer]
        src = x_ref if layer == 0 else act_scr
        proj_scr[...] = (jnp.dot(src[...], wih_ref[...], preferred_element_type=f32)
                         + b_ref[...])

    def cell(gates, c=None, *, c_is_zero=False):
        """LSTM cell on a (Bp, 4H) gate block.
        Activations on the whole 128-lane block: 2 EUP pushes, then lane slices."""
        sig = jax.nn.sigmoid(gates)               # 1 vreg push (i, f, o all at once)
        th = jnp.tanh(gates)                      # 1 vreg push (g; extra lanes are free filler)
        gi = sig[:, 0 * H:1 * H]
        go = sig[:, 3 * H:4 * H]
        gg = th[:, 2 * H:3 * H]
        if c_is_zero:
            c_new = gi * gg                       # forget-gate path skipped (c == 0)
        else:
            gf = sig[:, 1 * H:2 * H]
            c_new = gf * c + gi * gg
        h_new = go * jnp.tanh(c_new)              # 1 vreg push
        return h_new, c_new

    def bidir_layer(layer):
        """Both directions interleaved in one statically unrolled loop; one block-diagonal
        W_hh matmul per step; per-step hidden states land in the merged VMEM scratch."""
        whh_ref = refs[2 + 3 * layer]             # (2H, 8H) block-diagonal
        h_f = jnp.zeros((Bp, H), f32)
        c_f = jnp.zeros((Bp, H), f32)
        h_b = jnp.zeros((Bp, H), f32)
        c_b = jnp.zeros((Bp, H), f32)
        for t in range(T):                        # static unroll: full scheduler visibility (T=8)
            tb = T - 1 - t
            g_f = proj_scr[t * Bp:(t + 1) * Bp, :G]
            g_b = proj_scr[tb * Bp:(tb + 1) * Bp, G:]
            if t > 0:                             # first step has h == 0: skip the matmul
                h_cat = jnp.concatenate([h_f, h_b], axis=-1)          # (Bp, 2H)
                rec = jnp.dot(h_cat, whh_ref[...], preferred_element_type=f32)  # (Bp, 8H)
                g_f = g_f + rec[:, :G]
                g_b = g_b + rec[:, G:]
            h_f, c_f = cell(g_f, c_f, c_is_zero=(t == 0))
            h_b, c_b = cell(g_b, c_b, c_is_zero=(t == 0))
            act_scr[t * Bp:(t + 1) * Bp, :H] = h_f
            act_scr[tb * Bp:(tb + 1) * Bp, H:] = h_b

    def last_layer(layer):
        """The head only needs h_fwd(t=0) (one step from zero state) and the final backward
        hidden state -> skip the other T-1 forward steps and all output stores."""
        whh_ref = refs[2 + 3 * layer]
        whh_b = whh_ref[H:, G:]                   # (H, 4H) backward block of the block-diag
        # Forward direction: a single step from zero state.
        h_f0, _ = cell(proj_scr[0:Bp, :G], c_is_zero=True)
        # Backward direction: full reverse pass, keep only the final hidden state.
        h_b = jnp.zeros((Bp, H), f32)
        c_b = jnp.zeros((Bp, H), f32)
        for step in range(T):                     # static unroll
            t = T - 1 - step
            g_b = proj_scr[t * Bp:(t + 1) * Bp, G:]
            if step > 0:
                g_b = g_b + jnp.dot(h_b, whh_b, preferred_element_type=f32)
            h_b, c_b = cell(g_b, c_b, c_is_zero=(step == 0))
        return h_f0, h_b

    h_f0 = None
    h_bT = None
    for layer in range(S):
        project(layer)
        if layer < S - 1:
            bidir_layer(layer)
        else:
            h_f0, h_bT = last_layer(layer)

    # Head: conceptually head = [h_f0 | h_bT] (Bp, 2H); reshape (Bp, S, 2H/S); max over S.
    # Done with plain lane slices (no in-kernel concat/reshape needed for even S).
    chunk = (2 * H) // S
    parts = []
    for s in range(S):
        lo, hi = s * chunk, (s + 1) * chunk
        if hi <= H:
            parts.append(h_f0[:, lo:hi])
        elif lo >= H:
            parts.append(h_bT[:, lo - H:hi - H])
        else:  # chunk straddles the fwd/bwd boundary (only possible for odd S)
            parts.append(jnp.concatenate([h_f0[:, lo:H], h_bT[:, 0:hi - H]], axis=-1))
    res = parts[0]
    for p in parts[1:]:
        res = jnp.maximum(res, p)
    out_ref[...] = res.astype(out_ref.dtype)


def graphsage_pallas(x, params, stack_layers):
    """x: (B, T, E) batch_first, matching nn.LSTM(batch_first=True)."""
    B, T, E = x.shape
    H = params[0]["w_hh_cat"].shape[0]
    S = stack_layers
    assert (2 * H) % S == 0, "head split requires (2 * hidden) % stack_layers == 0"

    # Pad batch to a sublane multiple so every per-timestep slice is (8, *)-aligned.
    Bp = max(8, ((B + 7) // 8) * 8)
    x_tm = jnp.transpose(x, (1, 0, 2)).astype(jnp.float32)       # (T, B, E) time-major
    if Bp != B:
        x_tm = jnp.pad(x_tm, ((0, 0), (0, Bp - B), (0, 0)))
    x2d = x_tm.reshape(T * Bp, E)                                # row t*Bp + b

    inputs = [x2d]
    in_specs = [pl.BlockSpec((T * Bp, E), lambda i: (0, 0))]
    for lp in params:
        for name in ("w_ih_cat", "w_hh_bd", "bias_cat"):
            arr = lp[name]
            inputs.append(arr)
            in_specs.append(pl.BlockSpec(arr.shape, lambda i: (0, 0)))

    out_dim = (2 * H) // S
    kernel = functools.partial(_graphsage_fused_kernel, T=T, Bp=Bp, E=E, H=H, S=S)
    out_padded = pl.pallas_call(
        kernel,
        out_shape=jax.ShapeDtypeStruct((Bp, out_dim), jnp.float32),
        grid=(1,),
        in_specs=in_specs,
        out_specs=pl.BlockSpec((Bp, out_dim), lambda i: (0, 0)),
        scratch_shapes=[
            pltpu.VMEM((T * Bp, 8 * H), jnp.float32),   # hoisted gate projection
            pltpu.VMEM((T * Bp, 2 * H), jnp.float32),   # per-step [h_f | h_b] of current layer
        ],
        compiler_params=pltpu.CompilerParams(
            dimension_semantics=("arbitrary",),
            # Explicit budget (scratch + weights here is < 1 MiB; re-derive if T*B grows,
            # especially on v7x's 64 MiB physical VMEM).
            vmem_limit_bytes=16 * 1024 * 1024,
        ),
    )(*inputs)
    return out_padded[:B]


graphsage_forward = jax.jit(graphsage_pallas, static_argnames=("stack_layers",))


# ------------------------------ parameters ------------------------------- #

def init_graphsage_params(key, embed_dim, stack_layers):
    """PyTorch nn.LSTM-style init: U(-1/sqrt(H), 1/sqrt(H)).
    Stored with fwd|bwd gate blocks concatenated (single N=8H input projection) and with
    W_hh pre-built as a block-diagonal (2H, 8H) matrix (single per-step recurrence matmul)."""
    H = embed_dim
    bound = 1.0 / float(np.sqrt(H))
    params = []
    for layer in range(stack_layers):
        in_size = embed_dim if layer == 0 else 2 * embed_dim
        w_ih_dirs, w_hh_dirs, b_dirs = [], [], []
        for _direction in range(2):  # 0 = forward, 1 = reverse
            key, k1, k2, k3, k4 = jax.random.split(key, 5)
            w_ih = jax.random.uniform(k1, (4 * H, in_size), jnp.float32, -bound, bound)
            w_hh = jax.random.uniform(k2, (4 * H, H), jnp.float32, -bound, bound)
            b_ih = jax.random.uniform(k3, (4 * H,), jnp.float32, -bound, bound)
            b_hh = jax.random.uniform(k4, (4 * H,), jnp.float32, -bound, bound)
            w_ih_dirs.append(jnp.transpose(w_ih))          # (in_size, 4H)
            w_hh_dirs.append(jnp.transpose(w_hh))          # (H, 4H)
            b_dirs.append(b_ih + b_hh)                     # (4H,)
        w_hh_bd = jnp.zeros((2 * H, 8 * H), jnp.float32)
        w_hh_bd = w_hh_bd.at[:H, :4 * H].set(w_hh_dirs[0])
        w_hh_bd = w_hh_bd.at[H:, 4 * H:].set(w_hh_dirs[1])
        params.append({
            "w_ih_cat": jnp.concatenate(w_ih_dirs, axis=1),            # (in_size, 8H)
            "w_hh_cat": jnp.concatenate(w_hh_dirs, axis=1),            # (H, 8H) (reference)
            "w_hh_bd": w_hh_bd,                                        # (2H, 8H) (kernel)
            "bias_cat": jnp.concatenate(b_dirs).reshape(1, 8 * H),     # (1, 8H)
        })
    return params


# ------------------------- pure-JAX reference ----------------------------- #

def _lstm_layer_ref(x_tm, w_ih_t, w_hh_t, bias):
    T, B, _ = x_tm.shape
    H = w_hh_t.shape[0]

    def cell(carry, x_t):
        h, c = carry
        gates = x_t @ w_ih_t + h @ w_hh_t + bias
        i, f, g, o = jnp.split(gates, 4, axis=-1)
        c = jax.nn.sigmoid(f) * c + jax.nn.sigmoid(i) * jnp.tanh(g)
        h = jax.nn.sigmoid(o) * jnp.tanh(c)
        return (h, c), h

    init = (jnp.zeros((B, H), jnp.float32), jnp.zeros((B, H), jnp.float32))
    _, hs = lax.scan(cell, init, x_tm)
    return hs


def graphsage_forward_ref(x, params, stack_layers):
    H = params[0]["w_hh_cat"].shape[0]
    G = 4 * H
    cur = jnp.transpose(x, (1, 0, 2)).astype(jnp.float32)
    for lp in params:
        wih, whh, b = lp["w_ih_cat"], lp["w_hh_cat"], lp["bias_cat"]
        out_f = _lstm_layer_ref(cur, wih[:, :G], whh[:, :G], b[:, :G])
        out_b = _lstm_layer_ref(cur[::-1], wih[:, G:], whh[:, G:], b[:, G:])[::-1]
        cur = jnp.concatenate([out_f, out_b], axis=-1)
    two_h = cur.shape[-1]
    head = cur[0].reshape(cur.shape[1], stack_layers, two_h // stack_layers)
    return jnp.max(head, axis=1)


# --------------------------------- main ----------------------------------- #

if __name__ == "__main__":
    EMBED_DIM = 32      # embed_dim
    STACK_LAYERS = 2    # stack_layers
    B, T = 2, 8         # batch, sequence length

    key = jax.random.PRNGKey(0)
    key, xkey, pkey = jax.random.split(key, 3)
    x = jax.random.normal(xkey, (B, T, EMBED_DIM), dtype=jnp.float32)
    params = init_graphsage_params(pkey, EMBED_DIM, STACK_LAYERS)

    out = graphsage_forward(x, params, stack_layers=STACK_LAYERS)
    out = jax.block_until_ready(out)

    assert out.shape == (B, 2 * EMBED_DIM // STACK_LAYERS), out.shape

    ref = jax.block_until_ready(graphsage_forward_ref(x, params, STACK_LAYERS))
    np.testing.assert_allclose(np.asarray(out), np.asarray(ref), rtol=1e-4, atol=1e-4)

    print("KERNEL_OK")
</pallas_src>

<mosaic_0001>
module attributes {stable_mosaic.version = 11 : i64} {
  func.func @_graphsage_fused_kernel(%arg0: i32, %arg1: memref<64x32xf32, #tpu.memory_space<vmem>>, %arg2: memref<32x256xf32, #tpu.memory_space<vmem>>, %arg3: memref<64x256xf32, #tpu.memory_space<vmem>>, %arg4: memref<1x256xf32, #tpu.memory_space<vmem>>, %arg5: memref<64x256xf32, #tpu.memory_space<vmem>>, %arg6: memref<64x256xf32, #tpu.memory_space<vmem>>, %arg7: memref<1x256xf32, #tpu.memory_space<vmem>>, %arg8: memref<8x32xf32, #tpu.memory_space<vmem>>, %arg9: memref<64x256xf32, #tpu.memory_space<vmem>>, %arg10: memref<64x64xf32, #tpu.memory_space<vmem>>) attributes {dimension_semantics = [#tpu.dimension_semantics<arbitrary>], iteration_bounds = array<i64: 1>, scalar_prefetch = 0 : i64, scratch_operands = 2 : i64, tpu.core_type = #tpu.core_type<tc>, window_params = [{pipeline_mode = #tpu.pipeline_mode<synchronous>, transform_indices = @transform_0, window_bounds = array<i64: 64, 32>}, {pipeline_mode = #tpu.pipeline_mode<synchronous>, transform_indices = @transform_1, window_bounds = array<i64: 32, 256>}, {pipeline_mode = #tpu.pipeline_mode<synchronous>, transform_indices = @transform_2, window_bounds = array<i64: 64, 256>}, {pipeline_mode = #tpu.pipeline_mode<synchronous>, transform_indices = @transform_3, window_bounds = array<i64: 1, 256>}, {pipeline_mode = #tpu.pipeline_mode<synchronous>, transform_indices = @transform_4, window_bounds = array<i64: 64, 256>}, {pipeline_mode = #tpu.pipeline_mode<synchronous>, transform_indices = @transform_5, window_bounds = array<i64: 64, 256>}, {pipeline_mode = #tpu.pipeline_mode<synchronous>, transform_indices = @transform_6, window_bounds = array<i64: 1, 256>}, {pipeline_mode = #tpu.pipeline_mode<synchronous>, transform_indices = @transform_7, window_bounds = array<i64: 8, 32>}]} {
    %c0 = arith.constant 0 : index
    %c0_0 = arith.constant 0 : index
    %0 = vector.load %arg1[%c0, %c0_0] : memref<64x32xf32, #tpu.memory_space<vmem>>, vector<64x32xf32>
    %c0_1 = arith.constant 0 : index
    %c0_2 = arith.constant 0 : index
    %1 = vector.load %arg2[%c0_1, %c0_2] : memref<32x256xf32, #tpu.memory_space<vmem>>, vector<32x256xf32>
    %cst = arith.constant dense<0.000000e+00> : vector<64x256xf32>
    %2 = tpu.matmul %0, %1, %cst {dimension_numbers = #tpu.dot_dimension_numbers<[1], [0], [0], [1], [0, 0, 1, 1], [], []>} : vector<64x32xf32>, vector<32x256xf32>, vector<64x256xf32> -> vector<64x256xf32>
    %c0_3 = arith.constant 0 : index
    %c0_4 = arith.constant 0 : index
    %3 = vector.load %arg4[%c0_3, %c0_4] : memref<1x256xf32, #tpu.memory_space<vmem>>, vector<1x256xf32>
    %4 = vector.broadcast %3 : vector<1x256xf32> to vector<64x256xf32>
    %5 = arith.addf %2, %4 : vector<64x256xf32>
    %c0_5 = arith.constant 0 : index
    %c0_6 = arith.constant 0 : index
    %6 = vector.load %arg9[%c0_5, %c0_6] : memref<64x256xf32, #tpu.memory_space<vmem>>, vector<64x256xf32>
    tpu.vector_store %arg9[%c0_5, %c0_6], %5 {strides = array<i32>} : memref<64x256xf32, #tpu.memory_space<vmem>>, vector<64x256xf32>,
    %c0_7 = arith.constant 0 : index
    %c0_8 = arith.constant 0 : index
    %7 = vector.load %arg9[%c0_7, %c0_8] : memref<64x256xf32, #tpu.memory_space<vmem>>, vector<8x128xf32>
    %c56 = arith.constant 56 : index
    %c128 = arith.constant 128 : index
    %8 = vector.load %arg9[%c56, %c128] : memref<64x256xf32, #tpu.memory_space<vmem>>, vector<8x128xf32>
    %9 = arith.negf %7 : vector<8x128xf32>
    %10 = math.exp %9 : vector<8x128xf32>
    %cst_9 = arith.constant 1.000000e+00 : f32
    %11 = vector.broadcast %cst_9 : f32 to vector<8x128xf32>
    %12 = arith.addf %11, %10 : vector<8x128xf32>
    %13 = arith.divf %11, %12 : vector<8x128xf32>
    %14 = math.tanh %7 : vector<8x128xf32>
    %15 = vector.extract_strided_slice %13 {offsets = [0, 0], sizes = [8, 32], strides = [1, 1]} : vector<8x128xf32> to vector<8x32xf32>
    %16 = vector.extract_strided_slice %13 {offsets = [0, 96], sizes = [8, 32], strides = [1, 1]} : vector<8x128xf32> to vector<8x32xf32>
    %17 = vector.extract_strided_slice %14 {offsets = [0, 64], sizes = [8, 32], strides = [1, 1]} : vector<8x128xf32> to vector<8x32xf32>
    %18 = arith.mulf %15, %17 : vector<8x32xf32>
    %19 = math.tanh %18 : vector<8x32xf32>
    %20 = arith.mulf %16, %19 : vector<8x32xf32>
    %21 = arith.negf %8 : vector<8x128xf32>
    %22 = math.exp %21 : vector<8x128xf32>
    %cst_10 = arith.constant 1.000000e+00 : f32
    %23 = vector.broadcast %cst_10 : f32 to vector<8x128xf32>
    %24 = arith.addf %23, %22 : vector<8x128xf32>
    %25 = arith.divf %23, %24 : vector<8x128xf32>
    %26 = math.tanh %8 : vector<8x128xf32>
    %27 = vector.extract_strided_slice %25 {offsets = [0, 0], sizes = [8, 32], strides = [1, 1]} : vector<8x128xf32> to vector<8x32xf32>
    %28 = vector.extract_strided_slice %25 {offsets = [0, 96], sizes = [8, 32], strides = [1, 1]} : vector<8x128xf32> to vector<8x32xf32>
    %29 = vector.extract_strided_slice %26 {offsets = [0, 64], sizes = [8, 32], strides = [1, 1]} : vector<8x128xf32> to vector<8x32xf32>
    %30 = arith.mulf %27, %29 : vector<8x32xf32>
    %31 = math.tanh %30 : vector<8x32xf32>
    %32 = arith.mulf %28, %31 : vector<8x32xf32>
    %c0_11 = arith.constant 0 : index
    %c0_12 = arith.constant 0 : index
    %33 = vector.load %arg10[%c0_11, %c0_12] : memref<64x64xf32, #tpu.memory_space<vmem>>, vector<8x32xf32>
    tpu.vector_store %arg10[%c0_11, %c0_12], %20 {strides = array<i32>} : memref<64x64xf32, #tpu.memory_space<vmem>>, vector<8x32xf32>,
    %c56_13 = arith.constant 56 : index
    %c32 = arith.constant 32 : index
    %34 = vector.load %arg10[%c56_13, %c32] : memref<64x64xf32, #tpu.memory_space<vmem>>, vector<8x32xf32>
    tpu.vector_store %arg10[%c56_13, %c32], %32 {strides = array<i32>} : memref<64x64xf32, #tpu.memory_space<vmem>>, vector<8x32xf32>,
    %c8 = arith.constant 8 : index
    %c0_14 = arith.constant 0 : index
    %35 = vector.load %arg9[%c8, %c0_14] : memref<64x256xf32, #tpu.memory_space<vmem>>, vector<8x128xf32>
    %c48 = arith.constant 48 : index
    %c128_15 = arith.constant 128 : index
    %36 = vector.load %arg9[%c48, %c128_15] : memref<64x256xf32, #tpu.memory_space<vmem>>, vector<8x128xf32>
    %37 = tpu.concatenate %20, %32 in 1 : vector<8x32xf32>, vector<8x32xf32> -> vector<8x64xf32>
    %c0_16 = arith.constant 0 : index
    %c0_17 = arith.constant 0 : index
    %38 = vector.load %arg3[%c0_16, %c0_17] : memref<64x256xf32, #tpu.memory_space<vmem>>, vector<64x256xf32>
    %cst_18 = arith.constant dense<0.000000e+00> : vector<8x256xf32>
    %39 = tpu.matmul %37, %38, %cst_18 {dimension_numbers = #tpu.dot_dimension_numbers<[1], [0], [0], [1], [0, 0, 1, 1], [], []>} : vector<8x64xf32>, vector<64x256xf32>, vector<8x256xf32> -> vector<8x256xf32>
    %40 = vector.extract_strided_slice %39 {offsets = [0, 0], sizes = [8, 128], strides = [1, 1]} : vector<8x256xf32> to vector<8x128xf32>
    %41 = arith.addf %35, %40 : vector<8x128xf32>
    %42 = vector.extract_strided_slice %39 {offsets = [0, 128], sizes = [8, 128], strides = [1, 1]} : vector<8x256xf32> to vector<8x128xf32>
    %43 = arith.addf %36, %42 : vector<8x128xf32>
    %44 = arith.negf %41 : vector<8x128xf32>
    %45 = math.exp %44 : vector<8x128xf32>
    %cst_19 = arith.constant 1.000000e+00 : f32
    %46 = vector.broadcast %cst_19 : f32 to vector<8x128xf32>
    %47 = arith.addf %46, %45 : vector<8x128xf32>
    %48 = arith.divf %46, %47 : vector<8x128xf32>
    %49 = math.tanh %41 : vector<8x128xf32>
    %50 = vector.extract_strided_slice %48 {offsets = [0, 0], sizes = [8, 32], strides = [1, 1]} : vector<8x128xf32> to vector<8x32xf32>
    %51 = vector.extract_strided_slice %48 {offsets = [0, 96], sizes = [8, 32], strides = [1, 1]} : vector<8x128xf32> to vector<8x32xf32>
    %52 = vector.extract_strided_slice %49 {offsets = [0, 64], sizes = [8, 32], strides = [1, 1]} : vector<8x128xf32> to vector<8x32xf32>
    %53 = vector.extract_strided_slice %48 {offsets = [0, 32], sizes = [8, 32], strides = [1, 1]} : vector<8x128xf32> to vector<8x32xf32>
    %54 = arith.mulf %53, %18 : vector<8x32xf32>
    %55 = arith.mulf %50, %52 : vector<8x32xf32>
    %56 = arith.addf %54, %55 : vector<8x32xf32>
    %57 = math.tanh %56 : vector<8x32xf32>
    %58 = arith.mulf %51, %57 : vector<8x32xf32>
    %59 = arith.negf %43 : vector<8x128xf32>
    %60 = math.exp %59 : vector<8x128xf32>
    %cst_20 = arith.constant 1.000000e+00 : f32
    %61 = vector.broadcast %cst_20 : f32 to vector<8x128xf32>
    %62 = arith.addf %61, %60 : vector<8x128xf32>
    %63 = arith.divf %61, %62 : vector<8x128xf32>
    %64 = math.tanh %43 : vector<8x128xf32>
    %65 = vector.extract_strided_slice %63 {offsets = [0, 0], sizes = [8, 32], strides = [1, 1]} : vector<8x128xf32> to vector<8x32xf32>
    %66 = vector.extract_strided_slice %63 {offsets = [0, 96], sizes = [8, 32], strides = [1, 1]} : vector<8x128xf32> to vector<8x32xf32>
    %67 = vector.extract_strided_slice %64 {offsets = [0, 64], sizes = [8, 32], strides = [1, 1]} : vector<8x128xf32> to vector<8x32xf32>
    %68 = vector.extract_strided_slice %63 {offsets = [0, 32], sizes = [8, 32], strides = [1, 1]} : vector<8x128xf32> to vector<8x32xf32>
    %69 = arith.mulf %68, %30 : vector<8x32xf32>
    %70 = arith.mulf %65, %67 : vector<8x32xf32>
    %71 = arith.addf %69, %70 : vector<8x32xf32>
    %72 = math.tanh %71 : vector<8x32xf32>
    %73 = arith.mulf %66, %72 : vector<8x32xf32>
    %c8_21 = arith.constant 8 : index
    %c0_22 = arith.constant 0 : index
    %74 = vector.load %arg10[%c8_21, %c0_22] : memref<64x64xf32, #tpu.memory_space<vmem>>, vector<8x32xf32>
    tpu.vector_store %arg10[%c8_21, %c0_22], %58 {strides = array<i32>} : memref<64x64xf32, #tpu.memory_space<vmem>>, vector<8x32xf32>,
    %c48_23 = arith.constant 48 : index
    %c32_24 = arith.constant 32 : index
    %75 = vector.load %arg10[%c48_23, %c32_24] : memref<64x64xf32, #tpu.memory_space<vmem>>, vector<8x32xf32>
    tpu.vector_store %arg10[%c48_23, %c32_24], %73 {strides = array<i32>} : memref<64x64xf32, #tpu.memory_space<vmem>>, vector<8x32xf32>,
    %c16 = arith.constant 16 : index
    %c0_25 = arith.constant 0 : index
    %76 = vector.load %arg9[%c16, %c0_25] : memref<64x256xf32, #tpu.memory_space<vmem>>, vector<8x128xf32>
    %c40 = arith.constant 40 : index
    %c128_26 = arith.constant 128 : index
    %77 = vector.load %arg9[%c40, %c128_26] : memref<64x256xf32, #tpu.memory_space<vmem>>, vector<8x128xf32>
    %78 = tpu.concatenate %58, %73 in 1 : vector<8x32xf32>, vector<8x32xf32> -> vector<8x64xf32>
    %c0_27 = arith.constant 0 : index
    %c0_28 = arith.constant 0 : index
    %79 = vector.load %arg3[%c0_27, %c0_28] : memref<64x256xf32, #tpu.memory_space<vmem>>, vector<64x256xf32>
    %cst_29 = arith.constant dense<0.000000e+00> : vector<8x256xf32>
    %80 = tpu.matmul %78, %79, %cst_29 {dimension_numbers = #tpu.dot_dimension_numbers<[1], [0], [0], [1], [0, 0, 1, 1], [], []>} : vector<8x64xf32>, vector<64x256xf32>, vector<8x256xf32> -> vector<8x256xf32>
    %81 = vector.extract_strided_slice %80 {offsets = [0, 0], sizes = [8, 128], strides = [1, 1]} : vector<8x256xf32> to vector<8x128xf32>
    %82 = arith.addf %76, %81 : vector<8x128xf32>
    %83 = vector.extract_strided_slice %80 {offsets = [0, 128], sizes = [8, 128], strides = [1, 1]} : vector<8x256xf32> to vector<8x128xf32>
    %84 = arith.addf %77, %83 : vector<8x128xf32>
    %85 = arith.negf %82 : vector<8x128xf32>
    %86 = math.exp %85 : vector<8x128xf32>
    %cst_30 = arith.constant 1.000000e+00 : f32
    %87 = vector.broadcast %cst_30 : f32 to vector<8x128xf32>
    %88 = arith.addf %87, %86 : vector<8x128xf32>
    %89 = arith.divf %87, %88 : vector<8x128xf32>
    %90 = math.tanh %82 : vector<8x128xf32>
    %91 = vector.extract_strided_slice %89 {offsets = [0, 0], sizes = [8, 32], strides = [1, 1]} : vector<8x128xf32> to vector<8x32xf32>
    %92 = vector.extract_strided_slice %89 {offsets = [0, 96], sizes = [8, 32], strides = [1, 1]} : vector<8x128xf32> to vector<8x32xf32>
    %93 = vector.extract_strided_slice %90 {offsets = [0, 64], sizes = [8, 32], strides = [1, 1]} : vector<8x128xf32> to vector<8x32xf32>
    %94 = vector.extract_strided_slice %89 {offsets = [0, 32], sizes = [8, 32], strides = [1, 1]} : vector<8x128xf32> to vector<8x32xf32>
    %95 = arith.mulf %94, %56 : vector<8x32xf32>
    %96 = arith.mulf %91, %93 : vector<8x32xf32>
    %97 = arith.addf %95, %96 : vector<8x32xf32>
    %98 = math.tanh %97 : vector<8x32xf32>
    %99 = arith.mulf %92, %98 : vector<8x32xf32>
    %100 = arith.negf %84 : vector<8x128xf32>
    %101 = math.exp %100 : vector<8x128xf32>
    %cst_31 = arith.constant 1.000000e+00 : f32
    %102 = vector.broadcast %cst_31 : f32 to vector<8x128xf32>
    %103 = arith.addf %102, %101 : vector<8x128xf32>
    %104 = arith.divf %102, %103 : vector<8x128xf32>
    %105 = math.tanh %84 : vector<8x128xf32>
    %106 = vector.extract_strided_slice %104 {offsets = [0, 0], sizes = [8, 32], strides = [1, 1]} : vector<8x128xf32> to vector<8x32xf32>
    %107 = vector.extract_strided_slice %104 {offsets = [0, 96], sizes = [8, 32], strides = [1, 1]} : vector<8x128xf32> to vector<8x32xf32>
    %108 = vector.extract_strided_slice %105 {offsets = [0, 64], sizes = [8, 32], strides = [1, 1]} : vector<8x128xf32> to vector<8x32xf32>
    %109 = vector.extract_strided_slice %104 {offsets = [0, 32], sizes = [8, 32], strides = [1, 1]} : vector<8x128xf32> to vector<8x32xf32>
    %110 = arith.mulf %109, %71 : vector<8x32xf32>
    %111 = arith.mulf %106, %108 : vector<8x32xf32>
    %112 = arith.addf %110, %111 : vector<8x32xf32>
    %113 = math.tanh %112 : vector<8x32xf32>
    %114 = arith.mulf %107, %113 : vector<8x32xf32>
    %c16_32 = arith.constant 16 : index
    %c0_33 = arith.constant 0 : index
    %115 = vector.load %arg10[%c16_32, %c0_33] : memref<64x64xf32, #tpu.memory_space<vmem>>, vector<8x32xf32>
    tpu.vector_store %arg10[%c16_32, %c0_33], %99 {strides = array<i32>} : memref<64x64xf32, #tpu.memory_space<vmem>>, vector<8x32xf32>,
    %c40_34 = arith.constant 40 : index
    %c32_35 = arith.constant 32 : index
    %116 = vector.load %arg10[%c40_34, %c32_35] : memref<64x64xf32, #tpu.memory_space<vmem>>, vector<8x32xf32>
    tpu.vector_store %arg10[%c40_34, %c32_35], %114 {strides = array<i32>} : memref<64x64xf32, #tpu.memory_space<vmem>>, vector<8x32xf32>,
    %c24 = arith.constant 24 : index
    %c0_36 = arith.constant 0 : index
    %117 = vector.load %arg9[%c24, %c0_36] : memref<64x256xf32, #tpu.memory_space<vmem>>, vector<8x128xf32>
    %c32_37 = arith.constant 32 : index
    %c128_38 = arith.constant 128 : index
    %118 = vector.load %arg9[%c32_37, %c128_38] : memref<64x256xf32, #tpu.memory_space<vmem>>, vector<8x128xf32>
    %119 = tpu.concatenate %99, %114 in 1 : vector<8x32xf32>, vector<8x32xf32> -> vector<8x64xf32>
    %c0_39 = arith.constant 0 : index
    %c0_40 = arith.constant 0 : index
    %120 = vector.load %arg3[%c0_39, %c0_40] : memref<64x256xf32, #tpu.memory_space<vmem>>, vector<64x256xf32>
    %cst_41 = arith.constant dense<0.000000e+00> : vector<8x256xf32>
    %121 = tpu.matmul %119, %120, %cst_41 {dimension_numbers = #tpu.dot_dimension_numbers<[1], [0], [0], [1], [0, 0, 1, 1], [], []>} : vector<8x64xf32>, vector<64x256xf32>, vector<8x256xf32> -> vector<8x256xf32>
    %122 = vector.extract_strided_slice %121 {offsets = [0, 0], sizes = [8, 128], strides = [1, 1]} : vector<8x256xf32> to vector<8x128xf32>
    %123 = arith.addf %117, %122 : vector<8x128xf32>
    %124 = vector.extract_strided_slice %121 {offsets = [0, 128], sizes = [8, 128], strides = [1, 1]} : vector<8x256xf32> to vector<8x128xf32>
    %125 = arith.addf %118, %124 : vector<8x128xf32>
    %126 = arith.negf %123 : vector<8x128xf32>
    %127 = math.exp %126 : vector<8x128xf32>
    %cst_42 = arith.constant 1.000000e+00 : f32
    %128 = vector.broadcast %cst_42 : f32 to vector<8x128xf32>
    %129 = arith.addf %128, %127 : vector<8x128xf32>
    %130 = arith.divf %128, %129 : vector<8x128xf32>
    %131 = math.tanh %123 : vector<8x128xf32>
    %132 = vector.extract_strided_slice %130 {offsets = [0, 0], sizes = [8, 32], strides = [1, 1]} : vector<8x128xf32> to vector<8x32xf32>
    %133 = vector.extract_strided_slice %130 {offsets = [0, 96], sizes = [8, 32], strides = [1, 1]} : vector<8x128xf32> to vector<8x32xf32>
    %134 = vector.extract_strided_slice %131 {offsets = [0, 64], sizes = [8, 32], strides = [1, 1]} : vector<8x128xf32> to vector<8x32xf32>
    %135 = vector.extract_strided_slice %130 {offsets = [0, 32], sizes = [8, 32], strides = [1, 1]} : vector<8x128xf32> to vector<8x32xf32>
    %136 = arith.mulf %135, %97 : vector<8x32xf32>
    %137 = arith.mulf %132, %134 : vector<8x32xf32>
    %138 = arith.addf %136, %137 : vector<8x32xf32>
    %139 = math.tanh %138 : vector<8x32xf32>
    %140 = arith.mulf %133, %139 : vector<8x32xf32>
    %141 = arith.negf %125 : vector<8x128xf32>
    %142 = math.exp %141 : vector<8x128xf32>
    %cst_43 = arith.constant 1.000000e+00 : f32
    %143 = vector.broadcast %cst_43 : f32 to vector<8x128xf32>
    %144 = arith.addf %143, %142 : vector<8x128xf32>
    %145 = arith.divf %143, %144 : vector<8x128xf32>
    %146 = math.tanh %125 : vector<8x128xf32>
    %147 = vector.extract_strided_slice %145 {offsets = [0, 0], sizes = [8, 32], strides = [1, 1]} : vector<8x128xf32> to vector<8x32xf32>
    %148 = vector.extract_strided_slice %145 {offsets = [0, 96], sizes = [8, 32], strides = [1, 1]} : vector<8x128xf32> to vector<8x32xf32>
    %149 = vector.extract_strided_slice %146 {offsets = [0, 64], sizes = [8, 32], strides = [1, 1]} : vector<8x128xf32> to vector<8x32xf32>
    %150 = vector.extract_strided_slice %145 {offsets = [0, 32], sizes = [8, 32], strides = [1, 1]} : vector<8x128xf32> to vector<8x32xf32>
    %151 = arith.mulf %150, %112 : vector<8x32xf32>
    %152 = arith.mulf %147, %149 : vector<8x32xf32>
    %153 = arith.addf %151, %152 : vector<8x32xf32>
    %154 = math.tanh %153 : vector<8x32xf32>
    %155 = arith.mulf %148, %154 : vector<8x32xf32>
    %c24_44 = arith.constant 24 : index
    %c0_45 = arith.constant 0 : index
    %156 = vector.load %arg10[%c24_44, %c0_45] : memref<64x64xf32, #tpu.memory_space<vmem>>, vector<8x32xf32>
    tpu.vector_store %arg10[%c24_44, %c0_45], %140 {strides = array<i32>} : memref<64x64xf32, #tpu.memory_space<vmem>>, vector<8x32xf32>,
    %c32_46 = arith.constant 32 : index
    %c32_47 = arith.constant 32 : index
    %157 = vector.load %arg10[%c32_46, %c32_47] : memref<64x64xf32, #tpu.memory_space<vmem>>, vector<8x32xf32>
    tpu.vector_store %arg10[%c32_46, %c32_47], %155 {strides = array<i32>} : memref<64x64xf32, #tpu.memory_space<vmem>>, vector<8x32xf32>,
    %c32_48 = arith.constant 32 : index
    %c0_49 = arith.constant 0 : index
    %158 = vector.load %arg9[%c32_48, %c0_49] : memref<64x256xf32, #tpu.memory_space<vmem>>, vector<8x128xf32>
    %c24_50 = arith.constant 24 : index
    %c128_51 = arith.constant 128 : index
    %159 = vector.load %arg9[%c24_50, %c128_51] : memref<64x256xf32, #tpu.memory_space<vmem>>, vector<8x128xf32>
    %160 = tpu.concatenate %140, %155 in 1 : vector<8x32xf32>, vector<8x32xf32> -> vector<8x64xf32>
    %c0_52 = arith.constant 0 : index
    %c0_53 = arith.constant 0 : index
    %161 = vector.load %arg3[%c0_52, %c0_53] : memref<64x256xf32, #tpu.memory_space<vmem>>, vector<64x256xf32>
    %cst_54 = arith.constant dense<0.000000e+00> : vector<8x256xf32>
    %162 = tpu.matmul %160, %161, %cst_54 {dimension_numbers = #tpu.dot_dimension_numbers<[1], [0], [0], [1], [0, 0, 1, 1], [], []>} : vector<8x64xf32>, vector<64x256xf32>, vector<8x256xf32> -> vector<8x256xf32>
    %163 = vector.extract_strided_slice %162 {offsets = [0, 0], sizes = [8, 128], strides = [1, 1]} : vector<8x256xf32> to vector<8x128xf32>
    %164 = arith.addf %158, %163 : vector<8x128xf32>
    %165 = vector.extract_strided_slice %162 {offsets = [0, 128], sizes = [8, 128], strides = [1, 1]} : vector<8x256xf32> to vector<8x128xf32>
    %166 = arith.addf %159, %165 : vector<8x128xf32>
    %167 = arith.negf %164 : vector<8x128xf32>
    %168 = math.exp %167 : vector<8x128xf32>
    %cst_55 = arith.constant 1.000000e+00 : f32
    %169 = vector.broadcast %cst_55 : f32 to vector<8x128xf32>
    %170 = arith.addf %169, %168 : vector<8x128xf32>
    %171 = arith.divf %169, %170 : vector<8x128xf32>
    %172 = math.tanh %164 : vector<8x128xf32>
    %173 = vector.extract_strided_slice %171 {offsets = [0, 0], sizes = [8, 32], strides = [1, 1]} : vector<8x128xf32> to vector<8x32xf32>
    %174 = vector.extract_strided_slice %171 {offsets = [0, 96], sizes = [8, 32], strides = [1, 1]} : vector<8x128xf32> to vector<8x32xf32>
    %175 = vector.extract_strided_slice %172 {offsets = [0, 64], sizes = [8, 32], strides = [1, 1]} : vector<8x128xf32> to vector<8x32xf32>
    %176 = vector.extract_strided_slice %171 {offsets = [0, 32], sizes = [8, 32], strides = [1, 1]} : vector<8x128xf32> to vector<8x32xf32>
    %177 = arith.mulf %176, %138 : vector<8x32xf32>
    %178 = arith.mulf %173, %175 : vector<8x32xf32>
    %179 = arith.addf %177, %178 : vector<8x32xf32>
    %180 = math.tanh %179 : vector<8x32xf32>
    %181 = arith.mulf %174, %180 : vector<8x32xf32>
    %182 = arith.negf %166 : vector<8x128xf32>
    %183 = math.exp %182 : vector<8x128xf32>
    %cst_56 = arith.constant 1.000000e+00 : f32
    %184 = vector.broadcast %cst_56 : f32 to vector<8x128xf32>
    %185 = arith.addf %184, %183 : vector<8x128xf32>
    %186 = arith.divf %184, %185 : vector<8x128xf32>
    %187 = math.tanh %166 : vector<8x128xf32>
    %188 = vector.extract_strided_slice %186 {offsets = [0, 0], sizes = [8, 32], strides = [1, 1]} : vector<8x128xf32> to vector<8x32xf32>
    %189 = vector.extract_strided_slice %186 {offsets = [0, 96], sizes = [8, 32], strides = [1, 1]} : vector<8x128xf32> to vector<8x32xf32>
    %190 = vector.extract_strided_slice %187 {offsets = [0, 64], sizes = [8, 32], strides = [1, 1]} : vector<8x128xf32> to vector<8x32xf32>
    %191 = vector.extract_strided_slice %186 {offsets = [0, 32], sizes = [8, 32], strides = [1, 1]} : vector<8x128xf32> to vector<8x32xf32>
    %192 = arith.mulf %191, %153 : vector<8x32xf32>
    %193 = arith.mulf %188, %190 : vector<8x32xf32>
    %194 = arith.addf %192, %193 : vector<8x32xf32>
    %195 = math.tanh %194 : vector<8x32xf32>
    %196 = arith.mulf %189, %195 : vector<8x32xf32>
    %c32_57 = arith.constant 32 : index
    %c0_58 = arith.constant 0 : index
    %197 = vector.load %arg10[%c32_57, %c0_58] : memref<64x64xf32, #tpu.memory_space<vmem>>, vector<8x32xf32>
    tpu.vector_store %arg10[%c32_57, %c0_58], %181 {strides = array<i32>} : memref<64x64xf32, #tpu.memory_space<vmem>>, vector<8x32xf32>,
    %c24_59 = arith.constant 24 : index
    %c32_60 = arith.constant 32 : index
    %198 = vector.load %arg10[%c24_59, %c32_60] : memref<64x64xf32, #tpu.memory_space<vmem>>, vector<8x32xf32>
    tpu.vector_store %arg10[%c24_59, %c32_60], %196 {strides = array<i32>} : memref<64x64xf32, #tpu.memory_space<vmem>>, vector<8x32xf32>,
    %c40_61 = arith.constant 40 : index
    %c0_62 = arith.constant 0 : index
    %199 = vector.load %arg9[%c40_61, %c0_62] : memref<64x256xf32, #tpu.memory_space<vmem>>, vector<8x128xf32>
    %c16_63 = arith.constant 16 : index
    %c128_64 = arith.constant 128 : index
    %200 = vector.load %arg9[%c16_63, %c128_64] : memref<64x256xf32, #tpu.memory_space<vmem>>, vector<8x128xf32>
    %201 = tpu.concatenate %181, %196 in 1 : vector<8x32xf32>, vector<8x32xf32> -> vector<8x64xf32>
    %c0_65 = arith.constant 0 : index
    %c0_66 = arith.constant 0 : index
    %202 = vector.load %arg3[%c0_65, %c0_66] : memref<64x256xf32, #tpu.memory_space<vmem>>, vector<64x256xf32>
    %cst_67 = arith.constant dense<0.000000e+00> : vector<8x256xf32>
    %203 = tpu.matmul %201, %202, %cst_67 {dimension_numbers = #tpu.dot_dimension_numbers<[1], [0], [0], [1], [0, 0, 1, 1], [], []>} : vector<8x64xf32>, vector<64x256xf32>, vector<8x256xf32> -> vector<8x256xf32>
    %204 = vector.extract_strided_slice %203 {offsets = [0, 0], sizes = [8, 128], strides = [1, 1]} : vector<8x256xf32> to vector<8x128xf32>
    %205 = arith.addf %199, %204 : vector<8x128xf32>
    %206 = vector.extract_strided_slice %203 {offsets = [0, 128], sizes = [8, 128], strides = [1, 1]} : vector<8x256xf32> to vector<8x128xf32>
    %207 = arith.addf %200, %206 : vector<8x128xf32>
    %208 = arith.negf %205 : vector<8x128xf32>
    %209 = math.exp %208 : vector<8x128xf32>
    %cst_68 = arith.constant 1.000000e+00 : f32
    %210 = vector.broadcast %cst_68 : f32 to vector<8x128xf32>
    %211 = arith.addf %210, %209 : vector<8x128xf32>
    %212 = arith.divf %210, %211 : vector<8x128xf32>
    %213 = math.tanh %205 : vector<8x128xf32>
    %214 = vector.extract_strided_slice %212 {offsets = [0, 0], sizes = [8, 32], strides = [1, 1]} : vector<8x128xf32> to vector<8x32xf32>
    %215 = vector.extract_strided_slice %212 {offsets = [0, 96], sizes = [8, 32], strides = [1, 1]} : vector<8x128xf32> to vector<8x32xf32>
    %216 = vector.extract_strided_slice %213 {offsets = [0, 64], sizes = [8, 32], strides = [1, 1]} : vector<8x128xf32> to vector<8x32xf32>
    %217 = vector.extract_strided_slice %212 {offsets = [0, 32], sizes = [8, 32], strides = [1, 1]} : vector<8x128xf32> to vector<8x32xf32>
    %218 = arith.mulf %217, %179 : vector<8x32xf32>
    %219 = arith.mulf %214, %216 : vector<8x32xf32>
    %220 = arith.addf %218, %219 : vector<8x32xf32>
    %221 = math.tanh %220 : vector<8x32xf32>
    %222 = arith.mulf %215, %221 : vector<8x32xf32>
    %223 = arith.negf %207 : vector<8x128xf32>
    %224 = math.exp %223 : vector<8x128xf32>
    %cst_69 = arith.constant 1.000000e+00 : f32
    %225 = vector.broadcast %cst_69 : f32 to vector<8x128xf32>
    %226 = arith.addf %225, %224 : vector<8x128xf32>
    %227 = arith.divf %225, %226 : vector<8x128xf32>
    %228 = math.tanh %207 : vector<8x128xf32>
    %229 = vector.extract_strided_slice %227 {offsets = [0, 0], sizes = [8, 32], strides = [1, 1]} : vector<8x128xf32> to vector<8x32xf32>
    %230 = vector.extract_strided_slice %227 {offsets = [0, 96], sizes = [8, 32], strides = [1, 1]} : vector<8x128xf32> to vector<8x32xf32>
    %231 = vector.extract_strided_slice %228 {offsets = [0, 64], sizes = [8, 32], strides = [1, 1]} : vector<8x128xf32> to vector<8x32xf32>
    %232 = vector.extract_strided_slice %227 {offsets = [0, 32], sizes = [8, 32], strides = [1, 1]} : vector<8x128xf32> to vector<8x32xf32>
    %233 = arith.mulf %232, %194 : vector<8x32xf32>
    %234 = arith.mulf %229, %231 : vector<8x32xf32>
    %235 = arith.addf %233, %234 : vector<8x32xf32>
    %236 = math.tanh %235 : vector<8x32xf32>
    %237 = arith.mulf %230, %236 : vector<8x32xf32>
    %c40_70 = arith.constant 40 : index
    %c0_71 = arith.constant 0 : index
    %238 = vector.load %arg10[%c40_70, %c0_71] : memref<64x64xf32, #tpu.memory_space<vmem>>, vector<8x32xf32>
    tpu.vector_store %arg10[%c40_70, %c0_71], %222 {strides = array<i32>} : memref<64x64xf32, #tpu.memory_space<vmem>>, vector<8x32xf32>,
    %c16_72 = arith.constant 16 : index
    %c32_73 = arith.constant 32 : index
    %239 = vector.load %arg10[%c16_72, %c32_73] : memref<64x64xf32, #tpu.memory_space<vmem>>, vector<8x32xf32>
    tpu.vector_store %arg10[%c16_72, %c32_73], %237 {strides = array<i32>} : memref<64x64xf32, #tpu.memory_space<vmem>>, vector<8x32xf32>,
    %c48_74 = arith.constant 48 : index
    %c0_75 = arith.constant 0 : index
    %240 = vector.load %arg9[%c48_74, %c0_75] : memref<64x256xf32, #tpu.memory_space<vmem>>, vector<8x128xf32>
    %c8_76 = arith.constant 8 : index
    %c128_77 = arith.constant 128 : index
    %241 = vector.load %arg9[%c8_76, %c128_77] : memref<64x256xf32, #tpu.memory_space<vmem>>, vector<8x128xf32>
    %242 = tpu.concatenate %222, %237 in 1 : vector<8x32xf32>, vector<8x32xf32> -> vector<8x64xf32>
    %c0_78 = arith.constant 0 : index
    %c0_79 = arith.constant 0 : index
    %243 = vector.load %arg3[%c0_78, %c0_79] : memref<64x256xf32, #tpu.memory_space<vmem>>, vector<64x256xf32>
    %cst_80 = arith.constant dense<0.000000e+00> : vector<8x256xf32>
    %244 = tpu.matmul %242, %243, %cst_80 {dimension_numbers = #tpu.dot_dimension_numbers<[1], [0], [0], [1], [0, 0, 1, 1], [], []>} : vector<8x64xf32>, vector<64x256xf32>, vector<8x256xf32> -> vector<8x256xf32>
    %245 = vector.extract_strided_slice %244 {offsets = [0, 0], sizes = [8, 128], strides = [1, 1]} : vector<8x256xf32> to vector<8x128xf32>
    %246 = arith.addf %240, %245 : vector<8x128xf32>
    %247 = vector.extract_strided_slice %244 {offsets = [0, 128], sizes = [8, 128], strides = [1, 1]} : vector<8x256xf32> to vector<8x128xf32>
    %248 = arith.addf %241, %247 : vector<8x128xf32>
    %249 = arith.negf %246 : vector<8x128xf32>
    %250 = math.exp %249 : vector<8x128xf32>
    %cst_81 = arith.constant 1.000000e+00 : f32
    %251 = vector.broadcast %cst_81 : f32 to vector<8x128xf32>
    %252 = arith.addf %251, %250 : vector<8x128xf32>
    %253 = arith.divf %251, %252 : vector<8x128xf32>
    %254 = math.tanh %246 : vector<8x128xf32>
    %255 = vector.extract_strided_slice %253 {offsets = [0, 0], sizes = [8, 32], strides = [1, 1]} : vector<8x128xf32> to vector<8x32xf32>
    %256 = vector.extract_strided_slice %253 {offsets = [0, 96], sizes = [8, 32], strides = [1, 1]} : vector<8x128xf32> to vector<8x32xf32>
    %257 = vector.extract_strided_slice %254 {offsets = [0, 64], sizes = [8, 32], strides = [1, 1]} : vector<8x128xf32> to vector<8x32xf32>
    %258 = vector.extract_strided_slice %253 {offsets = [0, 32], sizes = [8, 32], strides = [1, 1]} : vector<8x128xf32> to vector<8x32xf32>
    %259 = arith.mulf %258, %220 : vector<8x32xf32>
    %260 = arith.mulf %255, %257 : vector<8x32xf32>
    %261 = arith.addf %259, %260 : vector<8x32xf32>
    %262 = math.tanh %261 : vector<8x32xf32>
    %263 = arith.mulf %256, %262 : vector<8x32xf32>
    %264 = arith.negf %248 : vector<8x128xf32>
    %265 = math.exp %264 : vector<8x128xf32>
    %cst_82 = arith.constant 1.000000e+00 : f32
    %266 = vector.broadcast %cst_82 : f32 to vector<8x128xf32>
    %267 = arith.addf %266, %265 : vector<8x128xf32>
    %268 = arith.divf %266, %267 : vector<8x128xf32>
    %269 = math.tanh %248 : vector<8x128xf32>
    %270 = vector.extract_strided_slice %268 {offsets = [0, 0], sizes = [8, 32], strides = [1, 1]} : vector<8x128xf32> to vector<8x32xf32>
    %271 = vector.extract_strided_slice %268 {offsets = [0, 96], sizes = [8, 32], strides = [1, 1]} : vector<8x128xf32> to vector<8x32xf32>
    %272 = vector.extract_strided_slice %269 {offsets = [0, 64], sizes = [8, 32], strides = [1, 1]} : vector<8x128xf32> to vector<8x32xf32>
    %273 = vector.extract_strided_slice %268 {offsets = [0, 32], sizes = [8, 32], strides = [1, 1]} : vector<8x128xf32> to vector<8x32xf32>
    %274 = arith.mulf %273, %235 : vector<8x32xf32>
    %275 = arith.mulf %270, %272 : vector<8x32xf32>
    %276 = arith.addf %274, %275 : vector<8x32xf32>
    %277 = math.tanh %276 : vector<8x32xf32>
    %278 = arith.mulf %271, %277 : vector<8x32xf32>
    %c48_83 = arith.constant 48 : index
    %c0_84 = arith.constant 0 : index
    %279 = vector.load %arg10[%c48_83, %c0_84] : memref<64x64xf32, #tpu.memory_space<vmem>>, vector<8x32xf32>
    tpu.vector_store %arg10[%c48_83, %c0_84], %263 {strides = array<i32>} : memref<64x64xf32, #tpu.memory_space<vmem>>, vector<8x32xf32>,
    %c8_85 = arith.constant 8 : index
    %c32_86 = arith.constant 32 : index
    %280 = vector.load %arg10[%c8_85, %c32_86] : memref<64x64xf32, #tpu.memory_space<vmem>>, vector<8x32xf32>
    tpu.vector_store %arg10[%c8_85, %c32_86], %278 {strides = array<i32>} : memref<64x64xf32, #tpu.memory_space<vmem>>, vector<8x32xf32>,
    %c56_87 = arith.constant 56 : index
    %c0_88 = arith.constant 0 : index
    %281 = vector.load %arg9[%c56_87, %c0_88] : memref<64x256xf32, #tpu.memory_space<vmem>>, vector<8x128xf32>
    %c0_89 = arith.constant 0 : index
    %c128_90 = arith.constant 128 : index
    %282 = vector.load %arg9[%c0_89, %c128_90] : memref<64x256xf32, #tpu.memory_space<vmem>>, vector<8x128xf32>
    %283 = tpu.concatenate %263, %278 in 1 : vector<8x32xf32>, vector<8x32xf32> -> vector<8x64xf32>
    %c0_91 = arith.constant 0 : index
    %c0_92 = arith.constant 0 : index
    %284 = vector.load %arg3[%c0_91, %c0_92] : memref<64x256xf32, #tpu.memory_space<vmem>>, vector<64x256xf32>
    %cst_93 = arith.constant dense<0.000000e+00> : vector<8x256xf32>
    %285 = tpu.matmul %283, %284, %cst_93 {dimension_numbers = #tpu.dot_dimension_numbers<[1], [0], [0], [1], [0, 0, 1, 1], [], []>} : vector<8x64xf32>, vector<64x256xf32>, vector<8x256xf32> -> vector<8x256xf32>
    %286 = vector.extract_strided_slice %285 {offsets = [0, 0], sizes = [8, 128], strides = [1, 1]} : vector<8x256xf32> to vector<8x128xf32>
    %287 = arith.addf %281, %286 : vector<8x128xf32>
    %288 = vector.extract_strided_slice %285 {offsets = [0, 128], sizes = [8, 128], strides = [1, 1]} : vector<8x256xf32> to vector<8x128xf32>
    %289 = arith.addf %282, %288 : vector<8x128xf32>
    %290 = arith.negf %287 : vector<8x128xf32>
    %291 = math.exp %290 : vector<8x128xf32>
    %cst_94 = arith.constant 1.000000e+00 : f32
    %292 = vector.broadcast %cst_94 : f32 to vector<8x128xf32>
    %293 = arith.addf %292, %291 : vector<8x128xf32>
    %294 = arith.divf %292, %293 : vector<8x128xf32>
    %295 = math.tanh %287 : vector<8x128xf32>
    %296 = vector.extract_strided_slice %294 {offsets = [0, 0], sizes = [8, 32], strides = [1, 1]} : vector<8x128xf32> to vector<8x32xf32>
    %297 = vector.extract_strided_slice %294 {offsets = [0, 96], sizes = [8, 32], strides = [1, 1]} : vector<8x128xf32> to vector<8x32xf32>
    %298 = vector.extract_strided_slice %295 {offsets = [0, 64], sizes = [8, 32], strides = [1, 1]} : vector<8x128xf32> to vector<8x32xf32>
    %299 = vector.extract_strided_slice %294 {offsets = [0, 32], sizes = [8, 32], strides = [1, 1]} : vector<8x128xf32> to vector<8x32xf32>
    %300 = arith.mulf %299, %261 : vector<8x32xf32>
    %301 = arith.mulf %296, %298 : vector<8x32xf32>
    %302 = arith.addf %300, %301 : vector<8x32xf32>
    %303 = math.tanh %302 : vector<8x32xf32>
    %304 = arith.mulf %297, %303 : vector<8x32xf32>
    %305 = arith.negf %289 : vector<8x128xf32>
    %306 = math.exp %305 : vector<8x128xf32>
    %cst_95 = arith.constant 1.000000e+00 : f32
    %307 = vector.broadcast %cst_95 : f32 to vector<8x128xf32>
    %308 = arith.addf %307, %306 : vector<8x128xf32>
    %309 = arith.divf %307, %308 : vector<8x128xf32>
    %310 = math.tanh %289 : vector<8x128xf32>
    %311 = vector.extract_strided_slice %309 {offsets = [0, 0], sizes = [8, 32], strides = [1, 1]} : vector<8x128xf32> to vector<8x32xf32>
    %312 = vector.extract_strided_slice %309 {offsets = [0, 96], sizes = [8, 32], strides = [1, 1]} : vector<8x128xf32> to vector<8x32xf32>
    %313 = vector.extract_strided_slice %310 {offsets = [0, 64], sizes = [8, 32], strides = [1, 1]} : vector<8x128xf32> to vector<8x32xf32>
    %314 = vector.extract_strided_slice %309 {offsets = [0, 32], sizes = [8, 32], strides = [1, 1]} : vector<8x128xf32> to vector<8x32xf32>
    %315 = arith.mulf %314, %276 : vector<8x32xf32>
    %316 = arith.mulf %311, %313 : vector<8x32xf32>
    %317 = arith.addf %315, %316 : vector<8x32xf32>
    %318 = math.tanh %317 : vector<8x32xf32>
    %319 = arith.mulf %312, %318 : vector<8x32xf32>
    %c56_96 = arith.constant 56 : index
    %c0_97 = arith.constant 0 : index
    %320 = vector.load %arg10[%c56_96, %c0_97] : memref<64x64xf32, #tpu.memory_space<vmem>>, vector<8x32xf32>
    tpu.vector_store %arg10[%c56_96, %c0_97], %304 {strides = array<i32>} : memref<64x64xf32, #tpu.memory_space<vmem>>, vector<8x32xf32>,
    %c0_98 = arith.constant 0 : index
    %c32_99 = arith.constant 32 : index
    %321 = vector.load %arg10[%c0_98, %c32_99] : memref<64x64xf32, #tpu.memory_space<vmem>>, vector<8x32xf32>
    tpu.vector_store %arg10[%c0_98, %c32_99], %319 {strides = array<i32>} : memref<64x64xf32, #tpu.memory_space<vmem>>, vector<8x32xf32>,
    %c0_100 = arith.constant 0 : index
    %c0_101 = arith.constant 0 : index
    %322 = vector.load %arg10[%c0_100, %c0_101] : memref<64x64xf32, #tpu.memory_space<vmem>>, vector<64x64xf32>
    %c0_102 = arith.constant 0 : index
    %c0_103 = arith.constant 0 : index
    %323 = vector.load %arg5[%c0_102, %c0_103] : memref<64x256xf32, #tpu.memory_space<vmem>>, vector<64x256xf32>
    %cst_104 = arith.constant dense<0.000000e+00> : vector<64x256xf32>
    %324 = tpu.matmul %322, %323, %cst_104 {dimension_numbers = #tpu.dot_dimension_numbers<[1], [0], [0], [1], [0, 0, 1, 1], [], []>} : vector<64x64xf32>, vector<64x256xf32>, vector<64x256xf32> -> vector<64x256xf32>
    %c0_105 = arith.constant 0 : index
    %c0_106 = arith.constant 0 : index
    %325 = vector.load %arg7[%c0_105, %c0_106] : memref<1x256xf32, #tpu.memory_space<vmem>>, vector<1x256xf32>
    %326 = vector.broadcast %325 : vector<1x256xf32> to vector<64x256xf32>
    %327 = arith.addf %324, %326 : vector<64x256xf32>
    %c0_107 = arith.constant 0 : index
    %c0_108 = arith.constant 0 : index
    %328 = vector.load %arg9[%c0_107, %c0_108] : memref<64x256xf32, #tpu.memory_space<vmem>>, vector<64x256xf32>
    tpu.vector_store %arg9[%c0_107, %c0_108], %327 {strides = array<i32>} : memref<64x256xf32, #tpu.memory_space<vmem>>, vector<64x256xf32>,
    %c32_109 = arith.constant 32 : index
    %c128_110 = arith.constant 128 : index
    %329 = vector.load %arg6[%c32_109, %c128_110] : memref<64x256xf32, #tpu.memory_space<vmem>>, vector<32x128xf32>
    %c0_111 = arith.constant 0 : index
    %c0_112 = arith.constant 0 : index
    %330 = vector.load %arg9[%c0_111, %c0_112] : memref<64x256xf32, #tpu.memory_space<vmem>>, vector<8x128xf32>
    %331 = arith.negf %330 : vector<8x128xf32>
    %332 = math.exp %331 : vector<8x128xf32>
    %cst_113 = arith.constant 1.000000e+00 : f32
    %333 = vector.broadcast %cst_113 : f32 to vector<8x128xf32>
    %334 = arith.addf %333, %332 : vector<8x128xf32>
    %335 = arith.divf %333, %334 : vector<8x128xf32>
    %336 = math.tanh %330 : vector<8x128xf32>
    %337 = vector.extract_strided_slice %335 {offsets = [0, 0], sizes = [8, 32], strides = [1, 1]} : vector<8x128xf32> to vector<8x32xf32>
    %338 = vector.extract_strided_slice %335 {offsets = [0, 96], sizes = [8, 32], strides = [1, 1]} : vector<8x128xf32> to vector<8x32xf32>
    %339 = vector.extract_strided_slice %336 {offsets = [0, 64], sizes = [8, 32], strides = [1, 1]} : vector<8x128xf32> to vector<8x32xf32>
    %340 = arith.mulf %337, %339 : vector<8x32xf32>
    %341 = math.tanh %340 : vector<8x32xf32>
    %342 = arith.mulf %338, %341 : vector<8x32xf32>
    %c56_114 = arith.constant 56 : index
    %c128_115 = arith.constant 128 : index
    %343 = vector.load %arg9[%c56_114, %c128_115] : memref<64x256xf32, #tpu.memory_space<vmem>>, vector<8x128xf32>
    %344 = arith.negf %343 : vector<8x128xf32>
    %345 = math.exp %344 : vector<8x128xf32>
    %cst_116 = arith.constant 1.000000e+00 : f32
    %346 = vector.broadcast %cst_116 : f32 to vector<8x128xf32>
    %347 = arith.addf %346, %345 : vector<8x128xf32>
    %348 = arith.divf %346, %347 : vector<8x128xf32>
    %349 = math.tanh %343 : vector<8x128xf32>
    %350 = vector.extract_strided_slice %348 {offsets = [0, 0], sizes = [8, 32], strides = [1, 1]} : vector<8x128xf32> to vector<8x32xf32>
    %351 = vector.extract_strided_slice %348 {offsets = [0, 96], sizes = [8, 32], strides = [1, 1]} : vector<8x128xf32> to vector<8x32xf32>
    %352 = vector.extract_strided_slice %349 {offsets = [0, 64], sizes = [8, 32], strides = [1, 1]} : vector<8x128xf32> to vector<8x32xf32>
    %353 = arith.mulf %350, %352 : vector<8x32xf32>
    %354 = math.tanh %353 : vector<8x32xf32>
    %355 = arith.mulf %351, %354 : vector<8x32xf32>
    %c48_117 = arith.constant 48 : index
    %c128_118 = arith.constant 128 : index
    %356 = vector.load %arg9[%c48_117, %c128_118] : memref<64x256xf32, #tpu.memory_space<vmem>>, vector<8x128xf32>
    %cst_119 = arith.constant dense<0.000000e+00> : vector<8x128xf32>
    %357 = tpu.matmul %355, %329, %cst_119 {dimension_numbers = #tpu.dot_dimension_numbers<[1], [0], [0], [1], [0, 0, 1, 1], [], []>} : vector<8x32xf32>, vector<32x128xf32>, vector<8x128xf32> -> vector<8x128xf32>
    %358 = arith.addf %356, %357 : vector<8x128xf32>
    %359 = arith.negf %358 : vector<8x128xf32>
    %360 = math.exp %359 : vector<8x128xf32>
    %cst_120 = arith.constant 1.000000e+00 : f32
    %361 = vector.broadcast %cst_120 : f32 to vector<8x128xf32>
    %362 = arith.addf %361, %360 : vector<8x128xf32>
    %363 = arith.divf %361, %362 : vector<8x128xf32>
    %364 = math.tanh %358 : vector<8x128xf32>
    %365 = vector.extract_strided_slice %363 {offsets = [0, 0], sizes = [8, 32], strides = [1, 1]} : vector<8x128xf32> to vector<8x32xf32>
    %366 = vector.extract_strided_slice %363 {offsets = [0, 96], sizes = [8, 32], strides = [1, 1]} : vector<8x128xf32> to vector<8x32xf32>
    %367 = vector.extract_strided_slice %364 {offsets = [0, 64], sizes = [8, 32], strides = [1, 1]} : vector<8x128xf32> to vector<8x32xf32>
    %368 = vector.extract_strided_slice %363 {offsets = [0, 32], sizes = [8, 32], strides = [1, 1]} : vector<8x128xf32> to vector<8x32xf32>
    %369 = arith.mulf %368, %353 : vector<8x32xf32>
    %370 = arith.mulf %365, %367 : vector<8x32xf32>
    %371 = arith.addf %369, %370 : vector<8x32xf32>
    %372 = math.tanh %371 : vector<8x32xf32>
    %373 = arith.mulf %366, %372 : vector<8x32xf32>
    %c40_121 = arith.constant 40 : index
    %c128_122 = arith.constant 128 : index
    %374 = vector.load %arg9[%c40_121, %c128_122] : memref<64x256xf32, #tpu.memory_space<vmem>>, vector<8x128xf32>
    %cst_123 = arith.constant dense<0.000000e+00> : vector<8x128xf32>
    %375 = tpu.matmul %373, %329, %cst_123 {dimension_numbers = #tpu.dot_dimension_numbers<[1], [0], [0], [1], [0, 0, 1, 1], [], []>} : vector<8x32xf32>, vector<32x128xf32>, vector<8x128xf32> -> vector<8x128xf32>
    %376 = arith.addf %374, %375 : vector<8x128xf32>
    %377 = arith.negf %376 : vector<8x128xf32>
    %378 = math.exp %377 : vector<8x128xf32>
    %cst_124 = arith.constant 1.000000e+00 : f32
    %379 = vector.broadcast %cst_124 : f32 to vector<8x128xf32>
    %380 = arith.addf %379, %378 : vector<8x128xf32>
    %381 = arith.divf %379, %380 : vector<8x128xf32>
    %382 = math.tanh %376 : vector<8x128xf32>
    %383 = vector.extract_strided_slice %381 {offsets = [0, 0], sizes = [8, 32], strides = [1, 1]} : vector<8x128xf32> to vector<8x32xf32>
    %384 = vector.extract_strided_slice %381 {offsets = [0, 96], sizes = [8, 32], strides = [1, 1]} : vector<8x128xf32> to vector<8x32xf32>
    %385 = vector.extract_strided_slice %382 {offsets = [0, 64], sizes = [8, 32], strides = [1, 1]} : vector<8x128xf32> to vector<8x32xf32>
    %386 = vector.extract_strided_slice %381 {offsets = [0, 32], sizes = [8, 32], strides = [1, 1]} : vector<8x128xf32> to vector<8x32xf32>
    %387 = arith.mulf %386, %371 : vector<8x32xf32>
    %388 = arith.mulf %383, %385 : vector<8x32xf32>
    %389 = arith.addf %387, %388 : vector<8x32xf32>
    %390 = math.tanh %389 : vector<8x32xf32>
    %391 = arith.mulf %384, %390 : vector<8x32xf32>
    %c32_125 = arith.constant 32 : index
    %c128_126 = arith.constant 128 : index
    %392 = vector.load %arg9[%c32_125, %c128_126] : memref<64x256xf32, #tpu.memory_space<vmem>>, vector<8x128xf32>
    %cst_127 = arith.constant dense<0.000000e+00> : vector<8x128xf32>
    %393 = tpu.matmul %391, %329, %cst_127 {dimension_numbers = #tpu.dot_dimension_numbers<[1], [0], [0], [1], [0, 0, 1, 1], [], []>} : vector<8x32xf32>, vector<32x128xf32>, vector<8x128xf32> -> vector<8x128xf32>
    %394 = arith.addf %392, %393 : vector<8x128xf32>
    %395 = arith.negf %394 : vector<8x128xf32>
    %396 = math.exp %395 : vector<8x128xf32>
    %cst_128 = arith.constant 1.000000e+00 : f32
    %397 = vector.broadcast %cst_128 : f32 to vector<8x128xf32>
    %398 = arith.addf %397, %396 : vector<8x128xf32>
    %399 = arith.divf %397, %398 : vector<8x128xf32>
    %400 = math.tanh %394 : vector<8x128xf32>
    %401 = vector.extract_strided_slice %399 {offsets = [0, 0], sizes = [8, 32], strides = [1, 1]} : vector<8x128xf32> to vector<8x32xf32>
    %402 = vector.extract_strided_slice %399 {offsets = [0, 96], sizes = [8, 32], strides = [1, 1]} : vector<8x128xf32> to vector<8x32xf32>
    %403 = vector.extract_strided_slice %400 {offsets = [0, 64], sizes = [8, 32], strides = [1, 1]} : vector<8x128xf32> to vector<8x32xf32>
    %404 = vector.extract_strided_slice %399 {offsets = [0, 32], sizes = [8, 32], strides = [1, 1]} : vector<8x128xf32> to vector<8x32xf32>
    %405 = arith.mulf %404, %389 : vector<8x32xf32>
    %406 = arith.mulf %401, %403 : vector<8x32xf32>
    %407 = arith.addf %405, %406 : vector<8x32xf32>
    %408 = math.tanh %407 : vector<8x32xf32>
    %409 = arith.mulf %402, %408 : vector<8x32xf32>
    %c24_129 = arith.constant 24 : index
    %c128_130 = arith.constant 128 : index
    %410 = vector.load %arg9[%c24_129, %c128_130] : memref<64x256xf32, #tpu.memory_space<vmem>>, vector<8x128xf32>
    %cst_131 = arith.constant dense<0.000000e+00> : vector<8x128xf32>
    %411 = tpu.matmul %409, %329, %cst_131 {dimension_numbers = #tpu.dot_dimension_numbers<[1], [0], [0], [1], [0, 0, 1, 1], [], []>} : vector<8x32xf32>, vector<32x128xf32>, vector<8x128xf32> -> vector<8x128xf32>
    %412 = arith.addf %410, %411 : vector<8x128xf32>
    %413 = arith.negf %412 : vector<8x128xf32>
    %414 = math.exp %413 : vector<8x128xf32>
    %cst_132 = arith.constant 1.000000e+00 : f32
    %415 = vector.broadcast %cst_132 : f32 to vector<8x128xf32>
    %416 = arith.addf %415, %414 : vector<8x128xf32>
    %417 = arith.divf %415, %416 : vector<8x128xf32>
    %418 = math.tanh %412 : vector<8x128xf32>
    %419 = vector.extract_strided_slice %417 {offsets = [0, 0], sizes = [8, 32], strides = [1, 1]} : vector<8x128xf32> to vector<8x32xf32>
    %420 = vector.extract_strided_slice %417 {offsets = [0, 96], sizes = [8, 32], strides = [1, 1]} : vector<8x128xf32> to vector<8x32xf32>
    %421 = vector.extract_strided_slice %418 {offsets = [0, 64], sizes = [8, 32], strides = [1, 1]} : vector<8x128xf32> to vector<8x32xf32>
    %422 = vector.extract_strided_slice %417 {offsets = [0, 32], sizes = [8, 32], strides = [1, 1]} : vector<8x128xf32> to vector<8x32xf32>
    %423 = arith.mulf %422, %407 : vector<8x32xf32>
    %424 = arith.mulf %419, %421 : vector<8x32xf32>
    %425 = arith.addf %423, %424 : vector<8x32xf32>
    %426 = math.tanh %425 : vector<8x32xf32>
    %427 = arith.mulf %420, %426 : vector<8x32xf32>
    %c16_133 = arith.constant 16 : index
    %c128_134 = arith.constant 128 : index
    %428 = vector.load %arg9[%c16_133, %c128_134] : memref<64x256xf32, #tpu.memory_space<vmem>>, vector<8x128xf32>
    %cst_135 = arith.constant dense<0.000000e+00> : vector<8x128xf32>
    %429 = tpu.matmul %427, %329, %cst_135 {dimension_numbers = #tpu.dot_dimension_numbers<[1], [0], [0], [1], [0, 0, 1, 1], [], []>} : vector<8x32xf32>, vector<32x128xf32>, vector<8x128xf32> -> vector<8x128xf32>
    %430 = arith.addf %428, %429 : vector<8x128xf32>
    %431 = arith.negf %430 : vector<8x128xf32>
    %432 = math.exp %431 : vector<8x128xf32>
    %cst_136 = arith.constant 1.000000e+00 : f32
    %433 = vector.broadcast %cst_136 : f32 to vector<8x128xf32>
    %434 = arith.addf %433, %432 : vector<8x128xf32>
    %435 = arith.divf %433, %434 : vector<8x128xf32>
    %436 = math.tanh %430 : vector<8x128xf32>
    %437 = vector.extract_strided_slice %435 {offsets = [0, 0], sizes = [8, 32], strides = [1, 1]} : vector<8x128xf32> to vector<8x32xf32>
    %438 = vector.extract_strided_slice %435 {offsets = [0, 96], sizes = [8, 32], strides = [1, 1]} : vector<8x128xf32> to vector<8x32xf32>
    %439 = vector.extract_strided_slice %436 {offsets = [0, 64], sizes = [8, 32], strides = [1, 1]} : vector<8x128xf32> to vector<8x32xf32>
    %440 = vector.extract_strided_slice %435 {offsets = [0, 32], sizes = [8, 32], strides = [1, 1]} : vector<8x128xf32> to vector<8x32xf32>
    %441 = arith.mulf %440, %425 : vector<8x32xf32>
    %442 = arith.mulf %437, %439 : vector<8x32xf32>
    %443 = arith.addf %441, %442 : vector<8x32xf32>
    %444 = math.tanh %443 : vector<8x32xf32>
    %445 = arith.mulf %438, %444 : vector<8x32xf32>
    %c8_137 = arith.constant 8 : index
    %c128_138 = arith.constant 128 : index
    %446 = vector.load %arg9[%c8_137, %c128_138] : memref<64x256xf32, #tpu.memory_space<vmem>>, vector<8x128xf32>
    %cst_139 = arith.constant dense<0.000000e+00> : vector<8x128xf32>
    %447 = tpu.matmul %445, %329, %cst_139 {dimension_numbers = #tpu.dot_dimension_numbers<[1], [0], [0], [1], [0, 0, 1, 1], [], []>} : vector<8x32xf32>, vector<32x128xf32>, vector<8x128xf32> -> vector<8x128xf32>
    %448 = arith.addf %446, %447 : vector<8x128xf32>
    %449 = arith.negf %448 : vector<8x128xf32>
    %450 = math.exp %449 : vector<8x128xf32>
    %cst_140 = arith.constant 1.000000e+00 : f32
    %451 = vector.broadcast %cst_140 : f32 to vector<8x128xf32>
    %452 = arith.addf %451, %450 : vector<8x128xf32>
    %453 = arith.divf %451, %452 : vector<8x128xf32>
    %454 = math.tanh %448 : vector<8x128xf32>
    %455 = vector.extract_strided_slice %453 {offsets = [0, 0], sizes = [8, 32], strides = [1, 1]} : vector<8x128xf32> to vector<8x32xf32>
    %456 = vector.extract_strided_slice %453 {offsets = [0, 96], sizes = [8, 32], strides = [1, 1]} : vector<8x128xf32> to vector<8x32xf32>
    %457 = vector.extract_strided_slice %454 {offsets = [0, 64], sizes = [8, 32], strides = [1, 1]} : vector<8x128xf32> to vector<8x32xf32>
    %458 = vector.extract_strided_slice %453 {offsets = [0, 32], sizes = [8, 32], strides = [1, 1]} : vector<8x128xf32> to vector<8x32xf32>
    %459 = arith.mulf %458, %443 : vector<8x32xf32>
    %460 = arith.mulf %455, %457 : vector<8x32xf32>
    %461 = arith.addf %459, %460 : vector<8x32xf32>
    %462 = math.tanh %461 : vector<8x32xf32>
    %463 = arith.mulf %456, %462 : vector<8x32xf32>
    %c0_141 = arith.constant 0 : index
    %c128_142 = arith.constant 128 : index
    %464 = vector.load %arg9[%c0_141, %c128_142] : memref<64x256xf32, #tpu.memory_space<vmem>>, vector<8x128xf32>
    %cst_143 = arith.constant dense<0.000000e+00> : vector<8x128xf32>
    %465 = tpu.matmul %463, %329, %cst_143 {dimension_numbers = #tpu.dot_dimension_numbers<[1], [0], [0], [1], [0, 0, 1, 1], [], []>} : vector<8x32xf32>, vector<32x128xf32>, vector<8x128xf32> -> vector<8x128xf32>
    %466 = arith.addf %464, %465 : vector<8x128xf32>
    %467 = arith.negf %466 : vector<8x128xf32>
    %468 = math.exp %467 : vector<8x128xf32>
    %cst_144 = arith.constant 1.000000e+00 : f32
    %469 = vector.broadcast %cst_144 : f32 to vector<8x128xf32>
    %470 = arith.addf %469, %468 : vector<8x128xf32>
    %471 = arith.divf %469, %470 : vector<8x128xf32>
    %472 = math.tanh %466 : vector<8x128xf32>
    %473 = vector.extract_strided_slice %471 {offsets = [0, 0], sizes = [8, 32], strides = [1, 1]} : vector<8x128xf32> to vector<8x32xf32>
    %474 = vector.extract_strided_slice %471 {offsets = [0, 96], sizes = [8, 32], strides = [1, 1]} : vector<8x128xf32> to vector<8x32xf32>
    %475 = vector.extract_strided_slice %472 {offsets = [0, 64], sizes = [8, 32], strides = [1, 1]} : vector<8x128xf32> to vector<8x32xf32>
    %476 = vector.extract_strided_slice %471 {offsets = [0, 32], sizes = [8, 32], strides = [1, 1]} : vector<8x128xf32> to vector<8x32xf32>
    %477 = arith.mulf %476, %461 : vector<8x32xf32>
    %478 = arith.mulf %473, %475 : vector<8x32xf32>
    %479 = arith.addf %477, %478 : vector<8x32xf32>
    %480 = math.tanh %479 : vector<8x32xf32>
    %481 = arith.mulf %474, %480 : vector<8x32xf32>
    %482 = arith.maximumf %342, %481 : vector<8x32xf32>
    %c0_145 = arith.constant 0 : index
    %c0_146 = arith.constant 0 : index
    %483 = vector.load %arg8[%c0_145, %c0_146] : memref<8x32xf32, #tpu.memory_space<vmem>>, vector<8x32xf32>
    tpu.vector_store %arg8[%c0_145, %c0_146], %482 {strides = array<i32>} : memref<8x32xf32, #tpu.memory_space<vmem>>, vector<8x32xf32>,
    return
  }
  func.func @transform_0(%arg0: i32) -> (i32, i32) {
    %c0_i32 = arith.constant 0 : i32
    %c0_i32_0 = arith.constant 0 : i32
    %c0_i32_1 = arith.constant 0 : i32
    return %c0_i32, %c0_i32_0 : i32, i32
  }
  func.func @transform_1(%arg0: i32) -> (i32, i32) {
    %c0_i32 = arith.constant 0 : i32
    %c0_i32_0 = arith.constant 0 : i32
    %c0_i32_1 = arith.constant 0 : i32
    return %c0_i32, %c0_i32_0 : i32, i32
  }
  func.func @transform_2(%arg0: i32) -> (i32, i32) {
    %c0_i32 = arith.constant 0 : i32
    %c0_i32_0 = arith.constant 0 : i32
    %c0_i32_1 = arith.constant 0 : i32
    return %c0_i32, %c0_i32_0 : i32, i32
  }
  func.func @transform_3(%arg0: i32) -> (i32, i32) {
    %c0_i32 = arith.constant 0 : i32
    %c0_i32_0 = arith.constant 0 : i32
    %c0_i32_1 = arith.constant 0 : i32
    return %c0_i32, %c0_i32_0 : i32, i32
  }
  func.func @transform_4(%arg0: i32) -> (i32, i32) {
    %c0_i32 = arith.constant 0 : i32
    %c0_i32_0 = arith.constant 0 : i32
    %c0_i32_1 = arith.constant 0 : i32
    return %c0_i32, %c0_i32_0 : i32, i32
  }
  func.func @transform_5(%arg0: i32) -> (i32, i32) {
    %c0_i32 = arith.constant 0 : i32
    %c0_i32_0 = arith.constant 0 : i32
    %c0_i32_1 = arith.constant 0 : i32
    return %c0_i32, %c0_i32_0 : i32, i32
  }
  func.func @transform_6(%arg0: i32) -> (i32, i32) {
    %c0_i32 = arith.constant 0 : i32
    %c0_i32_0 = arith.constant 0 : i32
    %c0_i32_1 = arith.constant 0 : i32
    return %c0_i32, %c0_i32_0 : i32, i32
  }
  func.func @transform_7(%arg0: i32) -> (i32, i32) {
    %c0_i32 = arith.constant 0 : i32
    %c0_i32_0 = arith.constant 0 : i32
    %c0_i32_1 = arith.constant 0 : i32
    return %c0_i32, %c0_i32_0 : i32, i32
  }
}

</mosaic_0001>

<llo_original>
// kernel: graphsage_pallas.1
$region0: #{graphsage_pallas.1}
  #allocation0 [shape = 'u32[]', space=smem, size = 0x4, offset = 0x4, fixed_abs, tag = 'smem constant byte address 0x4 - core index']
  #allocation1 [shape = 'u32[144,128]{1,0:T(1,128)}', space=vmem, size = 0x12000, scoped, tag = 'internal scratch']
  #allocation2 [shape = 'f32[64,256]{1,0:T(8,128)}', space=vmem, size = 0x10000, scoped, tag = 'scratch operand']
  #allocation3 [shape = 'f32[64,64]{1,0:T(8,128)}', space=vmem, size = 0x8000, scoped, tag = 'scratch operand']
  %s0 = inlined_call_operand.vmem [shape: f32[64,32], index: 0, kind: input, shape index: {}]
  %s1 = inlined_call_operand.hbm [shape: f32[32,256], index: 1, kind: input, shape index: {}]
  %s2 = inlined_call_operand.hbm [shape: f32[64,256], index: 2, kind: input, shape index: {}]
  %s3 = inlined_call_operand.vmem [shape: f32[1,256], index: 3, kind: input, shape index: {}]
  %s4 = inlined_call_operand.vmem [shape: f32[64,256], index: 4, kind: input, shape index: {}]
  %s5 = inlined_call_operand.hbm [shape: f32[64,256], index: 5, kind: input, shape index: {}]
  %s6 = inlined_call_operand.vmem [shape: f32[1,256], index: 6, kind: input, shape index: {}]
  %s7 = inlined_call_operand.vmem [shape: f32[8,32], index: 7, kind: output, shape index: {}]
  %s8 = sld [smem:[#allocation0]]
  $region50: #{graphsage_pallas.1} parent=0
    _
  %s10 = ssub.s32 1, %s8
  %s11 = scalar_select 0, %s10, %s8
  $region1: #{graphsage_pallas.1} parent=0
    #allocation4 [shape = 'u8[32768]{0}', space=vmem, size = 0x8000, scoped, tag = 'input window, operand 1, single buffered']
    #allocation5 [shape = 's32[1]{0}', space=sflag, size = 0x4, scoped, tag = 'scoped memory for graphsage_pallas.1']
    #allocation6 [shape = 'u8[65536]{0}', space=vmem, size = 0x10000, scoped, tag = 'input window, operand 2, single buffered']
    #allocation7 [shape = 's32[1]{0}', space=sflag, size = 0x4, scoped, tag = 'scoped memory for graphsage_pallas.1']
    #allocation8 [shape = 'u8[65536]{0}', space=vmem, size = 0x10000, scoped, tag = 'input window, operand 5, single buffered']
    %12 = vsyncpa [#allocation5], 0
    %13 = vsyncpa [#allocation7], 0
    // Predicated region
    $region2: #{graphsage_pallas.1} parent=1 // pred_check
      _
    $region3: #{graphsage_pallas.1} parent=1 // pred_check_branch
      %15 = sbr.rel (0) target = $region5
    $region4: #{graphsage_pallas.1} parent=1 // pred_region
      _
    $region5: #{graphsage_pallas.1} parent=1 // pred_fallthru
      _
    // Predicated region
    $region6: #{graphsage_pallas.1} parent=1 // pred_check
      _
    $region7: #{graphsage_pallas.1} parent=1 // pred_check_branch
      %17 = sbr.rel (0) target = $region9
    $region8: #{graphsage_pallas.1} parent=1 // pred_region
      %s19 = ssub.s32 1024, 1024
      %20 = vsyncadd [#allocation5], %s19
      %s21 = sshll.u32 [#allocation4], 4
      %s22 = int_to_ptr.vmem [resolvable:$true] %s21
      %27 = dma.hbm_to_vmem [thread:$0]  %s1, 1024, %s22, [#allocation5], 256, 256, 16
    $region9: #{graphsage_pallas.1} parent=1 // pred_fallthru
      _
    // Predicated region
    $region10: #{graphsage_pallas.1} parent=1 // pred_check
      _
    $region11: #{graphsage_pallas.1} parent=1 // pred_check_branch
      %29 = sbr.rel (0) target = $region13
    $region12: #{graphsage_pallas.1} parent=1 // pred_region
      %s31 = ssub.s32 2048, 2048
      %32 = vsyncadd [#allocation7], %s31
      %s33 = sshll.u32 [#allocation6], 4
      %s34 = int_to_ptr.vmem [resolvable:$true] %s33
      %39 = dma.hbm_to_vmem [thread:$0]  %s2, 2048, %s34, [#allocation7], 256, 256, 16
    $region13: #{graphsage_pallas.1} parent=1 // pred_fallthru
      _
    // Predicated region
    $region14: #{graphsage_pallas.1} parent=1 // pred_check
      _
    $region15: #{graphsage_pallas.1} parent=1 // pred_check_branch
      %41 = sbr.rel (0) target = $region17
    $region16: #{graphsage_pallas.1} parent=1 // pred_region
      _
    $region17: #{graphsage_pallas.1} parent=1 // pred_fallthru
      _
    // Predicated region
    $region18: #{graphsage_pallas.1} parent=1 // pred_check
      _
    $region19: #{graphsage_pallas.1} parent=1 // pred_check_branch
      %43 = sbr.rel (0) target = $region21
    $region20: #{graphsage_pallas.1} parent=1 // pred_region
      _
    $region21: #{graphsage_pallas.1} parent=1 // pred_fallthru
      _
    // Predicated region
    $region22: #{graphsage_pallas.1} parent=1 // pred_check
      _
    $region23: #{graphsage_pallas.1} parent=1 // pred_check_branch
      %45 = sbr.rel (0) target = $region25
    $region24: #{graphsage_pallas.1} parent=1 // pred_region
      %s47 = ssub.s32 2048, 2048
      %48 = vsyncadd [#allocation7], %s47
      %s49 = sshll.u32 [#allocation8], 4
      %s50 = int_to_ptr.vmem [resolvable:$true] %s49
      %55 = dma.hbm_to_vmem [thread:$0]  %s5, 2048, %s50, [#allocation7], 256, 256, 16
    $region25: #{graphsage_pallas.1} parent=1 // pred_fallthru
      _
    // Predicated region
    $region26: #{graphsage_pallas.1} parent=1 // pred_check
      _
    $region27: #{graphsage_pallas.1} parent=1 // pred_check_branch
      %57 = sbr.rel (0) target = $region29
    $region28: #{graphsage_pallas.1} parent=1 // pred_region
      _
    $region29: #{graphsage_pallas.1} parent=1 // pred_fallthru
      _
    // Predicated region
    $region30: #{graphsage_pallas.1} parent=1 // pred_check
      _
    $region31: #{graphsage_pallas.1} parent=1 // pred_check_branch
      %59 = sbr.rel (0) target = $region33
    $region32: #{graphsage_pallas.1} parent=1 // pred_region
      %60 = dma.done [#allocation5], 1024
    $region33: #{graphsage_pallas.1} parent=1 // pred_fallthru
      _
    // Predicated region
    $region34: #{graphsage_pallas.1} parent=1 // pred_check
      _
    $region35: #{graphsage_pallas.1} parent=1 // pred_check_branch
      %62 = sbr.rel (0) target = $region37
    $region36: #{graphsage_pallas.1} parent=1 // pred_region
      %63 = dma.done [#allocation7], 2048
    $region37: #{graphsage_pallas.1} parent=1 // pred_fallthru
      _
    // Predicated region
    $region38: #{graphsage_pallas.1} parent=1 // pred_check
      _
    $region39: #{graphsage_pallas.1} parent=1 // pred_check_branch
      %65 = sbr.rel (0) target = $region41
    $region40: #{graphsage_pallas.1} parent=1 // pred_region
      %66 = dma.done [#allocation7], 2048
    $region41: #{graphsage_pallas.1} parent=1 // pred_fallthru
      _
    %v67 = vld [vmem:[%s0] sm:$0xff]
    %v68 = vld [vmem:[%s0 + $0x8] sm:$0xff]
    %v69 = vld [vmem:[%s0 + $0x10] sm:$0xff]
    %v70 = vld [vmem:[%s0 + $0x18] sm:$0xff]
    %v71 = vld [vmem:[%s0 + $0x20] sm:$0xff]
    %v72 = vld [vmem:[%s0 + $0x28] sm:$0xff]
    %v73 = vld [vmem:[%s0 + $0x30] sm:$0xff]
    %v74 = vld [vmem:[%s0 + $0x38] sm:$0xff]
    %v75 = vld [vmem:[#allocation4] sm:$0xff]
    %v76 = vld [vmem:[#allocation4 + $0x8] sm:$0xff]
    %v77 = vld [vmem:[#allocation4 + $0x10] sm:$0xff]
    %v78 = vld [vmem:[#allocation4 + $0x18] sm:$0xff]
    %v79 = vld [vmem:[#allocation4 + $0x20] sm:$0xff]
    %v80 = vld [vmem:[#allocation4 + $0x28] sm:$0xff]
    %v81 = vld [vmem:[#allocation4 + $0x30] sm:$0xff]
    %v82 = vld [vmem:[#allocation4 + $0x38] sm:$0xff]
    %v83 = vld [vmem:[%s3] sm:$0x3]
    %v85 = vlaneseq
    %v86 = vshrl.u32 %v85, 7
    %v87 = vsub.s32 0, %v86
    %v88 = vrot.slane %v83, %v87
    %v89 = vlaneseq
    %v90 = vshrl.u32 %v89, 7
    %v91 = vsub.s32 1, %v90
    %v92 = vrot.slane %v83, %v91
    %vm95 = vcmask 261120
    %v97 = vsel %vm95, %v67, 0
    %v100 = vsel %vm95, %v68, 0
    %v103 = vsel %vm95, %v69, 0
    %v106 = vsel %vm95, %v70, 0
    %v109 = vsel %vm95, %v71, 0
    %v112 = vsel %vm95, %v72, 0
    %v115 = vsel %vm95, %v73, 0
    %v118 = vsel %vm95, %v74, 0
    %120 = vmatprep.subr.mxu0 %v76
    %121 = vmatpush1.msra.mxu0 %v75
    %122 = vmatprep.subr.mxu0 %v78
    %123 = vmatpush1.msra.mxu0 %v77
    %124 = vmatprep.subr.mxu0 %v80
    %125 = vmatpush1.msra.mxu0 %v79
    %126 = vmatprep.subr.mxu0 %v82
    %127 = vmatpush1.msra.mxu0 %v81
    %128 = vmatprep.subr.mxu0 0.0
    %129 = vmatpush1.msra.mxu0 0.0
    %130 = vmatprep.subr.mxu0 0.0
    %131 = vmatpush1.msra.mxu0 0.0
    %132 = vmatprep.subr.mxu0 0.0
    %133 = vmatpush1.msra.mxu0 0.0
    %134 = vmatprep.subr.mxu0 0.0
    %135 = vmatpush1.msra.mxu0 0.0
    %136 = vmatprep.subr.mxu0 0.0
    %137 = vmatpush1.msra.mxu0 0.0
    %138 = vmatprep.subr.mxu0 0.0
    %139 = vmatpush1.msra.mxu0 0.0
    %140 = vmatprep.subr.mxu0 0.0
    %141 = vmatpush1.msra.mxu0 0.0
    %142 = vmatprep.subr.mxu0 0.0
    %143 = vmatpush1.msra.mxu0 0.0
    %144 = vmatprep.subr.mxu0 0.0
    %145 = vmatpush1.msra.mxu0 0.0
    %146 = vmatprep.subr.mxu0 0.0
    %147 = vmatpush1.msra.mxu0 0.0
    %148 = vmatprep.subr.mxu0 0.0
    %149 = vmatpush1.msra.mxu0 0.0
    %150 = vmatprep.subr.mxu0 0.0
    %151 = vmatpush1.msra.mxu0 0.0
    %152 = vmatprep.subr.mxu0 0.0
    %153 = vmatpush1.msra.mxu0 0.0
    %154 = vmatprep.subr.mxu0 0.0
    %155 = vmatpush1.msra.mxu0 0.0
    %156 = vmatprep.subr.mxu0 0.0
    %157 = vmatpush1.msra.mxu0 0.0
    %158 = vmatprep.subr.mxu0 0.0
    %159 = vmatpush1.msra.mxu0 0.0
    %160 = vmatprep.subr.mxu0 0.0
    %161 = vmatpush1.msra.mxu0 0.0
    %162 = vmatprep.subr.mxu0 0.0
    %163 = vmatpush1.msra.mxu0 0.0
    %164 = vmatprep.subr.mxu0 0.0
    %165 = vmatpush1.msra.mxu0 0.0
    %166 = vmatprep.subr.mxu0 0.0
    %167 = vmatpush1.msra.mxu0 0.0
    %168 = vmatprep.subr.mxu0 0.0
    %169 = vmatpush1.msra.mxu0 0.0
    %170 = vmatprep.subr.mxu0 0.0
    %171 = vmatpush1.msra.mxu0 0.0
    %172 = vmatprep.subr.mxu0 0.0
    %173 = vmatpush1.msra.mxu0 0.0
    %174 = vmatprep.subr.mxu0 0.0
    %175 = vmatpush1.msra.mxu0 0.0
    %176 = vmatprep.subr.mxu0 0.0
    %177 = vmatpush1.msra.mxu0 0.0
    %178 = vmatprep.subr.mxu0 0.0
    %179 = vmatpush1.msra.mxu0 0.0
    %180 = vmatprep.subr.mxu0 0.0
    %181 = vmatpush1.msra.mxu0 0.0
    %182 = vmatprep.subr.mxu0 0.0
    %183 = vmatpush1.msra.mxu0 0.0
    %184 = vmatprep.mubr.f32.mxu0 0.0
    %185 = vmatmul.mubr.f32.gmra.mrb[0].mxu0 %v97
    %v186 = vpop.f32.mrb[0].mxu0
    %v187 = vadd.f32 %v88, %v186
    %v188 = vpop.f32.mrb[0].mxu0
    %v189 = vadd.f32 %v92, %v188
    %190 = vmatprep.mubr.f32.mxu0 0.0
    %191 = vmatmul.mubr.f32.gmra.mrb[0].mxu0 %v100
    %v192 = vpop.f32.mrb[0].mxu0
    %v193 = vadd.f32 %v88, %v192
    %v194 = vpop.f32.mrb[0].mxu0
    %v195 = vadd.f32 %v92, %v194
    %196 = vmatprep.mubr.f32.mxu0 0.0
    %197 = vmatmul.mubr.f32.gmra.mrb[0].mxu0 %v103
    %v198 = vpop.f32.mrb[0].mxu0
    %v199 = vadd.f32 %v88, %v198
    %v200 = vpop.f32.mrb[0].mxu0
    %v201 = vadd.f32 %v92, %v200
    %202 = vmatprep.mubr.f32.mxu0 0.0
    %203 = vmatmul.mubr.f32.gmra.mrb[0].mxu0 %v106
    %v204 = vpop.f32.mrb[0].mxu0
    %v205 = vadd.f32 %v88, %v204
    %v206 = vpop.f32.mrb[0].mxu0
    %v207 = vadd.f32 %v92, %v206
    %208 = vmatprep.mubr.f32.mxu0 0.0
    %209 = vmatmul.mubr.f32.gmra.mrb[0].mxu0 %v109
    %v210 = vpop.f32.mrb[0].mxu0
    %v211 = vadd.f32 %v88, %v210
    %v212 = vpop.f32.mrb[0].mxu0
    %v213 = vadd.f32 %v92, %v212
    %214 = vmatprep.mubr.f32.mxu0 0.0
    %215 = vmatmul.mubr.f32.gmra.mrb[0].mxu0 %v112
    %v216 = vpop.f32.mrb[0].mxu0
    %v217 = vadd.f32 %v88, %v216
    %v218 = vpop.f32.mrb[0].mxu0
    %v219 = vadd.f32 %v92, %v218
    %220 = vmatprep.mubr.f32.mxu0 0.0
    %221 = vmatmul.mubr.f32.gmra.mrb[0].mxu0 %v115
    %v222 = vpop.f32.mrb[0].mxu0
    %v223 = vadd.f32 %v88, %v222
    %v224 = vpop.f32.mrb[0].mxu0
    %v225 = vadd.f32 %v92, %v224
    %226 = vmatprep.mubr.f32.mxu0 0.0
    %227 = vmatmul.mubr.f32.gmra.mrb[0].mxu0 %v118
    %v228 = vpop.f32.mrb[0].mxu0
    %v229 = vadd.f32 %v88, %v228
    %v230 = vpop.f32.mrb[0].mxu0
    %v231 = vadd.f32 %v92, %v230
    %232 = vdwg.mxu0
    %233 = vst [vmem:[#allocation2] sm:$0xff] %v187
    %234 = vst [vmem:[#allocation2 + $0x8] sm:$0xff] %v189
    %235 = vst [vmem:[#allocation2 + $0x10] sm:$0xff] %v193
    %236 = vst [vmem:[#allocation2 + $0x18] sm:$0xff] %v195
    %237 = vst [vmem:[#allocation2 + $0x20] sm:$0xff] %v199
    %238 = vst [vmem:[#allocation2 + $0x28] sm:$0xff] %v201
    %239 = vst [vmem:[#allocation2 + $0x30] sm:$0xff] %v205
    %240 = vst [vmem:[#allocation2 + $0x38] sm:$0xff] %v207
    %241 = vst [vmem:[#allocation2 + $0x40] sm:$0xff] %v211
    %242 = vst [vmem:[#allocation2 + $0x48] sm:$0xff] %v213
    %243 = vst [vmem:[#allocation2 + $0x50] sm:$0xff] %v217
    %244 = vst [vmem:[#allocation2 + $0x58] sm:$0xff] %v219
    %245 = vst [vmem:[#allocation2 + $0x60] sm:$0xff] %v223
    %246 = vst [vmem:[#allocation2 + $0x68] sm:$0xff] %v225
    %247 = vst [vmem:[#allocation2 + $0x70] sm:$0xff] %v229
    %248 = vst [vmem:[#allocation2 + $0x78] sm:$0xff] %v231
    %v249 = vld [vmem:[#allocation2] sm:$0xff]
    %v250 = vld [vmem:[#allocation2 + $0x78] sm:$0xff]
    %v251 = vxor.u32 %v249, 2147483648
    %v252 = vmul.f32 %v251, 1.442695
    %v253 = vpow.pop %v252
    %v254 = vadd.f32 %v253, 1.0
    %v255 = vrcp.pop %v254
    %v256 = vmul.f32 1.0, %v255
    %v257 = vtanh.pop %v249
    %259 = vrot.lane.b32.xlu0 %v257, 64
    %v260 = vpop.permute.xlu0 %259
    %v262 = vmul.f32 %v256, %v260
    %v263 = vtanh.pop %v262
    %265 = vrot.lane.b32.xlu0 %v263, 96
    %v266 = vpop.permute.xlu0 %265
    %v268 = vmul.f32 %v256, %v266
    %v269 = vxor.u32 %v250, 2147483648
    %v270 = vmul.f32 %v269, 1.442695
    %v271 = vpow.pop %v270
    %v272 = vadd.f32 %v271, 1.0
    %v273 = vrcp.pop %v272
    %v274 = vmul.f32 1.0, %v273
    %v275 = vtanh.pop %v250
    %277 = vrot.lane.b32.xlu0 %v275, 64
    %v278 = vpop.permute.xlu0 %277
    %v280 = vmul.f32 %v274, %v278
    %v281 = vtanh.pop %v280
    %283 = vrot.lane.b32.xlu0 %v281, 96
    %v284 = vpop.permute.xlu0 %283
    %v286 = vmul.f32 %v274, %v284
    %288 = vrot.lane.b32.xlu0 %v268, 32
    %v289 = vpop.permute.xlu0 %288
    %291 = vst.msk [vmem:[#allocation3] sm:$0xff] %vm95, %v289
    %293 = vrot.lane.b32.xlu0 %v286, 64
    %v294 = vpop.permute.xlu0 %293
    %vm296 = vcmask 523520
    %297 = vst.msk [vmem:[#allocation3 + $0x38] sm:$0xff] %vm296, %v294
    %v298 = vld [vmem:[#allocation2 + $0x10] sm:$0xff]
    %v299 = vld [vmem:[#allocation2 + $0x68] sm:$0xff]
    %v300 = vsel %vm95, %v289, %v294
    %v301 = vld [vmem:[#allocation6] sm:$0xff]
    %v302 = vld [vmem:[#allocation6 + $0x8] sm:$0xff]
    %v303 = vld [vmem:[#allocation6 + $0x10] sm:$0xff]
    %v304 = vld [vmem:[#allocation6 + $0x18] sm:$0xff]
    %v305 = vld [vmem:[#allocation6 + $0x20] sm:$0xff]
    %v306 = vld [vmem:[#allocation6 + $0x28] sm:$0xff]
    %v307 = vld [vmem:[#allocation6 + $0x30] sm:$0xff]
    %v308 = vld [vmem:[#allocation6 + $0x38] sm:$0xff]
    %v309 = vld [vmem:[#allocation6 + $0x40] sm:$0xff]
    %v310 = vld [vmem:[#allocation6 + $0x48] sm:$0xff]
    %v311 = vld [vmem:[#allocation6 + $0x50] sm:$0xff]
    %v312 = vld [vmem:[#allocation6 + $0x58] sm:$0xff]
    %v313 = vld [vmem:[#allocation6 + $0x60] sm:$0xff]
    %v314 = vld [vmem:[#allocation6 + $0x68] sm:$0xff]
    %v315 = vld [vmem:[#allocation6 + $0x70] sm:$0xff]
    %v316 = vld [vmem:[#allocation6 + $0x78] sm:$0xff]
    %vm317 = vcmask 523264
    %v319 = vsel %vm317, %v300, 0
    %321 = vmatprep.subr.mxu0 %v302
    %322 = vmatpush1.msra.mxu0 %v301
    %323 = vmatprep.subr.mxu0 %v304
    %324 = vmatpush1.msra.mxu0 %v303
    %325 = vmatprep.subr.mxu0 %v306
    %326 = vmatpush1.msra.mxu0 %v305
    %327 = vmatprep.subr.mxu0 %v308
    %328 = vmatpush1.msra.mxu0 %v307
    %329 = vmatprep.subr.mxu0 %v310
    %330 = vmatpush1.msra.mxu0 %v309
    %331 = vmatprep.subr.mxu0 %v312
    %332 = vmatpush1.msra.mxu0 %v311
    %333 = vmatprep.subr.mxu0 %v314
    %334 = vmatpush1.msra.mxu0 %v313
    %335 = vmatprep.subr.mxu0 %v316
    %336 = vmatpush1.msra.mxu0 %v315
    %337 = vmatprep.subr.mxu0 0.0
    %338 = vmatpush1.msra.mxu0 0.0
    %339 = vmatprep.subr.mxu0 0.0
    %340 = vmatpush1.msra.mxu0 0.0
    %341 = vmatprep.subr.mxu0 0.0
    %342 = vmatpush1.msra.mxu0 0.0
    %343 = vmatprep.subr.mxu0 0.0
    %344 = vmatpush1.msra.mxu0 0.0
    %345 = vmatprep.subr.mxu0 0.0
    %346 = vmatpush1.msra.mxu0 0.0
    %347 = vmatprep.subr.mxu0 0.0
    %348 = vmatpush1.msra.mxu0 0.0
    %349 = vmatprep.subr.mxu0 0.0
    %350 = vmatpush1.msra.mxu0 0.0
    %351 = vmatprep.subr.mxu0 0.0
    %352 = vmatpush1.msra.mxu0 0.0
    %353 = vmatprep.subr.mxu0 0.0
    %354 = vmatpush1.msra.mxu0 0.0
    %355 = vmatprep.subr.mxu0 0.0
    %356 = vmatpush1.msra.mxu0 0.0
    %357 = vmatprep.subr.mxu0 0.0
    %358 = vmatpush1.msra.mxu0 0.0
    %359 = vmatprep.subr.mxu0 0.0
    %360 = vmatpush1.msra.mxu0 0.0
    %361 = vmatprep.subr.mxu0 0.0
    %362 = vmatpush1.msra.mxu0 0.0
    %363 = vmatprep.subr.mxu0 0.0
    %364 = vmatpush1.msra.mxu0 0.0
    %365 = vmatprep.subr.mxu0 0.0
    %366 = vmatpush1.msra.mxu0 0.0
    %367 = vmatprep.subr.mxu0 0.0
    %368 = vmatpush1.msra.mxu0 0.0
    %369 = vmatprep.subr.mxu0 0.0
    %370 = vmatpush1.msra.mxu0 0.0
    %371 = vmatprep.subr.mxu0 0.0
    %372 = vmatpush1.msra.mxu0 0.0
    %373 = vmatprep.subr.mxu0 0.0
    %374 = vmatpush1.msra.mxu0 0.0
    %375 = vmatprep.subr.mxu0 0.0
    %376 = vmatpush1.msra.mxu0 0.0
    %377 = vmatprep.subr.mxu0 0.0
    %378 = vmatpush1.msra.mxu0 0.0
    %379 = vmatprep.subr.mxu0 0.0
    %380 = vmatpush1.msra.mxu0 0.0
    %381 = vmatprep.subr.mxu0 0.0
    %382 = vmatpush1.msra.mxu0 0.0
    %383 = vmatprep.subr.mxu0 0.0
    %384 = vmatpush1.msra.mxu0 0.0
    %385 = vmatprep.mubr.f32.mxu0 0.0
    %386 = vmatmul.mubr.f32.gmra.mrb[0].mxu0 %v319
    %v387 = vpop.f32.mrb[0].mxu0
    %v388 = vadd.f32 0.0, %v387
    %v389 = vpop.f32.mrb[0].mxu0
    %v390 = vadd.f32 0.0, %v389
    %391 = vdwg.mxu0
    %v392 = vadd.f32 %v298, %v388
    %v393 = vadd.f32 %v299, %v390
    %v394 = vxor.u32 %v392, 2147483648
    %v395 = vmul.f32 %v394, 1.442695
    %v396 = vpow.pop %v395
    %v397 = vadd.f32 %v396, 1.0
    %v398 = vrcp.pop %v397
    %v399 = vmul.f32 1.0, %v398
    %v400 = vtanh.pop %v392
    %402 = vrot.lane.b32.xlu0 %v262, 32
    %v403 = vpop.permute.xlu0 %402
    %v405 = vmul.f32 %v399, %v403
    %407 = vrot.lane.b32.xlu0 %v400, 64
    %v408 = vpop.permute.xlu0 %407
    %v410 = vmul.f32 %v399, %v408
    %412 = vrot.lane.b32.xlu0 %v410, 32
    %v413 = vpop.permute.xlu0 %412
    %v415 = vadd.f32 %v405, %v413
    %v416 = vtanh.pop %v415
    %418 = vrot.lane.b32.xlu0 %v416, 64
    %v419 = vpop.permute.xlu0 %418
    %v421 = vmul.f32 %v399, %v419
    %v422 = vxor.u32 %v393, 2147483648
    %v423 = vmul.f32 %v422, 1.442695
    %v424 = vpow.pop %v423
    %v425 = vadd.f32 %v424, 1.0
    %v426 = vrcp.pop %v425
    %v427 = vmul.f32 1.0, %v426
    %v428 = vtanh.pop %v393
    %430 = vrot.lane.b32.xlu0 %v280, 32
    %v431 = vpop.permute.xlu0 %430
    %v433 = vmul.f32 %v427, %v431
    %435 = vrot.lane.b32.xlu0 %v428, 64
    %v436 = vpop.permute.xlu0 %435
    %v438 = vmul.f32 %v427, %v436
    %440 = vrot.lane.b32.xlu0 %v438, 32
    %v441 = vpop.permute.xlu0 %440
    %v443 = vadd.f32 %v433, %v441
    %v444 = vtanh.pop %v443
    %446 = vrot.lane.b32.xlu0 %v444, 64
    %v447 = vpop.permute.xlu0 %446
    %v449 = vmul.f32 %v427, %v447
    %451 = vrot.lane.b32.xlu0 %v421, 32
    %v452 = vpop.permute.xlu0 %451
    %454 = vst.msk [vmem:[#allocation3 + $0x8] sm:$0xff] %vm95, %v452
    %456 = vrot.lane.b32.xlu0 %v449, 64
    %v457 = vpop.permute.xlu0 %456
    %459 = vst.msk [vmem:[#allocation3 + $0x30] sm:$0xff] %vm296, %v457
    %v460 = vld [vmem:[#allocation2 + $0x20] sm:$0xff]
    %v461 = vld [vmem:[#allocation2 + $0x58] sm:$0xff]
    %v462 = vsel %vm95, %v452, %v457
    %v463 = vld [vmem:[#allocation6] sm:$0xff]
    %v464 = vld [vmem:[#allocation6 + $0x8] sm:$0xff]
    %v465 = vld [vmem:[#allocation6 + $0x10] sm:$0xff]
    %v466 = vld [vmem:[#allocation6 + $0x18] sm:$0xff]
    %v467 = vld [vmem:[#allocation6 + $0x20] sm:$0xff]
    %v468 = vld [vmem:[#allocation6 + $0x28] sm:$0xff]
    %v469 = vld [vmem:[#allocation6 + $0x30] sm:$0xff]
    %v470 = vld [vmem:[#allocation6 + $0x38] sm:$0xff]
    %v471 = vld [vmem:[#allocation6 + $0x40] sm:$0xff]
    %v472 = vld [vmem:[#allocation6 + $0x48] sm:$0xff]
    %v473 = vld [vmem:[#allocation6 + $0x50] sm:$0xff]
    %v474 = vld [vmem:[#allocation6 + $0x58] sm:$0xff]
    %v475 = vld [vmem:[#allocation6 + $0x60] sm:$0xff]
    %v476 = vld [vmem:[#allocation6 + $0x68] sm:$0xff]
    %v477 = vld [vmem:[#allocation6 + $0x70] sm:$0xff]
    %v478 = vld [vmem:[#allocation6 + $0x78] sm:$0xff]
    %v480 = vsel %vm317, %v462, 0
    %482 = vmatprep.subr.mxu0 %v464
    %483 = vmatpush1.msra.mxu0 %v463
    %484 = vmatprep.subr.mxu0 %v466
    %485 = vmatpush1.msra.mxu0 %v465
    %486 = vmatprep.subr.mxu0 %v468
    %487 = vmatpush1.msra.mxu0 %v467
    %488 = vmatprep.subr.mxu0 %v470
    %489 = vmatpush1.msra.mxu0 %v469
    %490 = vmatprep.subr.mxu0 %v472
    %491 = vmatpush1.msra.mxu0 %v471
    %492 = vmatprep.subr.mxu0 %v474
    %493 = vmatpush1.msra.mxu0 %v473
    %494 = vmatprep.subr.mxu0 %v476
    %495 = vmatpush1.msra.mxu0 %v475
    %496 = vmatprep.subr.mxu0 %v478
    %497 = vmatpush1.msra.mxu0 %v477
    %498 = vmatprep.subr.mxu0 0.0
    %499 = vmatpush1.msra.mxu0 0.0
    %500 = vmatprep.subr.mxu0 0.0
    %501 = vmatpush1.msra.mxu0 0.0
    %502 = vmatprep.subr.mxu0 0.0
    %503 = vmatpush1.msra.mxu0 0.0
    %504 = vmatprep.subr.mxu0 0.0
    %505 = vmatpush1.msra.mxu0 0.0
    %506 = vmatprep.subr.mxu0 0.0
    %507 = vmatpush1.msra.mxu0 0.0
    %508 = vmatprep.subr.mxu0 0.0
    %509 = vmatpush1.msra.mxu0 0.0
    %510 = vmatprep.subr.mxu0 0.0
    %511 = vmatpush1.msra.mxu0 0.0
    %512 = vmatprep.subr.mxu0 0.0
    %513 = vmatpush1.msra.mxu0 0.0
    %514 = vmatprep.subr.mxu0 0.0
    %515 = vmatpush1.msra.mxu0 0.0
    %516 = vmatprep.subr.mxu0 0.0
    %517 = vmatpush1.msra.mxu0 0.0
    %518 = vmatprep.subr.mxu0 0.0
    %519 = vmatpush1.msra.mxu0 0.0
    %520 = vmatprep.subr.mxu0 0.0
    %521 = vmatpush1.msra.mxu0 0.0
    %522 = vmatprep.subr.mxu0 0.0
    %523 = vmatpush1.msra.mxu0 0.0
    %524 = vmatprep.subr.mxu0 0.0
    %525 = vmatpush1.msra.mxu0 0.0
    %526 = vmatprep.subr.mxu0 0.0
    %527 = vmatpush1.msra.mxu0 0.0
    %528 = vmatprep.subr.mxu0 0.0
    %529 = vmatpush1.msra.mxu0 0.0
    %530 = vmatprep.subr.mxu0 0.0
    %531 = vmatpush1.msra.mxu0 0.0
    %532 = vmatprep.subr.mxu0 0.0
    %533 = vmatpush1.msra.mxu0 0.0
    %534 = vmatprep.subr.mxu0 0.0
    %535 = vmatpush1.msra.mxu0 0.0
    %536 = vmatprep.subr.mxu0 0.0
    %537 = vmatpush1.msra.mxu0 0.0
    %538 = vmatprep.subr.mxu0 0.0
    %539 = vmatpush1.msra.mxu0 0.0
    %540 = vmatprep.subr.mxu0 0.0
    %541 = vmatpush1.msra.mxu0 0.0
    %542 = vmatprep.subr.mxu0 0.0
    %543 = vmatpush1.msra.mxu0 0.0
    %544 = vmatprep.subr.mxu0 0.0
    %545 = vmatpush1.msra.mxu0 0.0
    %546 = vmatprep.mubr.f32.mxu0 0.0
    %547 = vmatmul.mubr.f32.gmra.mrb[0].mxu0 %v480
    %v548 = vpop.f32.mrb[0].mxu0
    %v549 = vadd.f32 0.0, %v548
    %v550 = vpop.f32.mrb[0].mxu0
    %v551 = vadd.f32 0.0, %v550
    %552 = vdwg.mxu0
    %v553 = vadd.f32 %v460, %v549
    %v554 = vadd.f32 %v461, %v551
    %v555 = vxor.u32 %v553, 2147483648
    %v556 = vmul.f32 %v555, 1.442695
    %v557 = vpow.pop %v556
    %v558 = vadd.f32 %v557, 1.0
    %v559 = vrcp.pop %v558
    %v560 = vmul.f32 1.0, %v559
    %v561 = vtanh.pop %v553
    %v562 = vmul.f32 %v560, %v415
    %564 = vrot.lane.b32.xlu0 %v561, 64
    %v565 = vpop.permute.xlu0 %564
    %v567 = vmul.f32 %v560, %v565
    %569 = vrot.lane.b32.xlu0 %v567, 32
    %v570 = vpop.permute.xlu0 %569
    %v572 = vadd.f32 %v562, %v570
    %v573 = vtanh.pop %v572
    %575 = vrot.lane.b32.xlu0 %v573, 64
    %v576 = vpop.permute.xlu0 %575
    %v578 = vmul.f32 %v560, %v576
    %v579 = vxor.u32 %v554, 2147483648
    %v580 = vmul.f32 %v579, 1.442695
    %v581 = vpow.pop %v580
    %v582 = vadd.f32 %v581, 1.0
    %v583 = vrcp.pop %v582
    %v584 = vmul.f32 1.0, %v583
    %v585 = vtanh.pop %v554
    %v586 = vmul.f32 %v584, %v443
    %588 = vrot.lane.b32.xlu0 %v585, 64
    %v589 = vpop.permute.xlu0 %588
    %v591 = vmul.f32 %v584, %v589
    %593 = vrot.lane.b32.xlu0 %v591, 32
    %v594 = vpop.permute.xlu0 %593
    %v596 = vadd.f32 %v586, %v594
    %v597 = vtanh.pop %v596
    %599 = vrot.lane.b32.xlu0 %v597, 64
    %v600 = vpop.permute.xlu0 %599
    %v602 = vmul.f32 %v584, %v600
    %604 = vrot.lane.b32.xlu0 %v578, 32
    %v605 = vpop.permute.xlu0 %604
    %607 = vst.msk [vmem:[#allocation3 + $0x10] sm:$0xff] %vm95, %v605
    %609 = vrot.lane.b32.xlu0 %v602, 64
    %v610 = vpop.permute.xlu0 %609
    %612 = vst.msk [vmem:[#allocation3 + $0x28] sm:$0xff] %vm296, %v610
    %v613 = vld [vmem:[#allocation2 + $0x30] sm:$0xff]
    %v614 = vld [vmem:[#allocation2 + $0x48] sm:$0xff]
    %v615 = vsel %vm95, %v605, %v610
    %v616 = vld [vmem:[#allocation6] sm:$0xff]
    %v617 = vld [vmem:[#allocation6 + $0x8] sm:$0xff]
    %v618 = vld [vmem:[#allocation6 + $0x10] sm:$0xff]
    %v619 = vld [vmem:[#allocation6 + $0x18] sm:$0xff]
    %v620 = vld [vmem:[#allocation6 + $0x20] sm:$0xff]
    %v621 = vld [vmem:[#allocation6 + $0x28] sm:$0xff]
    %v622 = vld [vmem:[#allocation6 + $0x30] sm:$0xff]
    %v623 = vld [vmem:[#allocation6 + $0x38] sm:$0xff]
    %v624 = vld [vmem:[#allocation6 + $0x40] sm:$0xff]
    %v625 = vld [vmem:[#allocation6 + $0x48] sm:$0xff]
    %v626 = vld [vmem:[#allocation6 + $0x50] sm:$0xff]
    %v627 = vld [vmem:[#allocation6 + $0x58] sm:$0xff]
    %v628 = vld [vmem:[#allocation6 + $0x60] sm:$0xff]
    %v629 = vld [vmem:[#allocation6 + $0x68] sm:$0xff]
    %v630 = vld [vmem:[#allocation6 + $0x70] sm:$0xff]
    %v631 = vld [vmem:[#allocation6 + $0x78] sm:$0xff]
    %v633 = vsel %vm317, %v615, 0
    %635 = vmatprep.subr.mxu0 %v617
    %636 = vmatpush1.msra.mxu0 %v616
    %637 = vmatprep.subr.mxu0 %v619
    %638 = vmatpush1.msra.mxu0 %v618
    %639 = vmatprep.subr.mxu0 %v621
    %640 = vmatpush1.msra.mxu0 %v620
    %641 = vmatprep.subr.mxu0 %v623
    %642 = vmatpush1.msra.mxu0 %v622
    %643 = vmatprep.subr.mxu0 %v625
    %644 = vmatpush1.msra.mxu0 %v624
    %645 = vmatprep.subr.mxu0 %v627
    %646 = vmatpush1.msra.mxu0 %v626
    %647 = vmatprep.subr.mxu0 %v629
    %648 = vmatpush1.msra.mxu0 %v628
    %649 = vmatprep.subr.mxu0 %v631
    %650 = vmatpush1.msra.mxu0 %v630
    %651 = vmatprep.subr.mxu0 0.0
    %652 = vmatpush1.msra.mxu0 0.0
    %653 = vmatprep.subr.mxu0 0.0
    %654 = vmatpush1.msra.mxu0 0.0
    %655 = vmatprep.subr.mxu0 0.0
    %656 = vmatpush1.msra.mxu0 0.0
    %657 = vmatprep.subr.mxu0 0.0
    %658 = vmatpush1.msra.mxu0 0.0
    %659 = vmatprep.subr.mxu0 0.0
    %660 = vmatpush1.msra.mxu0 0.0
    %661 = vmatprep.subr.mxu0 0.0
    %662 = vmatpush1.msra.mxu0 0.0
    %663 = vmatprep.subr.mxu0 0.0
    %664 = vmatpush1.msra.mxu0 0.0
    %665 = vmatprep.subr.mxu0 0.0
    %666 = vmatpush1.msra.mxu0 0.0
    %667 = vmatprep.subr.mxu0 0.0
    %668 = vmatpush1.msra.mxu0 0.0
    %669 = vmatprep.subr.mxu0 0.0
    %670 = vmatpush1.msra.mxu0 0.0
    %671 = vmatprep.subr.mxu0 0.0
    %672 = vmatpush1.msra.mxu0 0.0
    %673 = vmatprep.subr.mxu0 0.0
    %674 = vmatpush1.msra.mxu0 0.0
    %675 = vmatprep.subr.mxu0 0.0
    %676 = vmatpush1.msra.mxu0 0.0
    %677 = vmatprep.subr.mxu0 0.0
    %678 = vmatpush1.msra.mxu0 0.0
    %679 = vmatprep.subr.mxu0 0.0
    %680 = vmatpush1.msra.mxu0 0.0
    %681 = vmatprep.subr.mxu0 0.0
    %682 = vmatpush1.msra.mxu0 0.0
    %683 = vmatprep.subr.mxu0 0.0
    %684 = vmatpush1.msra.mxu0 0.0
    %685 = vmatprep.subr.mxu0 0.0
    %686 = vmatpush1.msra.mxu0 0.0
    %687 = vmatprep.subr.mxu0 0.0
    %688 = vmatpush1.msra.mxu0 0.0
    %689 = vmatprep.subr.mxu0 0.0
    %690 = vmatpush1.msra.mxu0 0.0
    %691 = vmatprep.subr.mxu0 0.0
    %692 = vmatpush1.msra.mxu0 0.0
    %693 = vmatprep.subr.mxu0 0.0
    %694 = vmatpush1.msra.mxu0 0.0
    %695 = vmatprep.subr.mxu0 0.0
    %696 = vmatpush1.msra.mxu0 0.0
    %697 = vmatprep.subr.mxu0 0.0
    %698 = vmatpush1.msra.mxu0 0.0
    %699 = vmatprep.mubr.f32.mxu0 0.0
    %700 = vmatmul.mubr.f32.gmra.mrb[0].mxu0 %v633
    %v701 = vpop.f32.mrb[0].mxu0
    %v702 = vadd.f32 0.0, %v701
    %v703 = vpop.f32.mrb[0].mxu0
    %v704 = vadd.f32 0.0, %v703
    %705 = vdwg.mxu0
    %v706 = vadd.f32 %v613, %v702
    %v707 = vadd.f32 %v614, %v704
    %v708 = vxor.u32 %v706, 2147483648
    %v709 = vmul.f32 %v708, 1.442695
    %v710 = vpow.pop %v709
    %v711 = vadd.f32 %v710, 1.0
    %v712 = vrcp.pop %v711
    %v713 = vmul.f32 1.0, %v712
    %v714 = vtanh.pop %v706
    %v715 = vmul.f32 %v713, %v572
    %717 = vrot.lane.b32.xlu0 %v714, 64
    %v718 = vpop.permute.xlu0 %717
    %v720 = vmul.f32 %v713, %v718
    %722 = vrot.lane.b32.xlu0 %v720, 32
    %v723 = vpop.permute.xlu0 %722
    %v725 = vadd.f32 %v715, %v723
    %v726 = vtanh.pop %v725
    %728 = vrot.lane.b32.xlu0 %v726, 64
    %v729 = vpop.permute.xlu0 %728
    %v731 = vmul.f32 %v713, %v729
    %v732 = vxor.u32 %v707, 2147483648
    %v733 = vmul.f32 %v732, 1.442695
    %v734 = vpow.pop %v733
    %v735 = vadd.f32 %v734, 1.0
    %v736 = vrcp.pop %v735
    %v737 = vmul.f32 1.0, %v736
    %v738 = vtanh.pop %v707
    %v739 = vmul.f32 %v737, %v596
    %741 = vrot.lane.b32.xlu0 %v738, 64
    %v742 = vpop.permute.xlu0 %741
    %v744 = vmul.f32 %v737, %v742
    %746 = vrot.lane.b32.xlu0 %v744, 32
    %v747 = vpop.permute.xlu0 %746
    %v749 = vadd.f32 %v739, %v747
    %v750 = vtanh.pop %v749
    %752 = vrot.lane.b32.xlu0 %v750, 64
    %v753 = vpop.permute.xlu0 %752
    %v755 = vmul.f32 %v737, %v753
    %757 = vrot.lane.b32.xlu0 %v731, 32
    %v758 = vpop.permute.xlu0 %757
    %760 = vst.msk [vmem:[#allocation3 + $0x18] sm:$0xff] %vm95, %v758
    %762 = vrot.lane.b32.xlu0 %v755, 64
    %v763 = vpop.permute.xlu0 %762
    %765 = vst.msk [vmem:[#allocation3 + $0x20] sm:$0xff] %vm296, %v763
    %v766 = vld [vmem:[#allocation2 + $0x40] sm:$0xff]
    %v767 = vld [vmem:[#allocation2 + $0x38] sm:$0xff]
    %v768 = vsel %vm95, %v758, %v763
    %v769 = vld [vmem:[#allocation6] sm:$0xff]
    %v770 = vld [vmem:[#allocation6 + $0x8] sm:$0xff]
    %v771 = vld [vmem:[#allocation6 + $0x10] sm:$0xff]
    %v772 = vld [vmem:[#allocation6 + $0x18] sm:$0xff]
    %v773 = vld [vmem:[#allocation6 + $0x20] sm:$0xff]
    %v774 = vld [vmem:[#allocation6 + $0x28] sm:$0xff]
    %v775 = vld [vmem:[#allocation6 + $0x30] sm:$0xff]
    %v776 = vld [vmem:[#allocation6 + $0x38] sm:$0xff]
    %v777 = vld [vmem:[#allocation6 + $0x40] sm:$0xff]
    %v778 = vld [vmem:[#allocation6 + $0x48] sm:$0xff]
    %v779 = vld [vmem:[#allocation6 + $0x50] sm:$0xff]
    %v780 = vld [vmem:[#allocation6 + $0x58] sm:$0xff]
    %v781 = vld [vmem:[#allocation6 + $0x60] sm:$0xff]
    %v782 = vld [vmem:[#allocation6 + $0x68] sm:$0xff]
    %v783 = vld [vmem:[#allocation6 + $0x70] sm:$0xff]
    %v784 = vld [vmem:[#allocation6 + $0x78] sm:$0xff]
    %v786 = vsel %vm317, %v768, 0
    %788 = vmatprep.subr.mxu0 %v770
    %789 = vmatpush1.msra.mxu0 %v769
    %790 = vmatprep.subr.mxu0 %v772
    %791 = vmatpush1.msra.mxu0 %v771
    %792 = vmatprep.subr.mxu0 %v774
    %793 = vmatpush1.msra.mxu0 %v773
    %794 = vmatprep.subr.mxu0 %v776
    %795 = vmatpush1.msra.mxu0 %v775
    %796 = vmatprep.subr.mxu0 %v778
    %797 = vmatpush1.msra.mxu0 %v777
    %798 = vmatprep.subr.mxu0 %v780
    %799 = vmatpush1.msra.mxu0 %v779
    %800 = vmatprep.subr.mxu0 %v782
    %801 = vmatpush1.msra.mxu0 %v781
    %802 = vmatprep.subr.mxu0 %v784
    %803 = vmatpush1.msra.mxu0 %v783
    %804 = vmatprep.subr.mxu0 0.0
    %805 = vmatpush1.msra.mxu0 0.0
    %806 = vmatprep.subr.mxu0 0.0
    %807 = vmatpush1.msra.mxu0 0.0
    %808 = vmatprep.subr.mxu0 0.0
    %809 = vmatpush1.msra.mxu0 0.0
    %810 = vmatprep.subr.mxu0 0.0
    %811 = vmatpush1.msra.mxu0 0.0
    %812 = vmatprep.subr.mxu0 0.0
    %813 = vmatpush1.msra.mxu0 0.0
    %814 = vmatprep.subr.mxu0 0.0
    %815 = vmatpush1.msra.mxu0 0.0
    %816 = vmatprep.subr.mxu0 0.0
    %817 = vmatpush1.msra.mxu0 0.0
    %818 = vmatprep.subr.mxu0 0.0
    %819 = vmatpush1.msra.mxu0 0.0
    %820 = vmatprep.subr.mxu0 0.0
    %821 = vmatpush1.msra.mxu0 0.0
    %822 = vmatprep.subr.mxu0 0.0
    %823 = vmatpush1.msra.mxu0 0.0
    %824 = vmatprep.subr.mxu0 0.0
    %825 = vmatpush1.msra.mxu0 0.0
    %826 = vmatprep.subr.mxu0 0.0
    %827 = vmatpush1.msra.mxu0 0.0
    %828 = vmatprep.subr.mxu0 0.0
    %829 = vmatpush1.msra.mxu0 0.0
    %830 = vmatprep.subr.mxu0 0.0
    %831 = vmatpush1.msra.mxu0 0.0
    %832 = vmatprep.subr.mxu0 0.0
    %833 = vmatpush1.msra.mxu0 0.0
    %834 = vmatprep.subr.mxu0 0.0
    %835 = vmatpush1.msra.mxu0 0.0
    %836 = vmatprep.subr.mxu0 0.0
    %837 = vmatpush1.msra.mxu0 0.0
    %838 = vmatprep.subr.mxu0 0.0
    %839 = vmatpush1.msra.mxu0 0.0
    %840 = vmatprep.subr.mxu0 0.0
    %841 = vmatpush1.msra.mxu0 0.0
    %842 = vmatprep.subr.mxu0 0.0
    %843 = vmatpush1.msra.mxu0 0.0
    %844 = vmatprep.subr.mxu0 0.0
    %845 = vmatpush1.msra.mxu0 0.0
    %846 = vmatprep.subr.mxu0 0.0
    %847 = vmatpush1.msra.mxu0 0.0
    %848 = vmatprep.subr.mxu0 0.0
    %849 = vmatpush1.msra.mxu0 0.0
    %850 = vmatprep.subr.mxu0 0.0
    %851 = vmatpush1.msra.mxu0 0.0
    %852 = vmatprep.mubr.f32.mxu0 0.0
    %853 = vmatmul.mubr.f32.gmra.mrb[0].mxu0 %v786
    %v854 = vpop.f32.mrb[0].mxu0
    %v855 = vadd.f32 0.0, %v854
    %v856 = vpop.f32.mrb[0].mxu0
    %v857 = vadd.f32 0.0, %v856
    %858 = vdwg.mxu0
    %v859 = vadd.f32 %v766, %v855
    %v860 = vadd.f32 %v767, %v857
    %v861 = vxor.u32 %v859, 2147483648
    %v862 = vmul.f32 %v861, 1.442695
    %v863 = vpow.pop %v862
    %v864 = vadd.f32 %v863, 1.0
    %v865 = vrcp.pop %v864
    %v866 = vmul.f32 1.0, %v865
    %v867 = vtanh.pop %v859
    %v868 = vmul.f32 %v866, %v725
    %870 = vrot.lane.b32.xlu0 %v867, 64
    %v871 = vpop.permute.xlu0 %870
    %v873 = vmul.f32 %v866, %v871
    %875 = vrot.lane.b32.xlu0 %v873, 32
    %v876 = vpop.permute.xlu0 %875
    %v878 = vadd.f32 %v868, %v876
    %v879 = vtanh.pop %v878
    %881 = vrot.lane.b32.xlu0 %v879, 64
    %v882 = vpop.permute.xlu0 %881
    %v884 = vmul.f32 %v866, %v882
    %v885 = vxor.u32 %v860, 2147483648
    %v886 = vmul.f32 %v885, 1.442695
    %v887 = vpow.pop %v886
    %v888 = vadd.f32 %v887, 1.0
    %v889 = vrcp.pop %v888
    %v890 = vmul.f32 1.0, %v889
    %v891 = vtanh.pop %v860
    %v892 = vmul.f32 %v890, %v749
    %894 = vrot.lane.b32.xlu0 %v891, 64
    %v895 = vpop.permute.xlu0 %894
    %v897 = vmul.f32 %v890, %v895
    %899 = vrot.lane.b32.xlu0 %v897, 32
    %v900 = vpop.permute.xlu0 %899
    %v902 = vadd.f32 %v892, %v900
    %v903 = vtanh.pop %v902
    %905 = vrot.lane.b32.xlu0 %v903, 64
    %v906 = vpop.permute.xlu0 %905
    %v908 = vmul.f32 %v890, %v906
    %910 = vrot.lane.b32.xlu0 %v884, 32
    %v911 = vpop.permute.xlu0 %910
    %913 = vst.msk [vmem:[#allocation3 + $0x20] sm:$0xff] %vm95, %v911
    %915 = vrot.lane.b32.xlu0 %v908, 64
    %v916 = vpop.permute.xlu0 %915
    %918 = vst.msk [vmem:[#allocation3 + $0x18] sm:$0xff] %vm296, %v916
    %v919 = vld [vmem:[#allocation2 + $0x50] sm:$0xff]
    %v920 = vld [vmem:[#allocation2 + $0x28] sm:$0xff]
    %v921 = vsel %vm95, %v911, %v916
    %v922 = vld [vmem:[#allocation6] sm:$0xff]
    %v923 = vld [vmem:[#allocation6 + $0x8] sm:$0xff]
    %v924 = vld [vmem:[#allocation6 + $0x10] sm:$0xff]
    %v925 = vld [vmem:[#allocation6 + $0x18] sm:$0xff]
    %v926 = vld [vmem:[#allocation6 + $0x20] sm:$0xff]
    %v927 = vld [vmem:[#allocation6 + $0x28] sm:$0xff]
    %v928 = vld [vmem:[#allocation6 + $0x30] sm:$0xff]
    %v929 = vld [vmem:[#allocation6 + $0x38] sm:$0xff]
    %v930 = vld [vmem:[#allocation6 + $0x40] sm:$0xff]
    %v931 = vld [vmem:[#allocation6 + $0x48] sm:$0xff]
    %v932 = vld [vmem:[#allocation6 + $0x50] sm:$0xff]
    %v933 = vld [vmem:[#allocation6 + $0x58] sm:$0xff]
    %v934 = vld [vmem:[#allocation6 + $0x60] sm:$0xff]
    %v935 = vld [vmem:[#allocation6 + $0x68] sm:$0xff]
    %v936 = vld [vmem:[#allocation6 + $0x70] sm:$0xff]
    %v937 = vld [vmem:[#allocation6 + $0x78] sm:$0xff]
    %v939 = vsel %vm317, %v921, 0
    %941 = vmatprep.subr.mxu0 %v923
    %942 = vmatpush1.msra.mxu0 %v922
    %943 = vmatprep.subr.mxu0 %v925
    %944 = vmatpush1.msra.mxu0 %v924
    %945 = vmatprep.subr.mxu0 %v927
    %946 = vmatpush1.msra.mxu0 %v926
    %947 = vmatprep.subr.mxu0 %v929
    %948 = vmatpush1.msra.mxu0 %v928
    %949 = vmatprep.subr.mxu0 %v931
    %950 = vmatpush1.msra.mxu0 %v930
    %951 = vmatprep.subr.mxu0 %v933
    %952 = vmatpush1.msra.mxu0 %v932
    %953 = vmatprep.subr.mxu0 %v935
    %954 = vmatpush1.msra.mxu0 %v934
    %955 = vmatprep.subr.mxu0 %v937
    %956 = vmatpush1.msra.mxu0 %v936
    %957 = vmatprep.subr.mxu0 0.0
    %958 = vmatpush1.msra.mxu0 0.0
    %959 = vmatprep.subr.mxu0 0.0
    %960 = vmatpush1.msra.mxu0 0.0
    %961 = vmatprep.subr.mxu0 0.0
    %962 = vmatpush1.msra.mxu0 0.0
    %963 = vmatprep.subr.mxu0 0.0
    %964 = vmatpush1.msra.mxu0 0.0
    %965 = vmatprep.subr.mxu0 0.0
    %966 = vmatpush1.msra.mxu0 0.0
    %967 = vmatprep.subr.mxu0 0.0
    %968 = vmatpush1.msra.mxu0 0.0
    %969 = vmatprep.subr.mxu0 0.0
    %970 = vmatpush1.msra.mxu0 0.0
    %971 = vmatprep.subr.mxu0 0.0
    %972 = vmatpush1.msra.mxu0 0.0
    %973 = vmatprep.subr.mxu0 0.0
    %974 = vmatpush1.msra.mxu0 0.0
    %975 = vmatprep.subr.mxu0 0.0
    %976 = vmatpush1.msra.mxu0 0.0
    %977 = vmatprep.subr.mxu0 0.0
    %978 = vmatpush1.msra.mxu0 0.0
    %979 = vmatprep.subr.mxu0 0.0
    %980 = vmatpush1.msra.mxu0 0.0
    %981 = vmatprep.subr.mxu0 0.0
    %982 = vmatpush1.msra.mxu0 0.0
    %983 = vmatprep.subr.mxu0 0.0
    %984 = vmatpush1.msra.mxu0 0.0
    %985 = vmatprep.subr.mxu0 0.0
    %986 = vmatpush1.msra.mxu0 0.0
    %987 = vmatprep.subr.mxu0 0.0
    %988 = vmatpush1.msra.mxu0 0.0
    %989 = vmatprep.subr.mxu0 0.0
    %990 = vmatpush1.msra.mxu0 0.0
    %991 = vmatprep.subr.mxu0 0.0
    %992 = vmatpush1.msra.mxu0 0.0
    %993 = vmatprep.subr.mxu0 0.0
    %994 = vmatpush1.msra.mxu0 0.0
    %995 = vmatprep.subr.mxu0 0.0
    %996 = vmatpush1.msra.mxu0 0.0
    %997 = vmatprep.subr.mxu0 0.0
    %998 = vmatpush1.msra.mxu0 0.0
    %999 = vmatprep.subr.mxu0 0.0
    %1000 = vmatpush1.msra.mxu0 0.0
    %1001 = vmatprep.subr.mxu0 0.0
    %1002 = vmatpush1.msra.mxu0 0.0
    %1003 = vmatprep.subr.mxu0 0.0
    %1004 = vmatpush1.msra.mxu0 0.0
    %1005 = vmatprep.mubr.f32.mxu0 0.0
    %1006 = vmatmul.mubr.f32.gmra.mrb[0].mxu0 %v939
    %v1007 = vpop.f32.mrb[0].mxu0
    %v1008 = vadd.f32 0.0, %v1007
    %v1009 = vpop.f32.mrb[0].mxu0
    %v1010 = vadd.f32 0.0, %v1009
    %1011 = vdwg.mxu0
    %v1012 = vadd.f32 %v919, %v1008
    %v1013 = vadd.f32 %v920, %v1010
    %v1014 = vxor.u32 %v1012, 2147483648
    %v1015 = vmul.f32 %v1014, 1.442695
    %v1016 = vpow.pop %v1015
    %v1017 = vadd.f32 %v1016, 1.0
    %v1018 = vrcp.pop %v1017
    %v1019 = vmul.f32 1.0, %v1018
    %v1020 = vtanh.pop %v1012
    %v1021 = vmul.f32 %v1019, %v878
    %1023 = vrot.lane.b32.xlu0 %v1020, 64
    %v1024 = vpop.permute.xlu0 %1023
    %v1026 = vmul.f32 %v1019, %v1024
    %1028 = vrot.lane.b32.xlu0 %v1026, 32
    %v1029 = vpop.permute.xlu0 %1028
    %v1031 = vadd.f32 %v1021, %v1029
    %v1032 = vtanh.pop %v1031
    %1034 = vrot.lane.b32.xlu0 %v1032, 64
    %v1035 = vpop.permute.xlu0 %1034
    %v1037 = vmul.f32 %v1019, %v1035
    %v1038 = vxor.u32 %v1013, 2147483648
    %v1039 = vmul.f32 %v1038, 1.442695
    %v1040 = vpow.pop %v1039
    %v1041 = vadd.f32 %v1040, 1.0
    %v1042 = vrcp.pop %v1041
    %v1043 = vmul.f32 1.0, %v1042
    %v1044 = vtanh.pop %v1013
    %v1045 = vmul.f32 %v1043, %v902
    %1047 = vrot.lane.b32.xlu0 %v1044, 64
    %v1048 = vpop.permute.xlu0 %1047
    %v1050 = vmul.f32 %v1043, %v1048
    %1052 = vrot.lane.b32.xlu0 %v1050, 32
    %v1053 = vpop.permute.xlu0 %1052
    %v1055 = vadd.f32 %v1045, %v1053
    %v1056 = vtanh.pop %v1055
    %1058 = vrot.lane.b32.xlu0 %v1056, 64
    %v1059 = vpop.permute.xlu0 %1058
    %v1061 = vmul.f32 %v1043, %v1059
    %1063 = vrot.lane.b32.xlu0 %v1037, 32
    %v1064 = vpop.permute.xlu0 %1063
    %1066 = vst.msk [vmem:[#allocation3 + $0x28] sm:$0xff] %vm95, %v1064
    %1068 = vrot.lane.b32.xlu0 %v1061, 64
    %v1069 = vpop.permute.xlu0 %1068
    %1071 = vst.msk [vmem:[#allocation3 + $0x10] sm:$0xff] %vm296, %v1069
    %v1072 = vld [vmem:[#allocation2 + $0x60] sm:$0xff]
    %v1073 = vld [vmem:[#allocation2 + $0x18] sm:$0xff]
    %v1074 = vsel %vm95, %v1064, %v1069
    %v1075 = vld [vmem:[#allocation6] sm:$0xff]
    %v1076 = vld [vmem:[#allocation6 + $0x8] sm:$0xff]
    %v1077 = vld [vmem:[#allocation6 + $0x10] sm:$0xff]
    %v1078 = vld [vmem:[#allocation6 + $0x18] sm:$0xff]
    %v1079 = vld [vmem:[#allocation6 + $0x20] sm:$0xff]
    %v1080 = vld [vmem:[#allocation6 + $0x28] sm:$0xff]
    %v1081 = vld [vmem:[#allocation6 + $0x30] sm:$0xff]
    %v1082 = vld [vmem:[#allocation6 + $0x38] sm:$0xff]
    %v1083 = vld [vmem:[#allocation6 + $0x40] sm:$0xff]
    %v1084 = vld [vmem:[#allocation6 + $0x48] sm:$0xff]
    %v1085 = vld [vmem:[#allocation6 + $0x50] sm:$0xff]
    %v1086 = vld [vmem:[#allocation6 + $0x58] sm:$0xff]
    %v1087 = vld [vmem:[#allocation6 + $0x60] sm:$0xff]
    %v1088 = vld [vmem:[#allocation6 + $0x68] sm:$0xff]
    %v1089 = vld [vmem:[#allocation6 + $0x70] sm:$0xff]
    %v1090 = vld [vmem:[#allocation6 + $0x78] sm:$0xff]
    %v1092 = vsel %vm317, %v1074, 0
    %1094 = vmatprep.subr.mxu0 %v1076
    %1095 = vmatpush1.msra.mxu0 %v1075
    %1096 = vmatprep.subr.mxu0 %v1078
    %1097 = vmatpush1.msra.mxu0 %v1077
    %1098 = vmatprep.subr.mxu0 %v1080
    %1099 = vmatpush1.msra.mxu0 %v1079
    %1100 = vmatprep.subr.mxu0 %v1082
    %1101 = vmatpush1.msra.mxu0 %v1081
    %1102 = vmatprep.subr.mxu0 %v1084
    %1103 = vmatpush1.msra.mxu0 %v1083
    %1104 = vmatprep.subr.mxu0 %v1086
    %1105 = vmatpush1.msra.mxu0 %v1085
    %1106 = vmatprep.subr.mxu0 %v1088
    %1107 = vmatpush1.msra.mxu0 %v1087
    %1108 = vmatprep.subr.mxu0 %v1090
    %1109 = vmatpush1.msra.mxu0 %v1089
    %1110 = vmatprep.subr.mxu0 0.0
    %1111 = vmatpush1.msra.mxu0 0.0
    %1112 = vmatprep.subr.mxu0 0.0
    %1113 = vmatpush1.msra.mxu0 0.0
    %1114 = vmatprep.subr.mxu0 0.0
    %1115 = vmatpush1.msra.mxu0 0.0
    %1116 = vmatprep.subr.mxu0 0.0
    %1117 = vmatpush1.msra.mxu0 0.0
    %1118 = vmatprep.subr.mxu0 0.0
    %1119 = vmatpush1.msra.mxu0 0.0
    %1120 = vmatprep.subr.mxu0 0.0
    %1121 = vmatpush1.msra.mxu0 0.0
    %1122 = vmatprep.subr.mxu0 0.0
    %1123 = vmatpush1.msra.mxu0 0.0
    %1124 = vmatprep.subr.mxu0 0.0
    %1125 = vmatpush1.msra.mxu0 0.0
    %1126 = vmatprep.subr.mxu0 0.0
    %1127 = vmatpush1.msra.mxu0 0.0
    %1128 = vmatprep.subr.mxu0 0.0
    %1129 = vmatpush1.msra.mxu0 0.0
    %1130 = vmatprep.subr.mxu0 0.0
    %1131 = vmatpush1.msra.mxu0 0.0
    %1132 = vmatprep.subr.mxu0 0.0
    %1133 = vmatpush1.msra.mxu0 0.0
    %1134 = vmatprep.subr.mxu0 0.0
    %1135 = vmatpush1.msra.mxu0 0.0
    %1136 = vmatprep.subr.mxu0 0.0
    %1137 = vmatpush1.msra.mxu0 0.0
    %1138 = vmatprep.subr.mxu0 0.0
    %1139 = vmatpush1.msra.mxu0 0.0
    %1140 = vmatprep.subr.mxu0 0.0
    %1141 = vmatpush1.msra.mxu0 0.0
    %1142 = vmatprep.subr.mxu0 0.0
    %1143 = vmatpush1.msra.mxu0 0.0
    %1144 = vmatprep.subr.mxu0 0.0
    %1145 = vmatpush1.msra.mxu0 0.0
    %1146 = vmatprep.subr.mxu0 0.0
    %1147 = vmatpush1.msra.mxu0 0.0
    %1148 = vmatprep.subr.mxu0 0.0
    %1149 = vmatpush1.msra.mxu0 0.0
    %1150 = vmatprep.subr.mxu0 0.0
    %1151 = vmatpush1.msra.mxu0 0.0
    %1152 = vmatprep.subr.mxu0 0.0
    %1153 = vmatpush1.msra.mxu0 0.0
    %1154 = vmatprep.subr.mxu0 0.0
    %1155 = vmatpush1.msra.mxu0 0.0
    %1156 = vmatprep.subr.mxu0 0.0
    %1157 = vmatpush1.msra.mxu0 0.0
    %1158 = vmatprep.mubr.f32.mxu0 0.0
    %1159 = vmatmul.mubr.f32.gmra.mrb[0].mxu0 %v1092
    %v1160 = vpop.f32.mrb[0].mxu0
    %v1161 = vadd.f32 0.0, %v1160
    %v1162 = vpop.f32.mrb[0].mxu0
    %v1163 = vadd.f32 0.0, %v1162
    %1164 = vdwg.mxu0
    %v1165 = vadd.f32 %v1072, %v1161
    %v1166 = vadd.f32 %v1073, %v1163
    %v1167 = vxor.u32 %v1165, 2147483648
    %v1168 = vmul.f32 %v1167, 1.442695
    %v1169 = vpow.pop %v1168
    %v1170 = vadd.f32 %v1169, 1.0
    %v1171 = vrcp.pop %v1170
    %v1172 = vmul.f32 1.0, %v1171
    %v1173 = vtanh.pop %v1165
    %v1174 = vmul.f32 %v1172, %v1031
    %1176 = vrot.lane.b32.xlu0 %v1173, 64
    %v1177 = vpop.permute.xlu0 %1176
    %v1179 = vmul.f32 %v1172, %v1177
    %1181 = vrot.lane.b32.xlu0 %v1179, 32
    %v1182 = vpop.permute.xlu0 %1181
    %v1184 = vadd.f32 %v1174, %v1182
    %v1185 = vtanh.pop %v1184
    %1187 = vrot.lane.b32.xlu0 %v1185, 64
    %v1188 = vpop.permute.xlu0 %1187
    %v1190 = vmul.f32 %v1172, %v1188
    %v1191 = vxor.u32 %v1166, 2147483648
    %v1192 = vmul.f32 %v1191, 1.442695
    %v1193 = vpow.pop %v1192
    %v1194 = vadd.f32 %v1193, 1.0
    %v1195 = vrcp.pop %v1194
    %v1196 = vmul.f32 1.0, %v1195
    %v1197 = vtanh.pop %v1166
    %v1198 = vmul.f32 %v1196, %v1055
    %1200 = vrot.lane.b32.xlu0 %v1197, 64
    %v1201 = vpop.permute.xlu0 %1200
    %v1203 = vmul.f32 %v1196, %v1201
    %1205 = vrot.lane.b32.xlu0 %v1203, 32
    %v1206 = vpop.permute.xlu0 %1205
    %v1208 = vadd.f32 %v1198, %v1206
    %v1209 = vtanh.pop %v1208
    %1211 = vrot.lane.b32.xlu0 %v1209, 64
    %v1212 = vpop.permute.xlu0 %1211
    %v1214 = vmul.f32 %v1196, %v1212
    %1216 = vrot.lane.b32.xlu0 %v1190, 32
    %v1217 = vpop.permute.xlu0 %1216
    %1219 = vst.msk [vmem:[#allocation3 + $0x30] sm:$0xff] %vm95, %v1217
    %1221 = vrot.lane.b32.xlu0 %v1214, 64
    %v1222 = vpop.permute.xlu0 %1221
    %1224 = vst.msk [vmem:[#allocation3 + $0x8] sm:$0xff] %vm296, %v1222
    %v1225 = vld [vmem:[#allocation2 + $0x70] sm:$0xff]
    %v1226 = vld [vmem:[#allocation2 + $0x8] sm:$0xff]
    %v1227 = vsel %vm95, %v1217, %v1222
    %v1228 = vld [vmem:[#allocation6] sm:$0xff]
    %v1229 = vld [vmem:[#allocation6 + $0x8] sm:$0xff]
    %v1230 = vld [vmem:[#allocation6 + $0x10] sm:$0xff]
    %v1231 = vld [vmem:[#allocation6 + $0x18] sm:$0xff]
    %v1232 = vld [vmem:[#allocation6 + $0x20] sm:$0xff]
    %v1233 = vld [vmem:[#allocation6 + $0x28] sm:$0xff]
    %v1234 = vld [vmem:[#allocation6 + $0x30] sm:$0xff]
    %v1235 = vld [vmem:[#allocation6 + $0x38] sm:$0xff]
    %v1236 = vld [vmem:[#allocation6 + $0x40] sm:$0xff]
    %v1237 = vld [vmem:[#allocation6 + $0x48] sm:$0xff]
    %v1238 = vld [vmem:[#allocation6 + $0x50] sm:$0xff]
    %v1239 = vld [vmem:[#allocation6 + $0x58] sm:$0xff]
    %v1240 = vld [vmem:[#allocation6 + $0x60] sm:$0xff]
    %v1241 = vld [vmem:[#allocation6 + $0x68] sm:$0xff]
    %v1242 = vld [vmem:[#allocation6 + $0x70] sm:$0xff]
    %v1243 = vld [vmem:[#allocation6 + $0x78] sm:$0xff]
    %v1245 = vsel %vm317, %v1227, 0
    %1247 = vmatprep.subr.mxu0 %v1229
    %1248 = vmatpush1.msra.mxu0 %v1228
    %1249 = vmatprep.subr.mxu0 %v1231
    %1250 = vmatpush1.msra.mxu0 %v1230
    %1251 = vmatprep.subr.mxu0 %v1233
    %1252 = vmatpush1.msra.mxu0 %v1232
    %1253 = vmatprep.subr.mxu0 %v1235
    %1254 = vmatpush1.msra.mxu0 %v1234
    %1255 = vmatprep.subr.mxu0 %v1237
    %1256 = vmatpush1.msra.mxu0 %v1236
    %1257 = vmatprep.subr.mxu0 %v1239
    %1258 = vmatpush1.msra.mxu0 %v1238
    %1259 = vmatprep.subr.mxu0 %v1241
    %1260 = vmatpush1.msra.mxu0 %v1240
    %1261 = vmatprep.subr.mxu0 %v1243
    %1262 = vmatpush1.msra.mxu0 %v1242
    %1263 = vmatprep.subr.mxu0 0.0
    %1264 = vmatpush1.msra.mxu0 0.0
    %1265 = vmatprep.subr.mxu0 0.0
    %1266 = vmatpush1.msra.mxu0 0.0
    %1267 = vmatprep.subr.mxu0 0.0
    %1268 = vmatpush1.msra.mxu0 0.0
    %1269 = vmatprep.subr.mxu0 0.0
    %1270 = vmatpush1.msra.mxu0 0.0
    %1271 = vmatprep.subr.mxu0 0.0
    %1272 = vmatpush1.msra.mxu0 0.0
    %1273 = vmatprep.subr.mxu0 0.0
    %1274 = vmatpush1.msra.mxu0 0.0
    %1275 = vmatprep.subr.mxu0 0.0
    %1276 = vmatpush1.msra.mxu0 0.0
    %1277 = vmatprep.subr.mxu0 0.0
    %1278 = vmatpush1.msra.mxu0 0.0
    %1279 = vmatprep.subr.mxu0 0.0
    %1280 = vmatpush1.msra.mxu0 0.0
    %1281 = vmatprep.subr.mxu0 0.0
    %1282 = vmatpush1.msra.mxu0 0.0
    %1283 = vmatprep.subr.mxu0 0.0
    %1284 = vmatpush1.msra.mxu0 0.0
    %1285 = vmatprep.subr.mxu0 0.0
    %1286 = vmatpush1.msra.mxu0 0.0
    %1287 = vmatprep.subr.mxu0 0.0
    %1288 = vmatpush1.msra.mxu0 0.0
    %1289 = vmatprep.subr.mxu0 0.0
    %1290 = vmatpush1.msra.mxu0 0.0
    %1291 = vmatprep.subr.mxu0 0.0
    %1292 = vmatpush1.msra.mxu0 0.0
    %1293 = vmatprep.subr.mxu0 0.0
    %1294 = vmatpush1.msra.mxu0 0.0
    %1295 = vmatprep.subr.mxu0 0.0
    %1296 = vmatpush1.msra.mxu0 0.0
    %1297 = vmatprep.subr.mxu0 0.0
    %1298 = vmatpush1.msra.mxu0 0.0
    %1299 = vmatprep.subr.mxu0 0.0
    %1300 = vmatpush1.msra.mxu0 0.0
    %1301 = vmatprep.subr.mxu0 0.0
    %1302 = vmatpush1.msra.mxu0 0.0
    %1303 = vmatprep.subr.mxu0 0.0
    %1304 = vmatpush1.msra.mxu0 0.0
    %1305 = vmatprep.subr.mxu0 0.0
    %1306 = vmatpush1.msra.mxu0 0.0
    %1307 = vmatprep.subr.mxu0 0.0
    %1308 = vmatpush1.msra.mxu0 0.0
    %1309 = vmatprep.subr.mxu0 0.0
    %1310 = vmatpush1.msra.mxu0 0.0
    %1311 = vmatprep.mubr.f32.mxu0 0.0
    %1312 = vmatmul.mubr.f32.gmra.mrb[0].mxu0 %v1245
    %v1313 = vpop.f32.mrb[0].mxu0
    %v1314 = vadd.f32 0.0, %v1313
    %v1315 = vpop.f32.mrb[0].mxu0
    %v1316 = vadd.f32 0.0, %v1315
    %1317 = vdwg.mxu0
    %v1318 = vadd.f32 %v1225, %v1314
    %v1319 = vadd.f32 %v1226, %v1316
    %v1320 = vxor.u32 %v1318, 2147483648
    %v1321 = vmul.f32 %v1320, 1.442695
    %v1322 = vpow.pop %v1321
    %v1323 = vadd.f32 %v1322, 1.0
    %v1324 = vrcp.pop %v1323
    %v1325 = vmul.f32 1.0, %v1324
    %v1326 = vtanh.pop %v1318
    %v1327 = vmul.f32 %v1325, %v1184
    %1329 = vrot.lane.b32.xlu0 %v1326, 64
    %v1330 = vpop.permute.xlu0 %1329
    %v1332 = vmul.f32 %v1325, %v1330
    %1334 = vrot.lane.b32.xlu0 %v1332, 32
    %v1335 = vpop.permute.xlu0 %1334
    %v1337 = vadd.f32 %v1327, %v1335
    %v1338 = vtanh.pop %v1337
    %1340 = vrot.lane.b32.xlu0 %v1338, 64
    %v1341 = vpop.permute.xlu0 %1340
    %v1343 = vmul.f32 %v1325, %v1341
    %v1344 = vxor.u32 %v1319, 2147483648
    %v1345 = vmul.f32 %v1344, 1.442695
    %v1346 = vpow.pop %v1345
    %v1347 = vadd.f32 %v1346, 1.0
    %v1348 = vrcp.pop %v1347
    %v1349 = vmul.f32 1.0, %v1348
    %v1350 = vtanh.pop %v1319
    %v1351 = vmul.f32 %v1349, %v1208
    %1353 = vrot.lane.b32.xlu0 %v1350, 64
    %v1354 = vpop.permute.xlu0 %1353
    %v1356 = vmul.f32 %v1349, %v1354
    %1358 = vrot.lane.b32.xlu0 %v1356, 32
    %v1359 = vpop.permute.xlu0 %1358
    %v1361 = vadd.f32 %v1351, %v1359
    %v1362 = vtanh.pop %v1361
    %1364 = vrot.lane.b32.xlu0 %v1362, 64
    %v1365 = vpop.permute.xlu0 %1364
    %v1367 = vmul.f32 %v1349, %v1365
    %1369 = vrot.lane.b32.xlu0 %v1343, 32
    %v1370 = vpop.permute.xlu0 %1369
    %1372 = vst.msk [vmem:[#allocation3 + $0x38] sm:$0xff] %vm95, %v1370
    %1374 = vrot.lane.b32.xlu0 %v1367, 64
    %v1375 = vpop.permute.xlu0 %1374
    %1377 = vst.msk [vmem:[#allocation3] sm:$0xff] %vm296, %v1375
    %v1378 = vld [vmem:[#allocation3] sm:$0xff]
    %v1379 = vld [vmem:[#allocation3 + $0x8] sm:$0xff]
    %v1380 = vld [vmem:[#allocation3 + $0x10] sm:$0xff]
    %v1381 = vld [vmem:[#allocation3 + $0x18] sm:$0xff]
    %v1382 = vld [vmem:[#allocation3 + $0x20] sm:$0xff]
    %v1383 = vld [vmem:[#allocation3 + $0x28] sm:$0xff]
    %v1384 = vld [vmem:[#allocation3 + $0x30] sm:$0xff]
    %v1385 = vld [vmem:[#allocation3 + $0x38] sm:$0xff]
    %v1386 = vld [vmem:[%s4] sm:$0xff]
    %v1387 = vld [vmem:[%s4 + $0x8] sm:$0xff]
    %v1388 = vld [vmem:[%s4 + $0x10] sm:$0xff]
    %v1389 = vld [vmem:[%s4 + $0x18] sm:$0xff]
    %v1390 = vld [vmem:[%s4 + $0x20] sm:$0xff]
    %v1391 = vld [vmem:[%s4 + $0x28] sm:$0xff]
    %v1392 = vld [vmem:[%s4 + $0x30] sm:$0xff]
    %v1393 = vld [vmem:[%s4 + $0x38] sm:$0xff]
    %v1394 = vld [vmem:[%s4 + $0x40] sm:$0xff]
    %v1395 = vld [vmem:[%s4 + $0x48] sm:$0xff]
    %v1396 = vld [vmem:[%s4 + $0x50] sm:$0xff]
    %v1397 = vld [vmem:[%s4 + $0x58] sm:$0xff]
    %v1398 = vld [vmem:[%s4 + $0x60] sm:$0xff]
    %v1399 = vld [vmem:[%s4 + $0x68] sm:$0xff]
    %v1400 = vld [vmem:[%s4 + $0x70] sm:$0xff]
    %v1401 = vld [vmem:[%s4 + $0x78] sm:$0xff]
    %v1402 = vld [vmem:[%s6] sm:$0x3]
    %v1404 = vlaneseq
    %v1405 = vshrl.u32 %v1404, 7
    %v1406 = vsub.s32 0, %v1405
    %v1407 = vrot.slane %v1402, %v1406
    %v1408 = vlaneseq
    %v1409 = vshrl.u32 %v1408, 7
    %v1410 = vsub.s32 1, %v1409
    %v1411 = vrot.slane %v1402, %v1410
    %v1415 = vsel %vm317, %v1378, 0
    %v1418 = vsel %vm317, %v1379, 0
    %v1421 = vsel %vm317, %v1380, 0
    %v1424 = vsel %vm317, %v1381, 0
    %v1427 = vsel %vm317, %v1382, 0
    %v1430 = vsel %vm317, %v1383, 0
    %v1433 = vsel %vm317, %v1384, 0
    %v1436 = vsel %vm317, %v1385, 0
    %1438 = vmatprep.subr.mxu0 %v1387
    %1439 = vmatpush1.msra.mxu0 %v1386
    %1440 = vmatprep.subr.mxu0 %v1389
    %1441 = vmatpush1.msra.mxu0 %v1388
    %1442 = vmatprep.subr.mxu0 %v1391
    %1443 = vmatpush1.msra.mxu0 %v1390
    %1444 = vmatprep.subr.mxu0 %v1393
    %1445 = vmatpush1.msra.mxu0 %v1392
    %1446 = vmatprep.subr.mxu0 %v1395
    %1447 = vmatpush1.msra.mxu0 %v1394
    %1448 = vmatprep.subr.mxu0 %v1397
    %1449 = vmatpush1.msra.mxu0 %v1396
    %1450 = vmatprep.subr.mxu0 %v1399
    %1451 = vmatpush1.msra.mxu0 %v1398
    %1452 = vmatprep.subr.mxu0 %v1401
    %1453 = vmatpush1.msra.mxu0 %v1400
    %1454 = vmatprep.subr.mxu0 0.0
    %1455 = vmatpush1.msra.mxu0 0.0
    %1456 = vmatprep.subr.mxu0 0.0
    %1457 = vmatpush1.msra.mxu0 0.0
    %1458 = vmatprep.subr.mxu0 0.0
    %1459 = vmatpush1.msra.mxu0 0.0
    %1460 = vmatprep.subr.mxu0 0.0
    %1461 = vmatpush1.msra.mxu0 0.0
    %1462 = vmatprep.subr.mxu0 0.0
    %1463 = vmatpush1.msra.mxu0 0.0
    %1464 = vmatprep.subr.mxu0 0.0
    %1465 = vmatpush1.msra.mxu0 0.0
    %1466 = vmatprep.subr.mxu0 0.0
    %1467 = vmatpush1.msra.mxu0 0.0
    %1468 = vmatprep.subr.mxu0 0.0
    %1469 = vmatpush1.msra.mxu0 0.0
    %1470 = vmatprep.subr.mxu0 0.0
    %1471 = vmatpush1.msra.mxu0 0.0
    %1472 = vmatprep.subr.mxu0 0.0
    %1473 = vmatpush1.msra.mxu0 0.0
    %1474 = vmatprep.subr.mxu0 0.0
    %1475 = vmatpush1.msra.mxu0 0.0
    %1476 = vmatprep.subr.mxu0 0.0
    %1477 = vmatpush1.msra.mxu0 0.0
    %1478 = vmatprep.subr.mxu0 0.0
    %1479 = vmatpush1.msra.mxu0 0.0
    %1480 = vmatprep.subr.mxu0 0.0
    %1481 = vmatpush1.msra.mxu0 0.0
    %1482 = vmatprep.subr.mxu0 0.0
    %1483 = vmatpush1.msra.mxu0 0.0
    %1484 = vmatprep.subr.mxu0 0.0
    %1485 = vmatpush1.msra.mxu0 0.0
    %1486 = vmatprep.subr.mxu0 0.0
    %1487 = vmatpush1.msra.mxu0 0.0
    %1488 = vmatprep.subr.mxu0 0.0
    %1489 = vmatpush1.msra.mxu0 0.0
    %1490 = vmatprep.subr.mxu0 0.0
    %1491 = vmatpush1.msra.mxu0 0.0
    %1492 = vmatprep.subr.mxu0 0.0
    %1493 = vmatpush1.msra.mxu0 0.0
    %1494 = vmatprep.subr.mxu0 0.0
    %1495 = vmatpush1.msra.mxu0 0.0
    %1496 = vmatprep.subr.mxu0 0.0
    %1497 = vmatpush1.msra.mxu0 0.0
    %1498 = vmatprep.subr.mxu0 0.0
    %1499 = vmatpush1.msra.mxu0 0.0
    %1500 = vmatprep.subr.mxu0 0.0
    %1501 = vmatpush1.msra.mxu0 0.0
    %1502 = vmatprep.mubr.f32.mxu0 0.0
    %1503 = vmatmul.mubr.f32.gmra.mrb[0].mxu0 %v1415
    %v1504 = vpop.f32.mrb[0].mxu0
    %v1505 = vadd.f32 %v1407, %v1504
    %v1506 = vpop.f32.mrb[0].mxu0
    %v1507 = vadd.f32 %v1411, %v1506
    %1508 = vmatprep.mubr.f32.mxu0 0.0
    %1509 = vmatmul.mubr.f32.gmra.mrb[0].mxu0 %v1418
    %v1510 = vpop.f32.mrb[0].mxu0
    %v1511 = vadd.f32 %v1407, %v1510
    %v1512 = vpop.f32.mrb[0].mxu0
    %v1513 = vadd.f32 %v1411, %v1512
    %1514 = vmatprep.mubr.f32.mxu0 0.0
    %1515 = vmatmul.mubr.f32.gmra.mrb[0].mxu0 %v1421
    %v1516 = vpop.f32.mrb[0].mxu0
    %v1517 = vadd.f32 %v1407, %v1516
    %v1518 = vpop.f32.mrb[0].mxu0
    %v1519 = vadd.f32 %v1411, %v1518
    %1520 = vmatprep.mubr.f32.mxu0 0.0
    %1521 = vmatmul.mubr.f32.gmra.mrb[0].mxu0 %v1424
    %v1522 = vpop.f32.mrb[0].mxu0
    %v1523 = vadd.f32 %v1407, %v1522
    %v1524 = vpop.f32.mrb[0].mxu0
    %v1525 = vadd.f32 %v1411, %v1524
    %1526 = vmatprep.mubr.f32.mxu0 0.0
    %1527 = vmatmul.mubr.f32.gmra.mrb[0].mxu0 %v1427
    %v1528 = vpop.f32.mrb[0].mxu0
    %v1529 = vadd.f32 %v1407, %v1528
    %v1530 = vpop.f32.mrb[0].mxu0
    %v1531 = vadd.f32 %v1411, %v1530
    %1532 = vmatprep.mubr.f32.mxu0 0.0
    %1533 = vmatmul.mubr.f32.gmra.mrb[0].mxu0 %v1430
    %v1534 = vpop.f32.mrb[0].mxu0
    %v1535 = vadd.f32 %v1407, %v1534
    %v1536 = vpop.f32.mrb[0].mxu0
    %v1537 = vadd.f32 %v1411, %v1536
    %1538 = vmatprep.mubr.f32.mxu0 0.0
    %1539 = vmatmul.mubr.f32.gmra.mrb[0].mxu0 %v1433
    %v1540 = vpop.f32.mrb[0].mxu0
    %v1541 = vadd.f32 %v1407, %v1540
    %v1542 = vpop.f32.mrb[0].mxu0
    %v1543 = vadd.f32 %v1411, %v1542
    %1544 = vmatprep.mubr.f32.mxu0 0.0
    %1545 = vmatmul.mubr.f32.gmra.mrb[0].mxu0 %v1436
    %v1546 = vpop.f32.mrb[0].mxu0
    %v1547 = vadd.f32 %v1407, %v1546
    %v1548 = vpop.f32.mrb[0].mxu0
    %v1549 = vadd.f32 %v1411, %v1548
    %1550 = vdwg.mxu0
    %1551 = vst [vmem:[#allocation2] sm:$0xff] %v1505
    %1552 = vst [vmem:[#allocation2 + $0x8] sm:$0xff] %v1507
    %1553 = vst [vmem:[#allocation2 + $0x10] sm:$0xff] %v1511
    %1554 = vst [vmem:[#allocation2 + $0x18] sm:$0xff] %v1513
    %1555 = vst [vmem:[#allocation2 + $0x20] sm:$0xff] %v1517
    %1556 = vst [vmem:[#allocation2 + $0x28] sm:$0xff] %v1519
    %1557 = vst [vmem:[#allocation2 + $0x30] sm:$0xff] %v1523
    %1558 = vst [vmem:[#allocation2 + $0x38] sm:$0xff] %v1525
    %1559 = vst [vmem:[#allocation2 + $0x40] sm:$0xff] %v1529
    %1560 = vst [vmem:[#allocation2 + $0x48] sm:$0xff] %v1531
    %1561 = vst [vmem:[#allocation2 + $0x50] sm:$0xff] %v1535
    %1562 = vst [vmem:[#allocation2 + $0x58] sm:$0xff] %v1537
    %1563 = vst [vmem:[#allocation2 + $0x60] sm:$0xff] %v1541
    %1564 = vst [vmem:[#allocation2 + $0x68] sm:$0xff] %v1543
    %1565 = vst [vmem:[#allocation2 + $0x70] sm:$0xff] %v1547
    %1566 = vst [vmem:[#allocation2 + $0x78] sm:$0xff] %v1549
    %v1567 = vld [vmem:[#allocation8 + $0x48] sm:$0xff]
    %v1568 = vld [vmem:[#allocation8 + $0x58] sm:$0xff]
    %v1569 = vld [vmem:[#allocation8 + $0x68] sm:$0xff]
    %v1570 = vld [vmem:[#allocation8 + $0x78] sm:$0xff]
    %v1571 = vld [vmem:[#allocation2] sm:$0xff]
    %v1572 = vxor.u32 %v1571, 2147483648
    %v1573 = vmul.f32 %v1572, 1.442695
    %v1574 = vpow.pop %v1573
    %v1575 = vadd.f32 %v1574, 1.0
    %v1576 = vrcp.pop %v1575
    %v1577 = vmul.f32 1.0, %v1576
    %v1578 = vtanh.pop %v1571
    %1580 = vrot.lane.b32.xlu0 %v1578, 64
    %v1581 = vpop.permute.xlu0 %1580
    %v1583 = vmul.f32 %v1577, %v1581
    %v1584 = vtanh.pop %v1583
    %1586 = vrot.lane.b32.xlu0 %v1584, 96
    %v1587 = vpop.permute.xlu0 %1586
    %v1589 = vmul.f32 %v1577, %v1587
    %v1590 = vld [vmem:[#allocation2 + $0x78] sm:$0xff]
    %v1591 = vxor.u32 %v1590, 2147483648
    %v1592 = vmul.f32 %v1591, 1.442695
    %v1593 = vpow.pop %v1592
    %v1594 = vadd.f32 %v1593, 1.0
    %v1595 = vrcp.pop %v1594
    %v1596 = vmul.f32 1.0, %v1595
    %v1597 = vtanh.pop %v1590
    %1599 = vrot.lane.b32.xlu0 %v1597, 64
    %v1600 = vpop.permute.xlu0 %1599
    %v1602 = vmul.f32 %v1596, %v1600
    %v1603 = vtanh.pop %v1602
    %1605 = vrot.lane.b32.xlu0 %v1603, 96
    %v1606 = vpop.permute.xlu0 %1605
    %v1608 = vmul.f32 %v1596, %v1606
    %v1609 = vld [vmem:[#allocation2 + $0x68] sm:$0xff]
    %1611 = vrot.lane.b32.xlu0 %v1608, 32
    %v1612 = vpop.permute.xlu0 %1611
    %v1613 = vsel %vm95, %v1612, 0
    %1615 = vmatprep.subr.mxu0 0.0
    %1616 = vmatpush1.msra.mxu0 %v1567
    %1617 = vmatprep.subr.mxu0 0.0
    %1618 = vmatpush1.msra.mxu0 %v1568
    %1619 = vmatprep.subr.mxu0 0.0
    %1620 = vmatpush1.msra.mxu0 %v1569
    %1621 = vmatprep.subr.mxu0 0.0
    %1622 = vmatpush1.msra.mxu0 %v1570
    %1623 = vmatprep.subr.mxu0 0.0
    %1624 = vmatpush1.msra.mxu0 0.0
    %1625 = vmatprep.subr.mxu0 0.0
    %1626 = vmatpush1.msra.mxu0 0.0
    %1627 = vmatprep.subr.mxu0 0.0
    %1628 = vmatpush1.msra.mxu0 0.0
    %1629 = vmatprep.subr.mxu0 0.0
    %1630 = vmatpush1.msra.mxu0 0.0
    %1631 = vmatprep.subr.mxu0 0.0
    %1632 = vmatpush1.msra.mxu0 0.0
    %1633 = vmatprep.subr.mxu0 0.0
    %1634 = vmatpush1.msra.mxu0 0.0
    %1635 = vmatprep.subr.mxu0 0.0
    %1636 = vmatpush1.msra.mxu0 0.0
    %1637 = vmatprep.subr.mxu0 0.0
    %1638 = vmatpush1.msra.mxu0 0.0
    %1639 = vmatprep.subr.mxu0 0.0
    %1640 = vmatpush1.msra.mxu0 0.0
    %1641 = vmatprep.subr.mxu0 0.0
    %1642 = vmatpush1.msra.mxu0 0.0
    %1643 = vmatprep.subr.mxu0 0.0
    %1644 = vmatpush1.msra.mxu0 0.0
    %1645 = vmatprep.subr.mxu0 0.0
    %1646 = vmatpush1.msra.mxu0 0.0
    %1647 = vmatprep.subr.mxu0 0.0
    %1648 = vmatpush1.msra.mxu0 0.0
    %1649 = vmatprep.subr.mxu0 0.0
    %1650 = vmatpush1.msra.mxu0 0.0
    %1651 = vmatprep.subr.mxu0 0.0
    %1652 = vmatpush1.msra.mxu0 0.0
    %1653 = vmatprep.subr.mxu0 0.0
    %1654 = vmatpush1.msra.mxu0 0.0
    %1655 = vmatprep.subr.mxu0 0.0
    %1656 = vmatpush1.msra.mxu0 0.0
    %1657 = vmatprep.subr.mxu0 0.0
    %1658 = vmatpush1.msra.mxu0 0.0
    %1659 = vmatprep.subr.mxu0 0.0
    %1660 = vmatpush1.msra.mxu0 0.0
    %1661 = vmatprep.subr.mxu0 0.0
    %1662 = vmatpush1.msra.mxu0 0.0
    %1663 = vmatprep.subr.mxu0 0.0
    %1664 = vmatpush1.msra.mxu0 0.0
    %1665 = vmatprep.subr.mxu0 0.0
    %1666 = vmatpush1.msra.mxu0 0.0
    %1667 = vmatprep.subr.mxu0 0.0
    %1668 = vmatpush1.msra.mxu0 0.0
    %1669 = vmatprep.subr.mxu0 0.0
    %1670 = vmatpush1.msra.mxu0 0.0
    %1671 = vmatprep.subr.mxu0 0.0
    %1672 = vmatpush1.msra.mxu0 0.0
    %1673 = vmatprep.subr.mxu0 0.0
    %1674 = vmatpush1.msra.mxu0 0.0
    %1675 = vmatprep.subr.mxu0 0.0
    %1676 = vmatpush1.msra.mxu0 0.0
    %1677 = vmatprep.subr.mxu0 0.0
    %1678 = vmatpush1.msra.mxu0 0.0
    %1679 = vmatprep.mubr.f32.mxu0 0.0
    %1680 = vmatmul.mubr.f32.gmra.mrb[0].mxu0 %v1613
    %v1681 = vpop.f32.mrb[0].mxu0
    %v1682 = vadd.f32 0.0, %v1681
    %v1683 = vpop.f32.mrb[0].mxu0
    %1684 = vdwg.mxu0
    %v1685 = vadd.f32 %v1609, %v1682
    %v1686 = vxor.u32 %v1685, 2147483648
    %v1687 = vmul.f32 %v1686, 1.442695
    %v1688 = vpow.pop %v1687
    %v1689 = vadd.f32 %v1688, 1.0
    %v1690 = vrcp.pop %v1689
    %v1691 = vmul.f32 1.0, %v1690
    %v1692 = vtanh.pop %v1685
    %1694 = vrot.lane.b32.xlu0 %v1602, 32
    %v1695 = vpop.permute.xlu0 %1694
    %v1697 = vmul.f32 %v1691, %v1695
    %1699 = vrot.lane.b32.xlu0 %v1692, 64
    %v1700 = vpop.permute.xlu0 %1699
    %v1702 = vmul.f32 %v1691, %v1700
    %1704 = vrot.lane.b32.xlu0 %v1702, 32
    %v1705 = vpop.permute.xlu0 %1704
    %v1707 = vadd.f32 %v1697, %v1705
    %v1708 = vtanh.pop %v1707
    %1710 = vrot.lane.b32.xlu0 %v1708, 64
    %v1711 = vpop.permute.xlu0 %1710
    %v1713 = vmul.f32 %v1691, %v1711
    %v1714 = vld [vmem:[#allocation2 + $0x58] sm:$0xff]
    %1716 = vrot.lane.b32.xlu0 %v1713, 32
    %v1717 = vpop.permute.xlu0 %1716
    %v1718 = vsel %vm95, %v1717, 0
    %1720 = vmatprep.subr.mxu0 0.0
    %1721 = vmatpush1.msra.mxu0 %v1567
    %1722 = vmatprep.subr.mxu0 0.0
    %1723 = vmatpush1.msra.mxu0 %v1568
    %1724 = vmatprep.subr.mxu0 0.0
    %1725 = vmatpush1.msra.mxu0 %v1569
    %1726 = vmatprep.subr.mxu0 0.0
    %1727 = vmatpush1.msra.mxu0 %v1570
    %1728 = vmatprep.subr.mxu0 0.0
    %1729 = vmatpush1.msra.mxu0 0.0
    %1730 = vmatprep.subr.mxu0 0.0
    %1731 = vmatpush1.msra.mxu0 0.0
    %1732 = vmatprep.subr.mxu0 0.0
    %1733 = vmatpush1.msra.mxu0 0.0
    %1734 = vmatprep.subr.mxu0 0.0
    %1735 = vmatpush1.msra.mxu0 0.0
    %1736 = vmatprep.subr.mxu0 0.0
    %1737 = vmatpush1.msra.mxu0 0.0
    %1738 = vmatprep.subr.mxu0 0.0
    %1739 = vmatpush1.msra.mxu0 0.0
    %1740 = vmatprep.subr.mxu0 0.0
    %1741 = vmatpush1.msra.mxu0 0.0
    %1742 = vmatprep.subr.mxu0 0.0
    %1743 = vmatpush1.msra.mxu0 0.0
    %1744 = vmatprep.subr.mxu0 0.0
    %1745 = vmatpush1.msra.mxu0 0.0
    %1746 = vmatprep.subr.mxu0 0.0
    %1747 = vmatpush1.msra.mxu0 0.0
    %1748 = vmatprep.subr.mxu0 0.0
    %1749 = vmatpush1.msra.mxu0 0.0
    %1750 = vmatprep.subr.mxu0 0.0
    %1751 = vmatpush1.msra.mxu0 0.0
    %1752 = vmatprep.subr.mxu0 0.0
    %1753 = vmatpush1.msra.mxu0 0.0
    %1754 = vmatprep.subr.mxu0 0.0
    %1755 = vmatpush1.msra.mxu0 0.0
    %1756 = vmatprep.subr.mxu0 0.0
    %1757 = vmatpush1.msra.mxu0 0.0
    %1758 = vmatprep.subr.mxu0 0.0
    %1759 = vmatpush1.msra.mxu0 0.0
    %1760 = vmatprep.subr.mxu0 0.0
    %1761 = vmatpush1.msra.mxu0 0.0
    %1762 = vmatprep.subr.mxu0 0.0
    %1763 = vmatpush1.msra.mxu0 0.0
    %1764 = vmatprep.subr.mxu0 0.0
    %1765 = vmatpush1.msra.mxu0 0.0
    %1766 = vmatprep.subr.mxu0 0.0
    %1767 = vmatpush1.msra.mxu0 0.0
    %1768 = vmatprep.subr.mxu0 0.0
    %1769 = vmatpush1.msra.mxu0 0.0
    %1770 = vmatprep.subr.mxu0 0.0
    %1771 = vmatpush1.msra.mxu0 0.0
    %1772 = vmatprep.subr.mxu0 0.0
    %1773 = vmatpush1.msra.mxu0 0.0
    %1774 = vmatprep.subr.mxu0 0.0
    %1775 = vmatpush1.msra.mxu0 0.0
    %1776 = vmatprep.subr.mxu0 0.0
    %1777 = vmatpush1.msra.mxu0 0.0
    %1778 = vmatprep.subr.mxu0 0.0
    %1779 = vmatpush1.msra.mxu0 0.0
    %1780 = vmatprep.subr.mxu0 0.0
    %1781 = vmatpush1.msra.mxu0 0.0
    %1782 = vmatprep.subr.mxu0 0.0
    %1783 = vmatpush1.msra.mxu0 0.0
    %1784 = vmatprep.mubr.f32.mxu0 0.0
    %1785 = vmatmul.mubr.f32.gmra.mrb[0].mxu0 %v1718
    %v1786 = vpop.f32.mrb[0].mxu0
    %v1787 = vadd.f32 0.0, %v1786
    %v1788 = vpop.f32.mrb[0].mxu0
    %1789 = vdwg.mxu0
    %v1790 = vadd.f32 %v1714, %v1787
    %v1791 = vxor.u32 %v1790, 2147483648
    %v1792 = vmul.f32 %v1791, 1.442695
    %v1793 = vpow.pop %v1792
    %v1794 = vadd.f32 %v1793, 1.0
    %v1795 = vrcp.pop %v1794
    %v1796 = vmul.f32 1.0, %v1795
    %v1797 = vtanh.pop %v1790
    %v1798 = vmul.f32 %v1796, %v1707
    %1800 = vrot.lane.b32.xlu0 %v1797, 64
    %v1801 = vpop.permute.xlu0 %1800
    %v1803 = vmul.f32 %v1796, %v1801
    %1805 = vrot.lane.b32.xlu0 %v1803, 32
    %v1806 = vpop.permute.xlu0 %1805
    %v1808 = vadd.f32 %v1798, %v1806
    %v1809 = vtanh.pop %v1808
    %1811 = vrot.lane.b32.xlu0 %v1809, 64
    %v1812 = vpop.permute.xlu0 %1811
    %v1814 = vmul.f32 %v1796, %v1812
    %v1815 = vld [vmem:[#allocation2 + $0x48] sm:$0xff]
    %1817 = vrot.lane.b32.xlu0 %v1814, 32
    %v1818 = vpop.permute.xlu0 %1817
    %v1819 = vsel %vm95, %v1818, 0
    %1821 = vmatprep.subr.mxu0 0.0
    %1822 = vmatpush1.msra.mxu0 %v1567
    %1823 = vmatprep.subr.mxu0 0.0
    %1824 = vmatpush1.msra.mxu0 %v1568
    %1825 = vmatprep.subr.mxu0 0.0
    %1826 = vmatpush1.msra.mxu0 %v1569
    %1827 = vmatprep.subr.mxu0 0.0
    %1828 = vmatpush1.msra.mxu0 %v1570
    %1829 = vmatprep.subr.mxu0 0.0
    %1830 = vmatpush1.msra.mxu0 0.0
    %1831 = vmatprep.subr.mxu0 0.0
    %1832 = vmatpush1.msra.mxu0 0.0
    %1833 = vmatprep.subr.mxu0 0.0
    %1834 = vmatpush1.msra.mxu0 0.0
    %1835 = vmatprep.subr.mxu0 0.0
    %1836 = vmatpush1.msra.mxu0 0.0
    %1837 = vmatprep.subr.mxu0 0.0
    %1838 = vmatpush1.msra.mxu0 0.0
    %1839 = vmatprep.subr.mxu0 0.0
    %1840 = vmatpush1.msra.mxu0 0.0
    %1841 = vmatprep.subr.mxu0 0.0
    %1842 = vmatpush1.msra.mxu0 0.0
    %1843 = vmatprep.subr.mxu0 0.0
    %1844 = vmatpush1.msra.mxu0 0.0
    %1845 = vmatprep.subr.mxu0 0.0
    %1846 = vmatpush1.msra.mxu0 0.0
    %1847 = vmatprep.subr.mxu0 0.0
    %1848 = vmatpush1.msra.mxu0 0.0
    %1849 = vmatprep.subr.mxu0 0.0
    %1850 = vmatpush1.msra.mxu0 0.0
    %1851 = vmatprep.subr.mxu0 0.0
    %1852 = vmatpush1.msra.mxu0 0.0
    %1853 = vmatprep.subr.mxu0 0.0
    %1854 = vmatpush1.msra.mxu0 0.0
    %1855 = vmatprep.subr.mxu0 0.0
    %1856 = vmatpush1.msra.mxu0 0.0
    %1857 = vmatprep.subr.mxu0 0.0
    %1858 = vmatpush1.msra.mxu0 0.0
    %1859 = vmatprep.subr.mxu0 0.0
    %1860 = vmatpush1.msra.mxu0 0.0
    %1861 = vmatprep.subr.mxu0 0.0
    %1862 = vmatpush1.msra.mxu0 0.0
    %1863 = vmatprep.subr.mxu0 0.0
    %1864 = vmatpush1.msra.mxu0 0.0
    %1865 = vmatprep.subr.mxu0 0.0
    %1866 = vmatpush1.msra.mxu0 0.0
    %1867 = vmatprep.subr.mxu0 0.0
    %1868 = vmatpush1.msra.mxu0 0.0
    %1869 = vmatprep.subr.mxu0 0.0
    %1870 = vmatpush1.msra.mxu0 0.0
    %1871 = vmatprep.subr.mxu0 0.0
    %1872 = vmatpush1.msra.mxu0 0.0
    %1873 = vmatprep.subr.mxu0 0.0
    %1874 = vmatpush1.msra.mxu0 0.0
    %1875 = vmatprep.subr.mxu0 0.0
    %1876 = vmatpush1.msra.mxu0 0.0
    %1877 = vmatprep.subr.mxu0 0.0
    %1878 = vmatpush1.msra.mxu0 0.0
    %1879 = vmatprep.subr.mxu0 0.0
    %1880 = vmatpush1.msra.mxu0 0.0
    %1881 = vmatprep.subr.mxu0 0.0
    %1882 = vmatpush1.msra.mxu0 0.0
    %1883 = vmatprep.subr.mxu0 0.0
    %1884 = vmatpush1.msra.mxu0 0.0
    %1885 = vmatprep.mubr.f32.mxu0 0.0
    %1886 = vmatmul.mubr.f32.gmra.mrb[0].mxu0 %v1819
    %v1887 = vpop.f32.mrb[0].mxu0
    %v1888 = vadd.f32 0.0, %v1887
    %v1889 = vpop.f32.mrb[0].mxu0
    %1890 = vdwg.mxu0
    %v1891 = vadd.f32 %v1815, %v1888
    %v1892 = vxor.u32 %v1891, 2147483648
    %v1893 = vmul.f32 %v1892, 1.442695
    %v1894 = vpow.pop %v1893
    %v1895 = vadd.f32 %v1894, 1.0
    %v1896 = vrcp.pop %v1895
    %v1897 = vmul.f32 1.0, %v1896
    %v1898 = vtanh.pop %v1891
    %v1899 = vmul.f32 %v1897, %v1808
    %1901 = vrot.lane.b32.xlu0 %v1898, 64
    %v1902 = vpop.permute.xlu0 %1901
    %v1904 = vmul.f32 %v1897, %v1902
    %1906 = vrot.lane.b32.xlu0 %v1904, 32
    %v1907 = vpop.permute.xlu0 %1906
    %v1909 = vadd.f32 %v1899, %v1907
    %v1910 = vtanh.pop %v1909
    %1912 = vrot.lane.b32.xlu0 %v1910, 64
    %v1913 = vpop.permute.xlu0 %1912
    %v1915 = vmul.f32 %v1897, %v1913
    %v1916 = vld [vmem:[#allocation2 + $0x38] sm:$0xff]
    %1918 = vrot.lane.b32.xlu0 %v1915, 32
    %v1919 = vpop.permute.xlu0 %1918
    %v1920 = vsel %vm95, %v1919, 0
    %1922 = vmatprep.subr.mxu0 0.0
    %1923 = vmatpush1.msra.mxu0 %v1567
    %1924 = vmatprep.subr.mxu0 0.0
    %1925 = vmatpush1.msra.mxu0 %v1568
    %1926 = vmatprep.subr.mxu0 0.0
    %1927 = vmatpush1.msra.mxu0 %v1569
    %1928 = vmatprep.subr.mxu0 0.0
    %1929 = vmatpush1.msra.mxu0 %v1570
    %1930 = vmatprep.subr.mxu0 0.0
    %1931 = vmatpush1.msra.mxu0 0.0
    %1932 = vmatprep.subr.mxu0 0.0
    %1933 = vmatpush1.msra.mxu0 0.0
    %1934 = vmatprep.subr.mxu0 0.0
    %1935 = vmatpush1.msra.mxu0 0.0
    %1936 = vmatprep.subr.mxu0 0.0
    %1937 = vmatpush1.msra.mxu0 0.0
    %1938 = vmatprep.subr.mxu0 0.0
    %1939 = vmatpush1.msra.mxu0 0.0
    %1940 = vmatprep.subr.mxu0 0.0
    %1941 = vmatpush1.msra.mxu0 0.0
    %1942 = vmatprep.subr.mxu0 0.0
    %1943 = vmatpush1.msra.mxu0 0.0
    %1944 = vmatprep.subr.mxu0 0.0
    %1945 = vmatpush1.msra.mxu0 0.0
    %1946 = vmatprep.subr.mxu0 0.0
    %1947 = vmatpush1.msra.mxu0 0.0
    %1948 = vmatprep.subr.mxu0 0.0
    %1949 = vmatpush1.msra.mxu0 0.0
    %1950 = vmatprep.subr.mxu0 0.0
    %1951 = vmatpush1.msra.mxu0 0.0
    %1952 = vmatprep.subr.mxu0 0.0
    %1953 = vmatpush1.msra.mxu0 0.0
    %1954 = vmatprep.subr.mxu0 0.0
    %1955 = vmatpush1.msra.mxu0 0.0
    %1956 = vmatprep.subr.mxu0 0.0
    %1957 = vmatpush1.msra.mxu0 0.0
    %1958 = vmatprep.subr.mxu0 0.0
    %1959 = vmatpush1.msra.mxu0 0.0
    %1960 = vmatprep.subr.mxu0 0.0
    %1961 = vmatpush1.msra.mxu0 0.0
    %1962 = vmatprep.subr.mxu0 0.0
    %1963 = vmatpush1.msra.mxu0 0.0
    %1964 = vmatprep.subr.mxu0 0.0
    %1965 = vmatpush1.msra.mxu0 0.0
    %1966 = vmatprep.subr.mxu0 0.0
    %1967 = vmatpush1.msra.mxu0 0.0
    %1968 = vmatprep.subr.mxu0 0.0
    %1969 = vmatpush1.msra.mxu0 0.0
    %1970 = vmatprep.subr.mxu0 0.0
    %1971 = vmatpush1.msra.mxu0 0.0
    %1972 = vmatprep.subr.mxu0 0.0
    %1973 = vmatpush1.msra.mxu0 0.0
    %1974 = vmatprep.subr.mxu0 0.0
    %1975 = vmatpush1.msra.mxu0 0.0
    %1976 = vmatprep.subr.mxu0 0.0
    %1977 = vmatpush1.msra.mxu0 0.0
    %1978 = vmatprep.subr.mxu0 0.0
    %1979 = vmatpush1.msra.mxu0 0.0
    %1980 = vmatprep.subr.mxu0 0.0
    %1981 = vmatpush1.msra.mxu0 0.0
    %1982 = vmatprep.subr.mxu0 0.0
    %1983 = vmatpush1.msra.mxu0 0.0
    %1984 = vmatprep.subr.mxu0 0.0
    %1985 = vmatpush1.msra.mxu0 0.0
    %1986 = vmatprep.mubr.f32.mxu0 0.0
    %1987 = vmatmul.mubr.f32.gmra.mrb[0].mxu0 %v1920
    %v1988 = vpop.f32.mrb[0].mxu0
    %v1989 = vadd.f32 0.0, %v1988
    %v1990 = vpop.f32.mrb[0].mxu0
    %1991 = vdwg.mxu0
    %v1992 = vadd.f32 %v1916, %v1989
    %v1993 = vxor.u32 %v1992, 2147483648
    %v1994 = vmul.f32 %v1993, 1.442695
    %v1995 = vpow.pop %v1994
    %v1996 = vadd.f32 %v1995, 1.0
    %v1997 = vrcp.pop %v1996
    %v1998 = vmul.f32 1.0, %v1997
    %v1999 = vtanh.pop %v1992
    %v2000 = vmul.f32 %v1998, %v1909
    %2002 = vrot.lane.b32.xlu0 %v1999, 64
    %v2003 = vpop.permute.xlu0 %2002
    %v2005 = vmul.f32 %v1998, %v2003
    %2007 = vrot.lane.b32.xlu0 %v2005, 32
    %v2008 = vpop.permute.xlu0 %2007
    %v2010 = vadd.f32 %v2000, %v2008
    %v2011 = vtanh.pop %v2010
    %2013 = vrot.lane.b32.xlu0 %v2011, 64
    %v2014 = vpop.permute.xlu0 %2013
    %v2016 = vmul.f32 %v1998, %v2014
    %v2017 = vld [vmem:[#allocation2 + $0x28] sm:$0xff]
    %2019 = vrot.lane.b32.xlu0 %v2016, 32
    %v2020 = vpop.permute.xlu0 %2019
    %v2021 = vsel %vm95, %v2020, 0
    %2023 = vmatprep.subr.mxu0 0.0
    %2024 = vmatpush1.msra.mxu0 %v1567
    %2025 = vmatprep.subr.mxu0 0.0
    %2026 = vmatpush1.msra.mxu0 %v1568
    %2027 = vmatprep.subr.mxu0 0.0
    %2028 = vmatpush1.msra.mxu0 %v1569
    %2029 = vmatprep.subr.mxu0 0.0
    %2030 = vmatpush1.msra.mxu0 %v1570
    %2031 = vmatprep.subr.mxu0 0.0
    %2032 = vmatpush1.msra.mxu0 0.0
    %2033 = vmatprep.subr.mxu0 0.0
    %2034 = vmatpush1.msra.mxu0 0.0
    %2035 = vmatprep.subr.mxu0 0.0
    %2036 = vmatpush1.msra.mxu0 0.0
    %2037 = vmatprep.subr.mxu0 0.0
    %2038 = vmatpush1.msra.mxu0 0.0
    %2039 = vmatprep.subr.mxu0 0.0
    %2040 = vmatpush1.msra.mxu0 0.0
    %2041 = vmatprep.subr.mxu0 0.0
    %2042 = vmatpush1.msra.mxu0 0.0
    %2043 = vmatprep.subr.mxu0 0.0
    %2044 = vmatpush1.msra.mxu0 0.0
    %2045 = vmatprep.subr.mxu0 0.0
    %2046 = vmatpush1.msra.mxu0 0.0
    %2047 = vmatprep.subr.mxu0 0.0
    %2048 = vmatpush1.msra.mxu0 0.0
    %2049 = vmatprep.subr.mxu0 0.0
    %2050 = vmatpush1.msra.mxu0 0.0
    %2051 = vmatprep.subr.mxu0 0.0
    %2052 = vmatpush1.msra.mxu0 0.0
    %2053 = vmatprep.subr.mxu0 0.0
    %2054 = vmatpush1.msra.mxu0 0.0
    %2055 = vmatprep.subr.mxu0 0.0
    %2056 = vmatpush1.msra.mxu0 0.0
    %2057 = vmatprep.subr.mxu0 0.0
    %2058 = vmatpush1.msra.mxu0 0.0
    %2059 = vmatprep.subr.mxu0 0.0
    %2060 = vmatpush1.msra.mxu0 0.0
    %2061 = vmatprep.subr.mxu0 0.0
    %2062 = vmatpush1.msra.mxu0 0.0
    %2063 = vmatprep.subr.mxu0 0.0
    %2064 = vmatpush1.msra.mxu0 0.0
    %2065 = vmatprep.subr.mxu0 0.0
    %2066 = vmatpush1.msra.mxu0 0.0
    %2067 = vmatprep.subr.mxu0 0.0
    %2068 = vmatpush1.msra.mxu0 0.0
    %2069 = vmatprep.subr.mxu0 0.0
    %2070 = vmatpush1.msra.mxu0 0.0
    %2071 = vmatprep.subr.mxu0 0.0
    %2072 = vmatpush1.msra.mxu0 0.0
    %2073 = vmatprep.subr.mxu0 0.0
    %2074 = vmatpush1.msra.mxu0 0.0
    %2075 = vmatprep.subr.mxu0 0.0
    %2076 = vmatpush1.msra.mxu0 0.0
    %2077 = vmatprep.subr.mxu0 0.0
    %2078 = vmatpush1.msra.mxu0 0.0
    %2079 = vmatprep.subr.mxu0 0.0
    %2080 = vmatpush1.msra.mxu0 0.0
    %2081 = vmatprep.subr.mxu0 0.0
    %2082 = vmatpush1.msra.mxu0 0.0
    %2083 = vmatprep.subr.mxu0 0.0
    %2084 = vmatpush1.msra.mxu0 0.0
    %2085 = vmatprep.subr.mxu0 0.0
    %2086 = vmatpush1.msra.mxu0 0.0
    %2087 = vmatprep.mubr.f32.mxu0 0.0
    %2088 = vmatmul.mubr.f32.gmra.mrb[0].mxu0 %v2021
    %v2089 = vpop.f32.mrb[0].mxu0
    %v2090 = vadd.f32 0.0, %v2089
    %v2091 = vpop.f32.mrb[0].mxu0
    %2092 = vdwg.mxu0
    %v2093 = vadd.f32 %v2017, %v2090
    %v2094 = vxor.u32 %v2093, 2147483648
    %v2095 = vmul.f32 %v2094, 1.442695
    %v2096 = vpow.pop %v2095
    %v2097 = vadd.f32 %v2096, 1.0
    %v2098 = vrcp.pop %v2097
    %v2099 = vmul.f32 1.0, %v2098
    %v2100 = vtanh.pop %v2093
    %v2101 = vmul.f32 %v2099, %v2010
    %2103 = vrot.lane.b32.xlu0 %v2100, 64
    %v2104 = vpop.permute.xlu0 %2103
    %v2106 = vmul.f32 %v2099, %v2104
    %2108 = vrot.lane.b32.xlu0 %v2106, 32
    %v2109 = vpop.permute.xlu0 %2108
    %v2111 = vadd.f32 %v2101, %v2109
    %v2112 = vtanh.pop %v2111
    %2114 = vrot.lane.b32.xlu0 %v2112, 64
    %v2115 = vpop.permute.xlu0 %2114
    %v2117 = vmul.f32 %v2099, %v2115
    %v2118 = vld [vmem:[#allocation2 + $0x18] sm:$0xff]
    %2120 = vrot.lane.b32.xlu0 %v2117, 32
    %v2121 = vpop.permute.xlu0 %2120
    %v2122 = vsel %vm95, %v2121, 0
    %2124 = vmatprep.subr.mxu0 0.0
    %2125 = vmatpush1.msra.mxu0 %v1567
    %2126 = vmatprep.subr.mxu0 0.0
    %2127 = vmatpush1.msra.mxu0 %v1568
    %2128 = vmatprep.subr.mxu0 0.0
    %2129 = vmatpush1.msra.mxu0 %v1569
    %2130 = vmatprep.subr.mxu0 0.0
    %2131 = vmatpush1.msra.mxu0 %v1570
    %2132 = vmatprep.subr.mxu0 0.0
    %2133 = vmatpush1.msra.mxu0 0.0
    %2134 = vmatprep.subr.mxu0 0.0
    %2135 = vmatpush1.msra.mxu0 0.0
    %2136 = vmatprep.subr.mxu0 0.0
    %2137 = vmatpush1.msra.mxu0 0.0
    %2138 = vmatprep.subr.mxu0 0.0
    %2139 = vmatpush1.msra.mxu0 0.0
    %2140 = vmatprep.subr.mxu0 0.0
    %2141 = vmatpush1.msra.mxu0 0.0
    %2142 = vmatprep.subr.mxu0 0.0
    %2143 = vmatpush1.msra.mxu0 0.0
    %2144 = vmatprep.subr.mxu0 0.0
    %2145 = vmatpush1.msra.mxu0 0.0
    %2146 = vmatprep.subr.mxu0 0.0
    %2147 = vmatpush1.msra.mxu0 0.0
    %2148 = vmatprep.subr.mxu0 0.0
    %2149 = vmatpush1.msra.mxu0 0.0
    %2150 = vmatprep.subr.mxu0 0.0
    %2151 = vmatpush1.msra.mxu0 0.0
    %2152 = vmatprep.subr.mxu0 0.0
    %2153 = vmatpush1.msra.mxu0 0.0
    %2154 = vmatprep.subr.mxu0 0.0
    %2155 = vmatpush1.msra.mxu0 0.0
    %2156 = vmatprep.subr.mxu0 0.0
    %2157 = vmatpush1.msra.mxu0 0.0
    %2158 = vmatprep.subr.mxu0 0.0
    %2159 = vmatpush1.msra.mxu0 0.0
    %2160 = vmatprep.subr.mxu0 0.0
    %2161 = vmatpush1.msra.mxu0 0.0
    %2162 = vmatprep.subr.mxu0 0.0
    %2163 = vmatpush1.msra.mxu0 0.0
    %2164 = vmatprep.subr.mxu0 0.0
    %2165 = vmatpush1.msra.mxu0 0.0
    %2166 = vmatprep.subr.mxu0 0.0
    %2167 = vmatpush1.msra.mxu0 0.0
    %2168 = vmatprep.subr.mxu0 0.0
    %2169 = vmatpush1.msra.mxu0 0.0
    %2170 = vmatprep.subr.mxu0 0.0
    %2171 = vmatpush1.msra.mxu0 0.0
    %2172 = vmatprep.subr.mxu0 0.0
    %2173 = vmatpush1.msra.mxu0 0.0
    %2174 = vmatprep.subr.mxu0 0.0
    %2175 = vmatpush1.msra.mxu0 0.0
    %2176 = vmatprep.subr.mxu0 0.0
    %2177 = vmatpush1.msra.mxu0 0.0
    %2178 = vmatprep.subr.mxu0 0.0
    %2179 = vmatpush1.msra.mxu0 0.0
    %2180 = vmatprep.subr.mxu0 0.0
    %2181 = vmatpush1.msra.mxu0 0.0
    %2182 = vmatprep.subr.mxu0 0.0
    %2183 = vmatpush1.msra.mxu0 0.0
    %2184 = vmatprep.subr.mxu0 0.0
    %2185 = vmatpush1.msra.mxu0 0.0
    %2186 = vmatprep.subr.mxu0 0.0
    %2187 = vmatpush1.msra.mxu0 0.0
    %2188 = vmatprep.mubr.f32.mxu0 0.0
    %2189 = vmatmul.mubr.f32.gmra.mrb[0].mxu0 %v2122
    %v2190 = vpop.f32.mrb[0].mxu0
    %v2191 = vadd.f32 0.0, %v2190
    %v2192 = vpop.f32.mrb[0].mxu0
    %2193 = vdwg.mxu0
    %v2194 = vadd.f32 %v2118, %v2191
    %v2195 = vxor.u32 %v2194, 2147483648
    %v2196 = vmul.f32 %v2195, 1.442695
    %v2197 = vpow.pop %v2196
    %v2198 = vadd.f32 %v2197, 1.0
    %v2199 = vrcp.pop %v2198
    %v2200 = vmul.f32 1.0, %v2199
    %v2201 = vtanh.pop %v2194
    %v2202 = vmul.f32 %v2200, %v2111
    %2204 = vrot.lane.b32.xlu0 %v2201, 64
    %v2205 = vpop.permute.xlu0 %2204
    %v2207 = vmul.f32 %v2200, %v2205
    %2209 = vrot.lane.b32.xlu0 %v2207, 32
    %v2210 = vpop.permute.xlu0 %2209
    %v2212 = vadd.f32 %v2202, %v2210
    %v2213 = vtanh.pop %v2212
    %2215 = vrot.lane.b32.xlu0 %v2213, 64
    %v2216 = vpop.permute.xlu0 %2215
    %v2218 = vmul.f32 %v2200, %v2216
    %v2219 = vld [vmem:[#allocation2 + $0x8] sm:$0xff]
    %2221 = vrot.lane.b32.xlu0 %v2218, 32
    %v2222 = vpop.permute.xlu0 %2221
    %v2223 = vsel %vm95, %v2222, 0
    %2225 = vmatprep.subr.mxu0 0.0
    %2226 = vmatpush1.msra.mxu0 %v1567
    %2227 = vmatprep.subr.mxu0 0.0
    %2228 = vmatpush1.msra.mxu0 %v1568
    %2229 = vmatprep.subr.mxu0 0.0
    %2230 = vmatpush1.msra.mxu0 %v1569
    %2231 = vmatprep.subr.mxu0 0.0
    %2232 = vmatpush1.msra.mxu0 %v1570
    %2233 = vmatprep.subr.mxu0 0.0
    %2234 = vmatpush1.msra.mxu0 0.0
    %2235 = vmatprep.subr.mxu0 0.0
    %2236 = vmatpush1.msra.mxu0 0.0
    %2237 = vmatprep.subr.mxu0 0.0
    %2238 = vmatpush1.msra.mxu0 0.0
    %2239 = vmatprep.subr.mxu0 0.0
    %2240 = vmatpush1.msra.mxu0 0.0
    %2241 = vmatprep.subr.mxu0 0.0
    %2242 = vmatpush1.msra.mxu0 0.0
    %2243 = vmatprep.subr.mxu0 0.0
    %2244 = vmatpush1.msra.mxu0 0.0
    %2245 = vmatprep.subr.mxu0 0.0
    %2246 = vmatpush1.msra.mxu0 0.0
    %2247 = vmatprep.subr.mxu0 0.0
    %2248 = vmatpush1.msra.mxu0 0.0
    %2249 = vmatprep.subr.mxu0 0.0
    %2250 = vmatpush1.msra.mxu0 0.0
    %2251 = vmatprep.subr.mxu0 0.0
    %2252 = vmatpush1.msra.mxu0 0.0
    %2253 = vmatprep.subr.mxu0 0.0
    %2254 = vmatpush1.msra.mxu0 0.0
    %2255 = vmatprep.subr.mxu0 0.0
    %2256 = vmatpush1.msra.mxu0 0.0
    %2257 = vmatprep.subr.mxu0 0.0
    %2258 = vmatpush1.msra.mxu0 0.0
    %2259 = vmatprep.subr.mxu0 0.0
    %2260 = vmatpush1.msra.mxu0 0.0
    %2261 = vmatprep.subr.mxu0 0.0
    %2262 = vmatpush1.msra.mxu0 0.0
    %2263 = vmatprep.subr.mxu0 0.0
    %2264 = vmatpush1.msra.mxu0 0.0
    %2265 = vmatprep.subr.mxu0 0.0
    %2266 = vmatpush1.msra.mxu0 0.0
    %2267 = vmatprep.subr.mxu0 0.0
    %2268 = vmatpush1.msra.mxu0 0.0
    %2269 = vmatprep.subr.mxu0 0.0
    %2270 = vmatpush1.msra.mxu0 0.0
    %2271 = vmatprep.subr.mxu0 0.0
    %2272 = vmatpush1.msra.mxu0 0.0
    %2273 = vmatprep.subr.mxu0 0.0
    %2274 = vmatpush1.msra.mxu0 0.0
    %2275 = vmatprep.subr.mxu0 0.0
    %2276 = vmatpush1.msra.mxu0 0.0
    %2277 = vmatprep.subr.mxu0 0.0
    %2278 = vmatpush1.msra.mxu0 0.0
    %2279 = vmatprep.subr.mxu0 0.0
    %2280 = vmatpush1.msra.mxu0 0.0
    %2281 = vmatprep.subr.mxu0 0.0
    %2282 = vmatpush1.msra.mxu0 0.0
    %2283 = vmatprep.subr.mxu0 0.0
    %2284 = vmatpush1.msra.mxu0 0.0
    %2285 = vmatprep.subr.mxu0 0.0
    %2286 = vmatpush1.msra.mxu0 0.0
    %2287 = vmatprep.subr.mxu0 0.0
    %2288 = vmatpush1.msra.mxu0 0.0
    %2289 = vmatprep.mubr.f32.mxu0 0.0
    %2290 = vmatmul.mubr.f32.gmra.mrb[0].mxu0 %v2223
    %v2291 = vpop.f32.mrb[0].mxu0
    %v2292 = vadd.f32 0.0, %v2291
    %v2293 = vpop.f32.mrb[0].mxu0
    %2294 = vdwg.mxu0
    %v2295 = vadd.f32 %v2219, %v2292
    %v2296 = vxor.u32 %v2295, 2147483648
    %v2297 = vmul.f32 %v2296, 1.442695
    %v2298 = vpow.pop %v2297
    %v2299 = vadd.f32 %v2298, 1.0
    %v2300 = vrcp.pop %v2299
    %v2301 = vmul.f32 1.0, %v2300
    %v2302 = vtanh.pop %v2295
    %v2303 = vmul.f32 %v2301, %v2212
    %2305 = vrot.lane.b32.xlu0 %v2302, 64
    %v2306 = vpop.permute.xlu0 %2305
    %v2308 = vmul.f32 %v2301, %v2306
    %2310 = vrot.lane.b32.xlu0 %v2308, 32
    %v2311 = vpop.permute.xlu0 %2310
    %v2313 = vadd.f32 %v2303, %v2311
    %v2314 = vtanh.pop %v2313
    %2316 = vrot.lane.b32.xlu0 %v2314, 64
    %v2317 = vpop.permute.xlu0 %2316
    %v2319 = vmul.f32 %v2301, %v2317
    %v2320 = vmax.f32 %v1589, %v2319
    %2322 = vrot.lane.b32.xlu0 %v2320, 32
    %v2323 = vpop.permute.xlu0 %2322
    %2325 = vst.msk [vmem:[%s7] sm:$0xff] %vm95, %v2323
    // Predicated region
    $region42: #{graphsage_pallas.1} parent=1 // pred_check
      _
    $region43: #{graphsage_pallas.1} parent=1 // pred_check_branch
      %2327 = sbr.rel (0) target = $region45
    $region44: #{graphsage_pallas.1} parent=1 // pred_region
      _
    $region45: #{graphsage_pallas.1} parent=1 // pred_fallthru
      _
    // Predicated region
    $region46: #{graphsage_pallas.1} parent=1 // pred_check
      _
    $region47: #{graphsage_pallas.1} parent=1 // pred_check_branch
      %2329 = sbr.rel (0) target = $region49
    $region48: #{graphsage_pallas.1} parent=1 // pred_region
      _
    $region49: #{graphsage_pallas.1} parent=1 // pred_fallthru
      _
    %2330 = vsyncpa [#allocation5], 1
    %2331 = vsyncpa [#allocation7], 1

</llo_original>
